<compile_context>
chip_gen: v7x
topology: tpu7x:2x2x1
jax: 0.10.0
libtpu: 0.0.40
codegen_flags: <defaults>
</compile_context>

<pallas_src>
import functools

import jax
import jax.numpy as jnp
from jax.experimental import pallas as pl
from jax.experimental.pallas import tpu as pltpu

EPS = 1e-5          # nn.BatchNorm1d default eps
H = 128             # lane-padded hidden width (real widths are 64/32/16/32/64)
_N_PHASES = 5       # 4 BN-statistics phases + 1 output phase


def _ae_kernel(x_ref,                       # (TN, D) bf16 batch tile
               w1, g1, be1,                 # D->128 bf16, BN1 gamma/beta (1,128) f32
               w2, g2, be2,                 # 128->128, BN2
               w34, b34, g4, be4,           # fused bottleneck 128->128, BN4
               w5, g5, be5,                 # 128->128, BN5
               w6, b6,                      # 128->D output (bias kept, no BN)
               out_ref,                     # (TN, D) f32
               act_ref,                     # (n_tiles, TN, 128) f32 staged pre-BN acts
               st1, st2, st4, st5,          # (2,128) f32 per BN layer:
                                            #   rows (sum, sumsq) -> (scale, shift)
               *, n_true, has_padding):
    phase = pl.program_id(0)
    tile = pl.program_id(1)
    first = tile == 0
    tn = out_ref.shape[0]
    inv_n = 1.0 / float(n_true)

    # (1, TN) reduction weights: 1.0 for real batch rows, 0.0 for zero-padded
    # rows.  Folding the padded-row mask into the MXU reduction vector fixes
    # the BN-statistics leakage (previous failure) at (TN/128) vregs of cost
    # instead of a full (TN,128) where() per layer, and is skipped entirely
    # when the batch needs no padding.
    if has_padding:
        ridx = jax.lax.broadcasted_iota(jnp.int32, (1, tn), 1) + tile * tn
        ones_vec = (ridx < n_true).astype(jnp.float32)
    else:
        ones_vec = jnp.ones((1, tn), jnp.float32)

    def mxu(h, w_ref):
        # bf16 operands -> native MXU rate on v6e/v7x; f32 accumulation.
        return jnp.dot(h.astype(jnp.bfloat16), w_ref[...],
                       preferred_element_type=jnp.float32)

    def accum(st_ref, h):
        # Batch statistics accumulated across tiles, on the MXU (the VPU stays
        # free), masked against padded rows via ones_vec.  Single full-scratch
        # update instead of two sub-row read-modify-writes.
        @pl.when(first)
        def _():
            st_ref[...] = jnp.zeros_like(st_ref)
        s = jnp.dot(ones_vec, h, preferred_element_type=jnp.float32,
                    precision=jax.lax.Precision.HIGHEST)
        ss = jnp.dot(ones_vec, h * h, preferred_element_type=jnp.float32,
                     precision=jax.lax.Precision.HIGHEST)
        st_ref[...] += jnp.concatenate([s, ss], axis=0)

    def finalize(st_ref, g_ref, be_ref):
        # Convert (sum, sumsq) -> fused BN (scale, shift), in place.
        # TODO(synk): single-pass E[x^2]-E[x]^2 can lose precision if a layer's
        # pre-activations carry |mean| >> std; switch to shifted / Welford
        # accumulation if such inputs ever show up.
        mean = st_ref[0:1, :] * inv_n
        var = jnp.maximum(st_ref[1:2, :] * inv_n - mean * mean, 0.0)
        scale = g_ref[...] * jax.lax.rsqrt(var + EPS)
        shift = be_ref[...] - mean * scale
        st_ref[...] = jnp.concatenate([scale, shift], axis=0)

    def bn_relu(h, st_ref):
        # One fma + relu; padded lanes stay 0 because gamma/beta are 0 there.
        return jnp.maximum(h * st_ref[0:1, :] + st_ref[1:2, :], 0.0)

    # ---- phase 0: h1 = x @ w1, accumulate BN1 statistics -------------------
    @pl.when(phase == 0)
    def _():
        @pl.when(first)
        def _():
            # Defensive: the output window is parked on block 0 during phases
            # 0..3 -- make sure it can never flush uninitialized data.
            out_ref[...] = jnp.zeros_like(out_ref)
        h1 = jnp.dot(x_ref[...], w1[...], preferred_element_type=jnp.float32)
        accum(st1, h1)
        act_ref[tile] = h1

    # ---- phase 1: finalize BN1, h2 = relu(bn1(h1)) @ w2 --------------------
    @pl.when(phase == 1)
    def _():
        @pl.when(first)
        def _():
            finalize(st1, g1, be1)
        h2 = mxu(bn_relu(act_ref[tile], st1), w2)
        accum(st2, h2)
        act_ref[tile] = h2

    # ---- phase 2: finalize BN2, fused bottleneck, BN4 statistics -----------
    @pl.when(phase == 2)
    def _():
        @pl.when(first)
        def _():
            finalize(st2, g2, be2)
        # (a2 @ w3 + b3) @ w4 == a2 @ (w3 @ w4) + (b3 @ w4)  -- fused in wrapper.
        h4 = mxu(bn_relu(act_ref[tile], st2), w34) + b34[...]
        accum(st4, h4)
        act_ref[tile] = h4

    # ---- phase 3: finalize BN4, h5 = relu(bn4(h4)) @ w5 --------------------
    @pl.when(phase == 3)
    def _():
        @pl.when(first)
        def _():
            finalize(st4, g4, be4)
        h5 = mxu(bn_relu(act_ref[tile], st4), w5)
        accum(st5, h5)
        act_ref[tile] = h5

    # ---- phase 4: finalize BN5, emit the reconstruction ---------------------
    @pl.when(phase == 4)
    def _():
        @pl.when(first)
        def _():
            finalize(st5, g5, be5)
        dec = mxu(bn_relu(act_ref[tile], st5), w6) + b6[...]
        out_ref[...] = dec.astype(out_ref.dtype)


def _round_up(a, m):
    return ((a + m - 1) // m) * m


def autoencoder_forward(x, params, *, tile_rows=2048):
    """x: (N, input_dim) float32. params: list from init_params."""
    n, d = x.shape

    # VMEM budget: derive from the device (v7x has 64 MiB vs 128 MiB on v5e/v6e).
    try:
        vmem_cap = pltpu.get_tpu_info().vmem_capacity_bytes
    except Exception:
        vmem_cap = 128 * 1024 * 1024
    vmem_limit = min(96 * 1024 * 1024, vmem_cap // 2)

    # Keep the x/out double-buffered tiles within ~1/3 of the budget
    # (bf16 in + f32 out, 2 buffers each -> 12 bytes per row-element).
    max_tn = max(8, ((vmem_limit // 3) // (12 * max(d, 1))) // 8 * 8)
    tile_rows = max(8, min(tile_rows, max_tn))

    # Choose the tile to minimize batch padding (e.g. n=200, tile_rows=64 ->
    # 4 tiles of 56 rows, not 4 tiles of 64).
    n_tiles = -(-n // tile_rows)
    tn = _round_up(-(-n // n_tiles), 8)
    n_pad = tn * n_tiles
    has_padding = n_pad != n

    act_bytes = n_pad * H * 4
    if act_bytes > vmem_limit // 2:
        # TODO(synk): stage the inter-phase activation through HBM (bf16, true
        # width) for very large batches instead of keeping it VMEM-resident.
        raise NotImplementedError(
            "batch too large for VMEM-resident activation staging")

    # bf16 x halves the dominant HBM input stream; BN/ReLU math stays f32.
    xk = x.astype(jnp.bfloat16)
    if has_padding:
        xk = jnp.concatenate(
            [xk, jnp.zeros((n_pad - n, d), jnp.bfloat16)], axis=0)

    def x_map(p, t):       # x is only consumed in phase 0; park it afterwards
        return (jnp.where(p == 0, t, 0), 0)

    def out_map(p, t):     # output is only produced in the last phase
        return (jnp.where(p == _N_PHASES - 1, t, 0), 0)

    const_map = lambda p, t: (0, 0)

    def const_spec(shape):
        # Constant blocks never re-DMA; single-buffer them to save VMEM.
        try:
            return pl.BlockSpec(shape, const_map, pipeline_mode=pl.Buffered(1))
        except Exception:   # older jax without pipeline_mode / Buffered
            return pl.BlockSpec(shape, const_map)

    in_specs = [pl.BlockSpec((tn, d), x_map)] + [const_spec(p.shape) for p in params]

    out = pl.pallas_call(
        functools.partial(_ae_kernel, n_true=n, has_padding=has_padding),
        out_shape=jax.ShapeDtypeStruct((n_pad, d), jnp.float32),
        grid=(_N_PHASES, n_tiles),
        in_specs=in_specs,
        out_specs=pl.BlockSpec((tn, d), out_map),
        scratch_shapes=[pltpu.VMEM((n_tiles, tn, H), jnp.float32)]
                      + [pltpu.VMEM((2, H), jnp.float32)] * 4,
        compiler_params=pltpu.CompilerParams(
            # Both axes carry cross-step state (BN statistics, staged
            # activations), so neither may be sharded across TensorCores.
            dimension_semantics=("arbitrary", "arbitrary"),
            vmem_limit_bytes=vmem_limit,
        ),
    )(xk, *params)

    return out[:n]


# ----------------------------- parameters ----------------------------------

def _pad2(a, rows, cols):
    return jnp.zeros((rows, cols), a.dtype).at[:a.shape[0], :a.shape[1]].set(a)


def _bn_params(width):
    # Fresh nn.BatchNorm1d: gamma=1, beta=0.  Padded lanes get gamma=beta=0 so
    # padded activations stay exactly 0 through the network.
    gamma = jnp.zeros((1, H), jnp.float32).at[0, :width].set(1.0)
    beta = jnp.zeros((1, H), jnp.float32)
    return gamma, beta


def init_params(key, input_dim):
    """Kernel-ready parameters for a freshly-initialised Autoencoder.

    - Linear weights use the PyTorch default U(-1/sqrt(fan_in), +1/sqrt(fan_in)),
      stored pre-transposed (in, out), zero-padded to 128 lanes, bf16 for the MXU.
    - Biases of Linear layers feeding a BatchNorm are dropped (cancelled exactly
      by the mean subtraction).
    - The bottleneck pair L3/L4 (no BN/ReLU in between) is fused:
        w34 = w3 @ w4,  b34 = b3 @ w4   (mathematically exact).
    """
    ks = jax.random.split(key, 8)

    def lin_w(k, fi, fo):
        b = 1.0 / (fi ** 0.5)
        return jax.random.uniform(k, (fi, fo), jnp.float32, -b, b)

    def lin_b(k, fi, fo):
        b = 1.0 / (fi ** 0.5)
        return jax.random.uniform(k, (1, fo), jnp.float32, -b, b)

    w1 = lin_w(ks[0], input_dim, 64)
    w2 = lin_w(ks[1], 64, 32)
    w3 = lin_w(ks[2], 32, 16)
    b3 = lin_b(ks[3], 32, 16)
    w4 = lin_w(ks[4], 16, 32)
    w5 = lin_w(ks[5], 32, 64)
    w6 = lin_w(ks[6], 64, input_dim)
    b6 = lin_b(ks[7], 64, input_dim)

    w34 = w3 @ w4            # (32, 32) f32, fused bottleneck
    b34 = b3 @ w4            # (1, 32)  f32

    g1, be1 = _bn_params(64)
    g2, be2 = _bn_params(32)
    g4, be4 = _bn_params(32)
    g5, be5 = _bn_params(64)

    def pad_w(w, ri, ci):
        return _pad2(w, ri, ci).astype(jnp.bfloat16)

    return [
        pad_w(w1, input_dim, H), g1, be1,
        pad_w(w2, H, H), g2, be2,
        pad_w(w34, H, H), _pad2(b34, 1, H), g4, be4,
        pad_w(w5, H, H), g5, be5,
        pad_w(w6, H, input_dim), _pad2(b6, 1, input_dim),
    ]


# ----------------------------- reference ------------------------------------

def reference_forward(x, params):
    """Pure-JAX reference.  Mirrors the kernel numerics (bf16 MXU operands,
    fused bottleneck -- exact in exact arithmetic) while keeping the module
    semantics: training-mode BatchNorm with biased batch variance."""
    (w1, g1, be1, w2, g2, be2, w34, b34, g4, be4,
     w5, g5, be5, w6, b6) = params

    def dot(h, w):
        return jnp.dot(h.astype(jnp.bfloat16), w,
                       preferred_element_type=jnp.float32)

    def bn_relu(h, g, be):
        m = h.mean(0, keepdims=True)
        v = ((h - m) ** 2).mean(0, keepdims=True)
        return jnp.maximum((h - m) * jax.lax.rsqrt(v + EPS) * g + be, 0.0)

    h = bn_relu(dot(x, w1), g1, be1)
    h = bn_relu(dot(h, w2), g2, be2)
    h = bn_relu(dot(h, w34) + b34, g4, be4)      # fused bottleneck + BN4
    h = bn_relu(dot(h, w5), g5, be5)
    return dot(h, w6) + b6                        # decoded


if __name__ == "__main__":
    key = jax.random.PRNGKey(0)
    k_x, k_x2, k_p = jax.random.split(key, 3)

    input_dim = 32
    params = init_params(k_p, input_dim)

    # Single-tile smoke test.
    x = jax.random.normal(k_x, (8, input_dim), jnp.float32)
    out = jax.block_until_ready(autoencoder_forward(x, params))
    ref = reference_forward(x, params)
    assert out.shape == (8, input_dim)
    assert jnp.allclose(out, ref, atol=1e-2, rtol=1e-2), "mismatch (single tile)"

    # Multi-tile test: batch not divisible by the tile -> exercises the phased
    # cross-tile BatchNorm statistics and the padded-row masking (the case
    # that previously failed).
    x2 = jax.random.normal(k_x2, (200, input_dim), jnp.float32)
    out2 = jax.block_until_ready(autoencoder_forward(x2, params, tile_rows=64))
    ref2 = reference_forward(x2, params)
    assert out2.shape == (200, input_dim)
    assert jnp.allclose(out2, ref2, atol=1e-2, rtol=1e-2), "mismatch (multi tile)"

    print("KERNEL_OK")
</pallas_src>

<mosaic_0001>
module attributes {stable_mosaic.version = 11 : i64} {
  func.func @_ae_kernel(%arg0: i32, %arg1: i32, %arg2: memref<8x32xbf16, #tpu.memory_space<vmem>>, %arg3: memref<32x128xbf16, #tpu.memory_space<vmem>>, %arg4: memref<1x128xf32, #tpu.memory_space<vmem>>, %arg5: memref<1x128xf32, #tpu.memory_space<vmem>>, %arg6: memref<128x128xbf16, #tpu.memory_space<vmem>>, %arg7: memref<1x128xf32, #tpu.memory_space<vmem>>, %arg8: memref<1x128xf32, #tpu.memory_space<vmem>>, %arg9: memref<128x128xbf16, #tpu.memory_space<vmem>>, %arg10: memref<1x128xf32, #tpu.memory_space<vmem>>, %arg11: memref<1x128xf32, #tpu.memory_space<vmem>>, %arg12: memref<1x128xf32, #tpu.memory_space<vmem>>, %arg13: memref<128x128xbf16, #tpu.memory_space<vmem>>, %arg14: memref<1x128xf32, #tpu.memory_space<vmem>>, %arg15: memref<1x128xf32, #tpu.memory_space<vmem>>, %arg16: memref<128x32xbf16, #tpu.memory_space<vmem>>, %arg17: memref<1x32xf32, #tpu.memory_space<vmem>>, %arg18: memref<8x32xf32, #tpu.memory_space<vmem>>, %arg19: memref<1x8x128xf32, #tpu.memory_space<vmem>>, %arg20: memref<2x128xf32, #tpu.memory_space<vmem>>, %arg21: memref<2x128xf32, #tpu.memory_space<vmem>>, %arg22: memref<2x128xf32, #tpu.memory_space<vmem>>, %arg23: memref<2x128xf32, #tpu.memory_space<vmem>>) attributes {dimension_semantics = [#tpu.dimension_semantics<arbitrary>, #tpu.dimension_semantics<arbitrary>], iteration_bounds = array<i64: 5, 1>, scalar_prefetch = 0 : i64, scratch_operands = 5 : i64, tpu.core_type = #tpu.core_type<tc>, window_params = [{transform_indices = @transform_0, window_bounds = array<i64: 8, 32>}, {pipeline_mode = #tpu.pipeline_mode<synchronous>, transform_indices = @transform_1, window_bounds = array<i64: 32, 128>}, {pipeline_mode = #tpu.pipeline_mode<synchronous>, transform_indices = @transform_2, window_bounds = array<i64: 1, 128>}, {pipeline_mode = #tpu.pipeline_mode<synchronous>, transform_indices = @transform_3, window_bounds = array<i64: 1, 128>}, {pipeline_mode = #tpu.pipeline_mode<synchronous>, transform_indices = @transform_4, window_bounds = array<i64: 128, 128>}, {pipeline_mode = #tpu.pipeline_mode<synchronous>, transform_indices = @transform_5, window_bounds = array<i64: 1, 128>}, {pipeline_mode = #tpu.pipeline_mode<synchronous>, transform_indices = @transform_6, window_bounds = array<i64: 1, 128>}, {pipeline_mode = #tpu.pipeline_mode<synchronous>, transform_indices = @transform_7, window_bounds = array<i64: 128, 128>}, {pipeline_mode = #tpu.pipeline_mode<synchronous>, transform_indices = @transform_8, window_bounds = array<i64: 1, 128>}, {pipeline_mode = #tpu.pipeline_mode<synchronous>, transform_indices = @transform_9, window_bounds = array<i64: 1, 128>}, {pipeline_mode = #tpu.pipeline_mode<synchronous>, transform_indices = @transform_10, window_bounds = array<i64: 1, 128>}, {pipeline_mode = #tpu.pipeline_mode<synchronous>, transform_indices = @transform_11, window_bounds = array<i64: 128, 128>}, {pipeline_mode = #tpu.pipeline_mode<synchronous>, transform_indices = @transform_12, window_bounds = array<i64: 1, 128>}, {pipeline_mode = #tpu.pipeline_mode<synchronous>, transform_indices = @transform_13, window_bounds = array<i64: 1, 128>}, {pipeline_mode = #tpu.pipeline_mode<synchronous>, transform_indices = @transform_14, window_bounds = array<i64: 128, 32>}, {pipeline_mode = #tpu.pipeline_mode<synchronous>, transform_indices = @transform_15, window_bounds = array<i64: 1, 32>}, {transform_indices = @transform_16, window_bounds = array<i64: 8, 32>}]} {
    %c0_i32 = arith.constant 0 : i32
    %0 = arith.cmpi eq, %arg1, %c0_i32 : i32
    %cst = arith.constant 1.000000e+00 : f32
    %1 = vector.broadcast %cst : f32 to vector<1x8xf32>
    %c0_i32_0 = arith.constant 0 : i32
    %2 = arith.cmpi eq, %arg0, %c0_i32_0 : i32
    %3 = arith.extui %2 : i1 to i32
    %c0_i32_1 = arith.constant 0 : i32
    %4 = arith.cmpi ne, %3, %c0_i32_1 : i32
    scf.if %4 {
      %17 = arith.extui %0 : i1 to i32
      %c0_i32_6 = arith.constant 0 : i32
      %18 = arith.cmpi ne, %17, %c0_i32_6 : i32
      scf.if %18 {
        %cst_20 = arith.constant 0.000000e+00 : f32
        %35 = vector.broadcast %cst_20 : f32 to vector<8x32xf32>
        %c0_21 = arith.constant 0 : index
        %c0_22 = arith.constant 0 : index
        %36 = vector.load %arg18[%c0_21, %c0_22] : memref<8x32xf32, #tpu.memory_space<vmem>>, vector<8x32xf32>
        tpu.vector_store %arg18[%c0_21, %c0_22], %35 {strides = array<i32>} : memref<8x32xf32, #tpu.memory_space<vmem>>, vector<8x32xf32>,
      } else {
      }
      %c0 = arith.constant 0 : index
      %c0_7 = arith.constant 0 : index
      %19 = vector.load %arg2[%c0, %c0_7] : memref<8x32xbf16, #tpu.memory_space<vmem>>, vector<8x32xbf16>
      %c0_8 = arith.constant 0 : index
      %c0_9 = arith.constant 0 : index
      %20 = vector.load %arg3[%c0_8, %c0_9] : memref<32x128xbf16, #tpu.memory_space<vmem>>, vector<32x128xbf16>
      %cst_10 = arith.constant dense<0.000000e+00> : vector<8x128xf32>
      %21 = tpu.matmul %19, %20, %cst_10 {dimension_numbers = #tpu.dot_dimension_numbers<[1], [0], [0], [1], [0, 0, 1, 1], [], []>} : vector<8x32xbf16>, vector<32x128xbf16>, vector<8x128xf32> -> vector<8x128xf32>
      %22 = arith.extui %0 : i1 to i32
      %c0_i32_11 = arith.constant 0 : i32
      %23 = arith.cmpi ne, %22, %c0_i32_11 : i32
      scf.if %23 {
        %cst_20 = arith.constant 0.000000e+00 : f32
        %35 = vector.broadcast %cst_20 : f32 to vector<2x128xf32>
        %c0_21 = arith.constant 0 : index
        %c0_22 = arith.constant 0 : index
        %36 = vector.load %arg20[%c0_21, %c0_22] : memref<2x128xf32, #tpu.memory_space<vmem>>, vector<2x128xf32>
        tpu.vector_store %arg20[%c0_21, %c0_22], %35 {strides = array<i32>} : memref<2x128xf32, #tpu.memory_space<vmem>>, vector<2x128xf32>,
      } else {
      }
      %cst_12 = arith.constant dense<0.000000e+00> : vector<1x128xf32>
      %24 = tpu.matmul %1, %21, %cst_12 {dimension_numbers = #tpu.dot_dimension_numbers<[1], [0], [0], [1], [0, 0, 1, 1], [], []>, precision = #tpu.contract_precision<fp32>} : vector<1x8xf32>, vector<8x128xf32>, vector<1x128xf32> -> vector<1x128xf32>
      %25 = arith.mulf %21, %21 : vector<8x128xf32>
      %cst_13 = arith.constant dense<0.000000e+00> : vector<1x128xf32>
      %26 = tpu.matmul %1, %25, %cst_13 {dimension_numbers = #tpu.dot_dimension_numbers<[1], [0], [0], [1], [0, 0, 1, 1], [], []>, precision = #tpu.contract_precision<fp32>} : vector<1x8xf32>, vector<8x128xf32>, vector<1x128xf32> -> vector<1x128xf32>
      %c0_14 = arith.constant 0 : index
      %c0_15 = arith.constant 0 : index
      %27 = vector.load %arg20[%c0_14, %c0_15] : memref<2x128xf32, #tpu.memory_space<vmem>>, vector<2x128xf32>
      %28 = tpu.concatenate %24, %26 in 0 : vector<1x128xf32>, vector<1x128xf32> -> vector<2x128xf32>
      %29 = arith.addf %27, %28 : vector<2x128xf32>
      %c0_16 = arith.constant 0 : index
      %c0_17 = arith.constant 0 : index
      %30 = vector.load %arg20[%c0_16, %c0_17] : memref<2x128xf32, #tpu.memory_space<vmem>>, vector<2x128xf32>
      tpu.vector_store %arg20[%c0_16, %c0_17], %29 {strides = array<i32>} : memref<2x128xf32, #tpu.memory_space<vmem>>, vector<2x128xf32>,
      %31 = arith.index_cast %arg1 : i32 to index
      %c0_18 = arith.constant 0 : index
      %c0_19 = arith.constant 0 : index
      %32 = vector.load %arg19[%31, %c0_18, %c0_19] : memref<1x8x128xf32, #tpu.memory_space<vmem>>, vector<1x8x128xf32>
      %33 = vector.shape_cast %32 : vector<1x8x128xf32> to vector<8x128xf32>
      %34 = vector.shape_cast %21 : vector<8x128xf32> to vector<1x8x128xf32>
      tpu.vector_store %arg19[%31, %c0_18, %c0_19], %34 {strides = array<i32>} : memref<1x8x128xf32, #tpu.memory_space<vmem>>, vector<1x8x128xf32>,
    } else {
    }
    %c1_i32 = arith.constant 1 : i32
    %5 = arith.cmpi eq, %arg0, %c1_i32 : i32
    %6 = arith.extui %5 : i1 to i32
    %c0_i32_2 = arith.constant 0 : i32
    %7 = arith.cmpi ne, %6, %c0_i32_2 : i32
    scf.if %7 {
      %17 = arith.extui %0 : i1 to i32
      %c0_i32_6 = arith.constant 0 : i32
      %18 = arith.cmpi ne, %17, %c0_i32_6 : i32
      scf.if %18 {
        %c0_24 = arith.constant 0 : index
        %c0_25 = arith.constant 0 : index
        %46 = vector.load %arg20[%c0_24, %c0_25] : memref<2x128xf32, #tpu.memory_space<vmem>>, vector<1x128xf32>
        %cst_26 = arith.constant 1.250000e-01 : f32
        %47 = vector.broadcast %cst_26 : f32 to vector<1x128xf32>
        %48 = arith.mulf %46, %47 : vector<1x128xf32>
        %c1_27 = arith.constant 1 : index
        %c0_28 = arith.constant 0 : index
        %49 = vector.load %arg20[%c1_27, %c0_28] : memref<2x128xf32, #tpu.memory_space<vmem>>, vector<1x128xf32>
        %cst_29 = arith.constant 1.250000e-01 : f32
        %50 = vector.broadcast %cst_29 : f32 to vector<1x128xf32>
        %51 = arith.mulf %49, %50 : vector<1x128xf32>
        %52 = arith.mulf %48, %48 : vector<1x128xf32>
        %53 = arith.subf %51, %52 : vector<1x128xf32>
        %cst_30 = arith.constant 0.000000e+00 : f32
        %54 = vector.broadcast %cst_30 : f32 to vector<1x128xf32>
        %55 = arith.maximumf %53, %54 : vector<1x128xf32>
        %c0_31 = arith.constant 0 : index
        %c0_32 = arith.constant 0 : index
        %56 = vector.load %arg4[%c0_31, %c0_32] : memref<1x128xf32, #tpu.memory_space<vmem>>, vector<1x128xf32>
        %cst_33 = arith.constant 9.99999974E-6 : f32
        %57 = vector.broadcast %cst_33 : f32 to vector<1x128xf32>
        %58 = arith.addf %55, %57 : vector<1x128xf32>
        %59 = math.rsqrt %58 : vector<1x128xf32>
        %60 = arith.mulf %56, %59 : vector<1x128xf32>
        %c0_34 = arith.constant 0 : index
        %c0_35 = arith.constant 0 : index
        %61 = vector.load %arg5[%c0_34, %c0_35] : memref<1x128xf32, #tpu.memory_space<vmem>>, vector<1x128xf32>
        %62 = arith.mulf %48, %60 : vector<1x128xf32>
        %63 = arith.subf %61, %62 : vector<1x128xf32>
        %64 = tpu.concatenate %60, %63 in 0 : vector<1x128xf32>, vector<1x128xf32> -> vector<2x128xf32>
        %c0_36 = arith.constant 0 : index
        %c0_37 = arith.constant 0 : index
        %65 = vector.load %arg20[%c0_36, %c0_37] : memref<2x128xf32, #tpu.memory_space<vmem>>, vector<2x128xf32>
        tpu.vector_store %arg20[%c0_36, %c0_37], %64 {strides = array<i32>} : memref<2x128xf32, #tpu.memory_space<vmem>>, vector<2x128xf32>,
      } else {
      }
      %19 = arith.index_cast %arg1 : i32 to index
      %c0 = arith.constant 0 : index
      %c0_7 = arith.constant 0 : index
      %20 = vector.load %arg19[%19, %c0, %c0_7] : memref<1x8x128xf32, #tpu.memory_space<vmem>>, vector<1x8x128xf32>
      %21 = vector.shape_cast %20 : vector<1x8x128xf32> to vector<8x128xf32>
      %c0_8 = arith.constant 0 : index
      %c0_9 = arith.constant 0 : index
      %22 = vector.load %arg20[%c0_8, %c0_9] : memref<2x128xf32, #tpu.memory_space<vmem>>, vector<1x128xf32>
      %23 = vector.broadcast %22 : vector<1x128xf32> to vector<8x128xf32>
      %24 = arith.mulf %21, %23 : vector<8x128xf32>
      %c1 = arith.constant 1 : index
      %c0_10 = arith.constant 0 : index
      %25 = vector.load %arg20[%c1, %c0_10] : memref<2x128xf32, #tpu.memory_space<vmem>>, vector<1x128xf32>
      %26 = vector.broadcast %25 : vector<1x128xf32> to vector<8x128xf32>
      %27 = arith.addf %24, %26 : vector<8x128xf32>
      %cst_11 = arith.constant 0.000000e+00 : f32
      %28 = vector.broadcast %cst_11 : f32 to vector<8x128xf32>
      %29 = arith.maximumf %27, %28 : vector<8x128xf32>
      %30 = arith.truncf %29 : vector<8x128xf32> to vector<8x128xbf16>
      %c0_12 = arith.constant 0 : index
      %c0_13 = arith.constant 0 : index
      %31 = vector.load %arg6[%c0_12, %c0_13] : memref<128x128xbf16, #tpu.memory_space<vmem>>, vector<128x128xbf16>
      %cst_14 = arith.constant dense<0.000000e+00> : vector<8x128xf32>
      %32 = tpu.matmul %30, %31, %cst_14 {dimension_numbers = #tpu.dot_dimension_numbers<[1], [0], [0], [1], [0, 0, 1, 1], [], []>} : vector<8x128xbf16>, vector<128x128xbf16>, vector<8x128xf32> -> vector<8x128xf32>
      %33 = arith.extui %0 : i1 to i32
      %c0_i32_15 = arith.constant 0 : i32
      %34 = arith.cmpi ne, %33, %c0_i32_15 : i32
      scf.if %34 {
        %cst_24 = arith.constant 0.000000e+00 : f32
        %46 = vector.broadcast %cst_24 : f32 to vector<2x128xf32>
        %c0_25 = arith.constant 0 : index
        %c0_26 = arith.constant 0 : index
        %47 = vector.load %arg21[%c0_25, %c0_26] : memref<2x128xf32, #tpu.memory_space<vmem>>, vector<2x128xf32>
        tpu.vector_store %arg21[%c0_25, %c0_26], %46 {strides = array<i32>} : memref<2x128xf32, #tpu.memory_space<vmem>>, vector<2x128xf32>,
      } else {
      }
      %cst_16 = arith.constant dense<0.000000e+00> : vector<1x128xf32>
      %35 = tpu.matmul %1, %32, %cst_16 {dimension_numbers = #tpu.dot_dimension_numbers<[1], [0], [0], [1], [0, 0, 1, 1], [], []>, precision = #tpu.contract_precision<fp32>} : vector<1x8xf32>, vector<8x128xf32>, vector<1x128xf32> -> vector<1x128xf32>
      %36 = arith.mulf %32, %32 : vector<8x128xf32>
      %cst_17 = arith.constant dense<0.000000e+00> : vector<1x128xf32>
      %37 = tpu.matmul %1, %36, %cst_17 {dimension_numbers = #tpu.dot_dimension_numbers<[1], [0], [0], [1], [0, 0, 1, 1], [], []>, precision = #tpu.contract_precision<fp32>} : vector<1x8xf32>, vector<8x128xf32>, vector<1x128xf32> -> vector<1x128xf32>
      %c0_18 = arith.constant 0 : index
      %c0_19 = arith.constant 0 : index
      %38 = vector.load %arg21[%c0_18, %c0_19] : memref<2x128xf32, #tpu.memory_space<vmem>>, vector<2x128xf32>
      %39 = tpu.concatenate %35, %37 in 0 : vector<1x128xf32>, vector<1x128xf32> -> vector<2x128xf32>
      %40 = arith.addf %38, %39 : vector<2x128xf32>
      %c0_20 = arith.constant 0 : index
      %c0_21 = arith.constant 0 : index
      %41 = vector.load %arg21[%c0_20, %c0_21] : memref<2x128xf32, #tpu.memory_space<vmem>>, vector<2x128xf32>
      tpu.vector_store %arg21[%c0_20, %c0_21], %40 {strides = array<i32>} : memref<2x128xf32, #tpu.memory_space<vmem>>, vector<2x128xf32>,
      %42 = arith.index_cast %arg1 : i32 to index
      %c0_22 = arith.constant 0 : index
      %c0_23 = arith.constant 0 : index
      %43 = vector.load %arg19[%42, %c0_22, %c0_23] : memref<1x8x128xf32, #tpu.memory_space<vmem>>, vector<1x8x128xf32>
      %44 = vector.shape_cast %43 : vector<1x8x128xf32> to vector<8x128xf32>
      %45 = vector.shape_cast %32 : vector<8x128xf32> to vector<1x8x128xf32>
      tpu.vector_store %arg19[%42, %c0_22, %c0_23], %45 {strides = array<i32>} : memref<1x8x128xf32, #tpu.memory_space<vmem>>, vector<1x8x128xf32>,
    } else {
    }
    %c2_i32 = arith.constant 2 : i32
    %8 = arith.cmpi eq, %arg0, %c2_i32 : i32
    %9 = arith.extui %8 : i1 to i32
    %c0_i32_3 = arith.constant 0 : i32
    %10 = arith.cmpi ne, %9, %c0_i32_3 : i32
    scf.if %10 {
      %17 = arith.extui %0 : i1 to i32
      %c0_i32_6 = arith.constant 0 : i32
      %18 = arith.cmpi ne, %17, %c0_i32_6 : i32
      scf.if %18 {
        %c0_26 = arith.constant 0 : index
        %c0_27 = arith.constant 0 : index
        %49 = vector.load %arg21[%c0_26, %c0_27] : memref<2x128xf32, #tpu.memory_space<vmem>>, vector<1x128xf32>
        %cst_28 = arith.constant 1.250000e-01 : f32
        %50 = vector.broadcast %cst_28 : f32 to vector<1x128xf32>
        %51 = arith.mulf %49, %50 : vector<1x128xf32>
        %c1_29 = arith.constant 1 : index
        %c0_30 = arith.constant 0 : index
        %52 = vector.load %arg21[%c1_29, %c0_30] : memref<2x128xf32, #tpu.memory_space<vmem>>, vector<1x128xf32>
        %cst_31 = arith.constant 1.250000e-01 : f32
        %53 = vector.broadcast %cst_31 : f32 to vector<1x128xf32>
        %54 = arith.mulf %52, %53 : vector<1x128xf32>
        %55 = arith.mulf %51, %51 : vector<1x128xf32>
        %56 = arith.subf %54, %55 : vector<1x128xf32>
        %cst_32 = arith.constant 0.000000e+00 : f32
        %57 = vector.broadcast %cst_32 : f32 to vector<1x128xf32>
        %58 = arith.maximumf %56, %57 : vector<1x128xf32>
        %c0_33 = arith.constant 0 : index
        %c0_34 = arith.constant 0 : index
        %59 = vector.load %arg7[%c0_33, %c0_34] : memref<1x128xf32, #tpu.memory_space<vmem>>, vector<1x128xf32>
        %cst_35 = arith.constant 9.99999974E-6 : f32
        %60 = vector.broadcast %cst_35 : f32 to vector<1x128xf32>
        %61 = arith.addf %58, %60 : vector<1x128xf32>
        %62 = math.rsqrt %61 : vector<1x128xf32>
        %63 = arith.mulf %59, %62 : vector<1x128xf32>
        %c0_36 = arith.constant 0 : index
        %c0_37 = arith.constant 0 : index
        %64 = vector.load %arg8[%c0_36, %c0_37] : memref<1x128xf32, #tpu.memory_space<vmem>>, vector<1x128xf32>
        %65 = arith.mulf %51, %63 : vector<1x128xf32>
        %66 = arith.subf %64, %65 : vector<1x128xf32>
        %67 = tpu.concatenate %63, %66 in 0 : vector<1x128xf32>, vector<1x128xf32> -> vector<2x128xf32>
        %c0_38 = arith.constant 0 : index
        %c0_39 = arith.constant 0 : index
        %68 = vector.load %arg21[%c0_38, %c0_39] : memref<2x128xf32, #tpu.memory_space<vmem>>, vector<2x128xf32>
        tpu.vector_store %arg21[%c0_38, %c0_39], %67 {strides = array<i32>} : memref<2x128xf32, #tpu.memory_space<vmem>>, vector<2x128xf32>,
      } else {
      }
      %19 = arith.index_cast %arg1 : i32 to index
      %c0 = arith.constant 0 : index
      %c0_7 = arith.constant 0 : index
      %20 = vector.load %arg19[%19, %c0, %c0_7] : memref<1x8x128xf32, #tpu.memory_space<vmem>>, vector<1x8x128xf32>
      %21 = vector.shape_cast %20 : vector<1x8x128xf32> to vector<8x128xf32>
      %c0_8 = arith.constant 0 : index
      %c0_9 = arith.constant 0 : index
      %22 = vector.load %arg21[%c0_8, %c0_9] : memref<2x128xf32, #tpu.memory_space<vmem>>, vector<1x128xf32>
      %23 = vector.broadcast %22 : vector<1x128xf32> to vector<8x128xf32>
      %24 = arith.mulf %21, %23 : vector<8x128xf32>
      %c1 = arith.constant 1 : index
      %c0_10 = arith.constant 0 : index
      %25 = vector.load %arg21[%c1, %c0_10] : memref<2x128xf32, #tpu.memory_space<vmem>>, vector<1x128xf32>
      %26 = vector.broadcast %25 : vector<1x128xf32> to vector<8x128xf32>
      %27 = arith.addf %24, %26 : vector<8x128xf32>
      %cst_11 = arith.constant 0.000000e+00 : f32
      %28 = vector.broadcast %cst_11 : f32 to vector<8x128xf32>
      %29 = arith.maximumf %27, %28 : vector<8x128xf32>
      %30 = arith.truncf %29 : vector<8x128xf32> to vector<8x128xbf16>
      %c0_12 = arith.constant 0 : index
      %c0_13 = arith.constant 0 : index
      %31 = vector.load %arg9[%c0_12, %c0_13] : memref<128x128xbf16, #tpu.memory_space<vmem>>, vector<128x128xbf16>
      %cst_14 = arith.constant dense<0.000000e+00> : vector<8x128xf32>
      %32 = tpu.matmul %30, %31, %cst_14 {dimension_numbers = #tpu.dot_dimension_numbers<[1], [0], [0], [1], [0, 0, 1, 1], [], []>} : vector<8x128xbf16>, vector<128x128xbf16>, vector<8x128xf32> -> vector<8x128xf32>
      %c0_15 = arith.constant 0 : index
      %c0_16 = arith.constant 0 : index
      %33 = vector.load %arg10[%c0_15, %c0_16] : memref<1x128xf32, #tpu.memory_space<vmem>>, vector<1x128xf32>
      %34 = vector.broadcast %33 : vector<1x128xf32> to vector<8x128xf32>
      %35 = arith.addf %32, %34 : vector<8x128xf32>
      %36 = arith.extui %0 : i1 to i32
      %c0_i32_17 = arith.constant 0 : i32
      %37 = arith.cmpi ne, %36, %c0_i32_17 : i32
      scf.if %37 {
        %cst_26 = arith.constant 0.000000e+00 : f32
        %49 = vector.broadcast %cst_26 : f32 to vector<2x128xf32>
        %c0_27 = arith.constant 0 : index
        %c0_28 = arith.constant 0 : index
        %50 = vector.load %arg22[%c0_27, %c0_28] : memref<2x128xf32, #tpu.memory_space<vmem>>, vector<2x128xf32>
        tpu.vector_store %arg22[%c0_27, %c0_28], %49 {strides = array<i32>} : memref<2x128xf32, #tpu.memory_space<vmem>>, vector<2x128xf32>,
      } else {
      }
      %cst_18 = arith.constant dense<0.000000e+00> : vector<1x128xf32>
      %38 = tpu.matmul %1, %35, %cst_18 {dimension_numbers = #tpu.dot_dimension_numbers<[1], [0], [0], [1], [0, 0, 1, 1], [], []>, precision = #tpu.contract_precision<fp32>} : vector<1x8xf32>, vector<8x128xf32>, vector<1x128xf32> -> vector<1x128xf32>
      %39 = arith.mulf %35, %35 : vector<8x128xf32>
      %cst_19 = arith.constant dense<0.000000e+00> : vector<1x128xf32>
      %40 = tpu.matmul %1, %39, %cst_19 {dimension_numbers = #tpu.dot_dimension_numbers<[1], [0], [0], [1], [0, 0, 1, 1], [], []>, precision = #tpu.contract_precision<fp32>} : vector<1x8xf32>, vector<8x128xf32>, vector<1x128xf32> -> vector<1x128xf32>
      %c0_20 = arith.constant 0 : index
      %c0_21 = arith.constant 0 : index
      %41 = vector.load %arg22[%c0_20, %c0_21] : memref<2x128xf32, #tpu.memory_space<vmem>>, vector<2x128xf32>
      %42 = tpu.concatenate %38, %40 in 0 : vector<1x128xf32>, vector<1x128xf32> -> vector<2x128xf32>
      %43 = arith.addf %41, %42 : vector<2x128xf32>
      %c0_22 = arith.constant 0 : index
      %c0_23 = arith.constant 0 : index
      %44 = vector.load %arg22[%c0_22, %c0_23] : memref<2x128xf32, #tpu.memory_space<vmem>>, vector<2x128xf32>
      tpu.vector_store %arg22[%c0_22, %c0_23], %43 {strides = array<i32>} : memref<2x128xf32, #tpu.memory_space<vmem>>, vector<2x128xf32>,
      %45 = arith.index_cast %arg1 : i32 to index
      %c0_24 = arith.constant 0 : index
      %c0_25 = arith.constant 0 : index
      %46 = vector.load %arg19[%45, %c0_24, %c0_25] : memref<1x8x128xf32, #tpu.memory_space<vmem>>, vector<1x8x128xf32>
      %47 = vector.shape_cast %46 : vector<1x8x128xf32> to vector<8x128xf32>
      %48 = vector.shape_cast %35 : vector<8x128xf32> to vector<1x8x128xf32>
      tpu.vector_store %arg19[%45, %c0_24, %c0_25], %48 {strides = array<i32>} : memref<1x8x128xf32, #tpu.memory_space<vmem>>, vector<1x8x128xf32>,
    } else {
    }
    %c3_i32 = arith.constant 3 : i32
    %11 = arith.cmpi eq, %arg0, %c3_i32 : i32
    %12 = arith.extui %11 : i1 to i32
    %c0_i32_4 = arith.constant 0 : i32
    %13 = arith.cmpi ne, %12, %c0_i32_4 : i32
    scf.if %13 {
      %17 = arith.extui %0 : i1 to i32
      %c0_i32_6 = arith.constant 0 : i32
      %18 = arith.cmpi ne, %17, %c0_i32_6 : i32
      scf.if %18 {
        %c0_24 = arith.constant 0 : index
        %c0_25 = arith.constant 0 : index
        %46 = vector.load %arg22[%c0_24, %c0_25] : memref<2x128xf32, #tpu.memory_space<vmem>>, vector<1x128xf32>
        %cst_26 = arith.constant 1.250000e-01 : f32
        %47 = vector.broadcast %cst_26 : f32 to vector<1x128xf32>
        %48 = arith.mulf %46, %47 : vector<1x128xf32>
        %c1_27 = arith.constant 1 : index
        %c0_28 = arith.constant 0 : index
        %49 = vector.load %arg22[%c1_27, %c0_28] : memref<2x128xf32, #tpu.memory_space<vmem>>, vector<1x128xf32>
        %cst_29 = arith.constant 1.250000e-01 : f32
        %50 = vector.broadcast %cst_29 : f32 to vector<1x128xf32>
        %51 = arith.mulf %49, %50 : vector<1x128xf32>
        %52 = arith.mulf %48, %48 : vector<1x128xf32>
        %53 = arith.subf %51, %52 : vector<1x128xf32>
        %cst_30 = arith.constant 0.000000e+00 : f32
        %54 = vector.broadcast %cst_30 : f32 to vector<1x128xf32>
        %55 = arith.maximumf %53, %54 : vector<1x128xf32>
        %c0_31 = arith.constant 0 : index
        %c0_32 = arith.constant 0 : index
        %56 = vector.load %arg11[%c0_31, %c0_32] : memref<1x128xf32, #tpu.memory_space<vmem>>, vector<1x128xf32>
        %cst_33 = arith.constant 9.99999974E-6 : f32
        %57 = vector.broadcast %cst_33 : f32 to vector<1x128xf32>
        %58 = arith.addf %55, %57 : vector<1x128xf32>
        %59 = math.rsqrt %58 : vector<1x128xf32>
        %60 = arith.mulf %56, %59 : vector<1x128xf32>
        %c0_34 = arith.constant 0 : index
        %c0_35 = arith.constant 0 : index
        %61 = vector.load %arg12[%c0_34, %c0_35] : memref<1x128xf32, #tpu.memory_space<vmem>>, vector<1x128xf32>
        %62 = arith.mulf %48, %60 : vector<1x128xf32>
        %63 = arith.subf %61, %62 : vector<1x128xf32>
        %64 = tpu.concatenate %60, %63 in 0 : vector<1x128xf32>, vector<1x128xf32> -> vector<2x128xf32>
        %c0_36 = arith.constant 0 : index
        %c0_37 = arith.constant 0 : index
        %65 = vector.load %arg22[%c0_36, %c0_37] : memref<2x128xf32, #tpu.memory_space<vmem>>, vector<2x128xf32>
        tpu.vector_store %arg22[%c0_36, %c0_37], %64 {strides = array<i32>} : memref<2x128xf32, #tpu.memory_space<vmem>>, vector<2x128xf32>,
      } else {
      }
      %19 = arith.index_cast %arg1 : i32 to index
      %c0 = arith.constant 0 : index
      %c0_7 = arith.constant 0 : index
      %20 = vector.load %arg19[%19, %c0, %c0_7] : memref<1x8x128xf32, #tpu.memory_space<vmem>>, vector<1x8x128xf32>
      %21 = vector.shape_cast %20 : vector<1x8x128xf32> to vector<8x128xf32>
      %c0_8 = arith.constant 0 : index
      %c0_9 = arith.constant 0 : index
      %22 = vector.load %arg22[%c0_8, %c0_9] : memref<2x128xf32, #tpu.memory_space<vmem>>, vector<1x128xf32>
      %23 = vector.broadcast %22 : vector<1x128xf32> to vector<8x128xf32>
      %24 = arith.mulf %21, %23 : vector<8x128xf32>
      %c1 = arith.constant 1 : index
      %c0_10 = arith.constant 0 : index
      %25 = vector.load %arg22[%c1, %c0_10] : memref<2x128xf32, #tpu.memory_space<vmem>>, vector<1x128xf32>
      %26 = vector.broadcast %25 : vector<1x128xf32> to vector<8x128xf32>
      %27 = arith.addf %24, %26 : vector<8x128xf32>
      %cst_11 = arith.constant 0.000000e+00 : f32
      %28 = vector.broadcast %cst_11 : f32 to vector<8x128xf32>
      %29 = arith.maximumf %27, %28 : vector<8x128xf32>
      %30 = arith.truncf %29 : vector<8x128xf32> to vector<8x128xbf16>
      %c0_12 = arith.constant 0 : index
      %c0_13 = arith.constant 0 : index
      %31 = vector.load %arg13[%c0_12, %c0_13] : memref<128x128xbf16, #tpu.memory_space<vmem>>, vector<128x128xbf16>
      %cst_14 = arith.constant dense<0.000000e+00> : vector<8x128xf32>
      %32 = tpu.matmul %30, %31, %cst_14 {dimension_numbers = #tpu.dot_dimension_numbers<[1], [0], [0], [1], [0, 0, 1, 1], [], []>} : vector<8x128xbf16>, vector<128x128xbf16>, vector<8x128xf32> -> vector<8x128xf32>
      %33 = arith.extui %0 : i1 to i32
      %c0_i32_15 = arith.constant 0 : i32
      %34 = arith.cmpi ne, %33, %c0_i32_15 : i32
      scf.if %34 {
        %cst_24 = arith.constant 0.000000e+00 : f32
        %46 = vector.broadcast %cst_24 : f32 to vector<2x128xf32>
        %c0_25 = arith.constant 0 : index
        %c0_26 = arith.constant 0 : index
        %47 = vector.load %arg23[%c0_25, %c0_26] : memref<2x128xf32, #tpu.memory_space<vmem>>, vector<2x128xf32>
        tpu.vector_store %arg23[%c0_25, %c0_26], %46 {strides = array<i32>} : memref<2x128xf32, #tpu.memory_space<vmem>>, vector<2x128xf32>,
      } else {
      }
      %cst_16 = arith.constant dense<0.000000e+00> : vector<1x128xf32>
      %35 = tpu.matmul %1, %32, %cst_16 {dimension_numbers = #tpu.dot_dimension_numbers<[1], [0], [0], [1], [0, 0, 1, 1], [], []>, precision = #tpu.contract_precision<fp32>} : vector<1x8xf32>, vector<8x128xf32>, vector<1x128xf32> -> vector<1x128xf32>
      %36 = arith.mulf %32, %32 : vector<8x128xf32>
      %cst_17 = arith.constant dense<0.000000e+00> : vector<1x128xf32>
      %37 = tpu.matmul %1, %36, %cst_17 {dimension_numbers = #tpu.dot_dimension_numbers<[1], [0], [0], [1], [0, 0, 1, 1], [], []>, precision = #tpu.contract_precision<fp32>} : vector<1x8xf32>, vector<8x128xf32>, vector<1x128xf32> -> vector<1x128xf32>
      %c0_18 = arith.constant 0 : index
      %c0_19 = arith.constant 0 : index
      %38 = vector.load %arg23[%c0_18, %c0_19] : memref<2x128xf32, #tpu.memory_space<vmem>>, vector<2x128xf32>
      %39 = tpu.concatenate %35, %37 in 0 : vector<1x128xf32>, vector<1x128xf32> -> vector<2x128xf32>
      %40 = arith.addf %38, %39 : vector<2x128xf32>
      %c0_20 = arith.constant 0 : index
      %c0_21 = arith.constant 0 : index
      %41 = vector.load %arg23[%c0_20, %c0_21] : memref<2x128xf32, #tpu.memory_space<vmem>>, vector<2x128xf32>
      tpu.vector_store %arg23[%c0_20, %c0_21], %40 {strides = array<i32>} : memref<2x128xf32, #tpu.memory_space<vmem>>, vector<2x128xf32>,
      %42 = arith.index_cast %arg1 : i32 to index
      %c0_22 = arith.constant 0 : index
      %c0_23 = arith.constant 0 : index
      %43 = vector.load %arg19[%42, %c0_22, %c0_23] : memref<1x8x128xf32, #tpu.memory_space<vmem>>, vector<1x8x128xf32>
      %44 = vector.shape_cast %43 : vector<1x8x128xf32> to vector<8x128xf32>
      %45 = vector.shape_cast %32 : vector<8x128xf32> to vector<1x8x128xf32>
      tpu.vector_store %arg19[%42, %c0_22, %c0_23], %45 {strides = array<i32>} : memref<1x8x128xf32, #tpu.memory_space<vmem>>, vector<1x8x128xf32>,
    } else {
    }
    %c4_i32 = arith.constant 4 : i32
    %14 = arith.cmpi eq, %arg0, %c4_i32 : i32
    %15 = arith.extui %14 : i1 to i32
    %c0_i32_5 = arith.constant 0 : i32
    %16 = arith.cmpi ne, %15, %c0_i32_5 : i32
    scf.if %16 {
      %17 = arith.extui %0 : i1 to i32
      %c0_i32_6 = arith.constant 0 : i32
      %18 = arith.cmpi ne, %17, %c0_i32_6 : i32
      scf.if %18 {
        %c0_19 = arith.constant 0 : index
        %c0_20 = arith.constant 0 : index
        %37 = vector.load %arg23[%c0_19, %c0_20] : memref<2x128xf32, #tpu.memory_space<vmem>>, vector<1x128xf32>
        %cst_21 = arith.constant 1.250000e-01 : f32
        %38 = vector.broadcast %cst_21 : f32 to vector<1x128xf32>
        %39 = arith.mulf %37, %38 : vector<1x128xf32>
        %c1_22 = arith.constant 1 : index
        %c0_23 = arith.constant 0 : index
        %40 = vector.load %arg23[%c1_22, %c0_23] : memref<2x128xf32, #tpu.memory_space<vmem>>, vector<1x128xf32>
        %cst_24 = arith.constant 1.250000e-01 : f32
        %41 = vector.broadcast %cst_24 : f32 to vector<1x128xf32>
        %42 = arith.mulf %40, %41 : vector<1x128xf32>
        %43 = arith.mulf %39, %39 : vector<1x128xf32>
        %44 = arith.subf %42, %43 : vector<1x128xf32>
        %cst_25 = arith.constant 0.000000e+00 : f32
        %45 = vector.broadcast %cst_25 : f32 to vector<1x128xf32>
        %46 = arith.maximumf %44, %45 : vector<1x128xf32>
        %c0_26 = arith.constant 0 : index
        %c0_27 = arith.constant 0 : index
        %47 = vector.load %arg14[%c0_26, %c0_27] : memref<1x128xf32, #tpu.memory_space<vmem>>, vector<1x128xf32>
        %cst_28 = arith.constant 9.99999974E-6 : f32
        %48 = vector.broadcast %cst_28 : f32 to vector<1x128xf32>
        %49 = arith.addf %46, %48 : vector<1x128xf32>
        %50 = math.rsqrt %49 : vector<1x128xf32>
        %51 = arith.mulf %47, %50 : vector<1x128xf32>
        %c0_29 = arith.constant 0 : index
        %c0_30 = arith.constant 0 : index
        %52 = vector.load %arg15[%c0_29, %c0_30] : memref<1x128xf32, #tpu.memory_space<vmem>>, vector<1x128xf32>
        %53 = arith.mulf %39, %51 : vector<1x128xf32>
        %54 = arith.subf %52, %53 : vector<1x128xf32>
        %55 = tpu.concatenate %51, %54 in 0 : vector<1x128xf32>, vector<1x128xf32> -> vector<2x128xf32>
        %c0_31 = arith.constant 0 : index
        %c0_32 = arith.constant 0 : index
        %56 = vector.load %arg23[%c0_31, %c0_32] : memref<2x128xf32, #tpu.memory_space<vmem>>, vector<2x128xf32>
        tpu.vector_store %arg23[%c0_31, %c0_32], %55 {strides = array<i32>} : memref<2x128xf32, #tpu.memory_space<vmem>>, vector<2x128xf32>,
      } else {
      }
      %19 = arith.index_cast %arg1 : i32 to index
      %c0 = arith.constant 0 : index
      %c0_7 = arith.constant 0 : index
      %20 = vector.load %arg19[%19, %c0, %c0_7] : memref<1x8x128xf32, #tpu.memory_space<vmem>>, vector<1x8x128xf32>
      %21 = vector.shape_cast %20 : vector<1x8x128xf32> to vector<8x128xf32>
      %c0_8 = arith.constant 0 : index
      %c0_9 = arith.constant 0 : index
      %22 = vector.load %arg23[%c0_8, %c0_9] : memref<2x128xf32, #tpu.memory_space<vmem>>, vector<1x128xf32>
      %23 = vector.broadcast %22 : vector<1x128xf32> to vector<8x128xf32>
      %24 = arith.mulf %21, %23 : vector<8x128xf32>
      %c1 = arith.constant 1 : index
      %c0_10 = arith.constant 0 : index
      %25 = vector.load %arg23[%c1, %c0_10] : memref<2x128xf32, #tpu.memory_space<vmem>>, vector<1x128xf32>
      %26 = vector.broadcast %25 : vector<1x128xf32> to vector<8x128xf32>
      %27 = arith.addf %24, %26 : vector<8x128xf32>
      %cst_11 = arith.constant 0.000000e+00 : f32
      %28 = vector.broadcast %cst_11 : f32 to vector<8x128xf32>
      %29 = arith.maximumf %27, %28 : vector<8x128xf32>
      %30 = arith.truncf %29 : vector<8x128xf32> to vector<8x128xbf16>
      %c0_12 = arith.constant 0 : index
      %c0_13 = arith.constant 0 : index
      %31 = vector.load %arg16[%c0_12, %c0_13] : memref<128x32xbf16, #tpu.memory_space<vmem>>, vector<128x32xbf16>
      %cst_14 = arith.constant dense<0.000000e+00> : vector<8x32xf32>
      %32 = tpu.matmul %30, %31, %cst_14 {dimension_numbers = #tpu.dot_dimension_numbers<[1], [0], [0], [1], [0, 0, 1, 1], [], []>} : vector<8x128xbf16>, vector<128x32xbf16>, vector<8x32xf32> -> vector<8x32xf32>
      %c0_15 = arith.constant 0 : index
      %c0_16 = arith.constant 0 : index
      %33 = vector.load %arg17[%c0_15, %c0_16] : memref<1x32xf32, #tpu.memory_space<vmem>>, vector<1x32xf32>
      %34 = vector.broadcast %33 : vector<1x32xf32> to vector<8x32xf32>
      %35 = arith.addf %32, %34 : vector<8x32xf32>
      %c0_17 = arith.constant 0 : index
      %c0_18 = arith.constant 0 : index
      %36 = vector.load %arg18[%c0_17, %c0_18] : memref<8x32xf32, #tpu.memory_space<vmem>>, vector<8x32xf32>
      tpu.vector_store %arg18[%c0_17, %c0_18], %35 {strides = array<i32>} : memref<8x32xf32, #tpu.memory_space<vmem>>, vector<8x32xf32>,
    } else {
    }
    return
  }
  func.func @transform_0(%arg0: i32, %arg1: i32) -> (i32, i32) {
    %c0_i32 = arith.constant 0 : i32
    %0 = arith.cmpi eq, %arg0, %c0_i32 : i32
    %c0_i32_0 = arith.constant 0 : i32
    %1 = arith.select %0, %arg1, %c0_i32_0 : i32
    %c0_i32_1 = arith.constant 0 : i32
    %c0_i32_2 = arith.constant 0 : i32
    return %1, %c0_i32_1 : i32, i32
  }
  func.func @transform_1(%arg0: i32, %arg1: i32) -> (i32, i32) {
    %c0_i32 = arith.constant 0 : i32
    %c0_i32_0 = arith.constant 0 : i32
    %c0_i32_1 = arith.constant 0 : i32
    return %c0_i32, %c0_i32_0 : i32, i32
  }
  func.func @transform_2(%arg0: i32, %arg1: i32) -> (i32, i32) {
    %c0_i32 = arith.constant 0 : i32
    %c0_i32_0 = arith.constant 0 : i32
    %c0_i32_1 = arith.constant 0 : i32
    return %c0_i32, %c0_i32_0 : i32, i32
  }
  func.func @transform_3(%arg0: i32, %arg1: i32) -> (i32, i32) {
    %c0_i32 = arith.constant 0 : i32
    %c0_i32_0 = arith.constant 0 : i32
    %c0_i32_1 = arith.constant 0 : i32
    return %c0_i32, %c0_i32_0 : i32, i32
  }
  func.func @transform_4(%arg0: i32, %arg1: i32) -> (i32, i32) {
    %c0_i32 = arith.constant 0 : i32
    %c0_i32_0 = arith.constant 0 : i32
    %c0_i32_1 = arith.constant 0 : i32
    return %c0_i32, %c0_i32_0 : i32, i32
  }
  func.func @transform_5(%arg0: i32, %arg1: i32) -> (i32, i32) {
    %c0_i32 = arith.constant 0 : i32
    %c0_i32_0 = arith.constant 0 : i32
    %c0_i32_1 = arith.constant 0 : i32
    return %c0_i32, %c0_i32_0 : i32, i32
  }
  func.func @transform_6(%arg0: i32, %arg1: i32) -> (i32, i32) {
    %c0_i32 = arith.constant 0 : i32
    %c0_i32_0 = arith.constant 0 : i32
    %c0_i32_1 = arith.constant 0 : i32
    return %c0_i32, %c0_i32_0 : i32, i32
  }
  func.func @transform_7(%arg0: i32, %arg1: i32) -> (i32, i32) {
    %c0_i32 = arith.constant 0 : i32
    %c0_i32_0 = arith.constant 0 : i32
    %c0_i32_1 = arith.constant 0 : i32
    return %c0_i32, %c0_i32_0 : i32, i32
  }
  func.func @transform_8(%arg0: i32, %arg1: i32) -> (i32, i32) {
    %c0_i32 = arith.constant 0 : i32
    %c0_i32_0 = arith.constant 0 : i32
    %c0_i32_1 = arith.constant 0 : i32
    return %c0_i32, %c0_i32_0 : i32, i32
  }
  func.func @transform_9(%arg0: i32, %arg1: i32) -> (i32, i32) {
    %c0_i32 = arith.constant 0 : i32
    %c0_i32_0 = arith.constant 0 : i32
    %c0_i32_1 = arith.constant 0 : i32
    return %c0_i32, %c0_i32_0 : i32, i32
  }
  func.func @transform_10(%arg0: i32, %arg1: i32) -> (i32, i32) {
    %c0_i32 = arith.constant 0 : i32
    %c0_i32_0 = arith.constant 0 : i32
    %c0_i32_1 = arith.constant 0 : i32
    return %c0_i32, %c0_i32_0 : i32, i32
  }
  func.func @transform_11(%arg0: i32, %arg1: i32) -> (i32, i32) {
    %c0_i32 = arith.constant 0 : i32
    %c0_i32_0 = arith.constant 0 : i32
    %c0_i32_1 = arith.constant 0 : i32
    return %c0_i32, %c0_i32_0 : i32, i32
  }
  func.func @transform_12(%arg0: i32, %arg1: i32) -> (i32, i32) {
    %c0_i32 = arith.constant 0 : i32
    %c0_i32_0 = arith.constant 0 : i32
    %c0_i32_1 = arith.constant 0 : i32
    return %c0_i32, %c0_i32_0 : i32, i32
  }
  func.func @transform_13(%arg0: i32, %arg1: i32) -> (i32, i32) {
    %c0_i32 = arith.constant 0 : i32
    %c0_i32_0 = arith.constant 0 : i32
    %c0_i32_1 = arith.constant 0 : i32
    return %c0_i32, %c0_i32_0 : i32, i32
  }
  func.func @transform_14(%arg0: i32, %arg1: i32) -> (i32, i32) {
    %c0_i32 = arith.constant 0 : i32
    %c0_i32_0 = arith.constant 0 : i32
    %c0_i32_1 = arith.constant 0 : i32
    return %c0_i32, %c0_i32_0 : i32, i32
  }
  func.func @transform_15(%arg0: i32, %arg1: i32) -> (i32, i32) {
    %c0_i32 = arith.constant 0 : i32
    %c0_i32_0 = arith.constant 0 : i32
    %c0_i32_1 = arith.constant 0 : i32
    return %c0_i32, %c0_i32_0 : i32, i32
  }
  func.func @transform_16(%arg0: i32, %arg1: i32) -> (i32, i32) {
    %c4_i32 = arith.constant 4 : i32
    %0 = arith.cmpi eq, %arg0, %c4_i32 : i32
    %c0_i32 = arith.constant 0 : i32
    %1 = arith.select %0, %arg1, %c0_i32 : i32
    %c0_i32_0 = arith.constant 0 : i32
    %c0_i32_1 = arith.constant 0 : i32
    return %1, %c0_i32_0 : i32, i32
  }
}

</mosaic_0001>

<llo_original>
// kernel: tpu_custom_call.1
$region0: #{tpu_custom_call.1}
  #allocation0 [shape = 'u32[]', space=smem, size = 0x4, offset = 0x4, fixed_abs, tag = 'smem constant byte address 0x4 - core index']
  #allocation1 [shape = 'u32[144,128]{1,0:T(1,128)}', space=vmem, size = 0x12000, scoped, tag = 'internal scratch']
  #allocation2 [shape = 'f32[1,8,128]{2,1,0:T(8,128)}', space=vmem, size = 0x1000, scoped, tag = 'scratch operand']
  #allocation3 [shape = 'f32[2,128]{1,0:T(2,128)}', space=vmem, size = 0x400, scoped, tag = 'scratch operand']
  #allocation4 [shape = 'f32[2,128]{1,0:T(2,128)}', space=vmem, size = 0x400, scoped, tag = 'scratch operand']
  #allocation5 [shape = 'f32[2,128]{1,0:T(2,128)}', space=vmem, size = 0x400, scoped, tag = 'scratch operand']
  #allocation6 [shape = 'f32[2,128]{1,0:T(2,128)}', space=vmem, size = 0x400, scoped, tag = 'scratch operand']
  %s0 = inlined_call_operand.hbm [shape: bf16[8,32], index: 0, kind: input, shape index: {}]
  %s1 = inlined_call_operand.hbm [shape: bf16[32,128], index: 1, kind: input, shape index: {}]
  %s2 = inlined_call_operand.hbm [shape: f32[1,128], index: 2, kind: input, shape index: {}]
  %s3 = inlined_call_operand.hbm [shape: f32[1,128], index: 3, kind: input, shape index: {}]
  %s4 = inlined_call_operand.hbm [shape: bf16[128,128], index: 4, kind: input, shape index: {}]
  %s5 = inlined_call_operand.hbm [shape: f32[1,128], index: 5, kind: input, shape index: {}]
  %s6 = inlined_call_operand.hbm [shape: f32[1,128], index: 6, kind: input, shape index: {}]
  %s7 = inlined_call_operand.hbm [shape: bf16[128,128], index: 7, kind: input, shape index: {}]
  %s8 = inlined_call_operand.hbm [shape: f32[1,128], index: 8, kind: input, shape index: {}]
  %s9 = inlined_call_operand.hbm [shape: f32[1,128], index: 9, kind: input, shape index: {}]
  %s10 = inlined_call_operand.hbm [shape: f32[1,128], index: 10, kind: input, shape index: {}]
  %s11 = inlined_call_operand.hbm [shape: bf16[128,128], index: 11, kind: input, shape index: {}]
  %s12 = inlined_call_operand.hbm [shape: f32[1,128], index: 12, kind: input, shape index: {}]
  %s13 = inlined_call_operand.hbm [shape: f32[1,128], index: 13, kind: input, shape index: {}]
  %s14 = inlined_call_operand.hbm [shape: bf16[128,32], index: 14, kind: input, shape index: {}]
  %s15 = inlined_call_operand.hbm [shape: f32[1,32], index: 15, kind: input, shape index: {}]
  %s16 = inlined_call_operand.hbm [shape: f32[8,32], index: 16, kind: output, shape index: {}]
  %s17 = sld [smem:[#allocation0]]
  $region217: #{tpu_custom_call.1} parent=0
    _
  %s19 = ssub.s32 1, %s17
  %s20 = scalar_select 0, %s19, %s17
  $region1: #{tpu_custom_call.1} parent=0
    #allocation7 [shape = 'u8[4096]{0}', space=vmem, size = 0x1000, scoped, tag = 'input window, operand 0']
    #allocation8 [shape = 's32[2]{0}', space=sflag, size = 0x8, scoped, tag = 'scoped memory for tpu_custom_call.1']
    #allocation9 [shape = 's32[2]{0}', space=sflag, size = 0x8, scoped, tag = 'scoped memory for tpu_custom_call.1']
    #allocation10 [shape = 'u8[8192]{0}', space=vmem, size = 0x2000, scoped, tag = 'input window, operand 1, single buffered']
    #allocation11 [shape = 's32[1]{0}', space=sflag, size = 0x4, scoped, tag = 'scoped memory for tpu_custom_call.1']
    #allocation12 [shape = 'u8[512]{0}', space=vmem, size = 0x400, scoped, tag = 'input window, operand 2, single buffered']
    #allocation13 [shape = 'u8[512]{0}', space=vmem, size = 0x400, scoped, tag = 'input window, operand 3, single buffered']
    #allocation14 [shape = 's32[1]{0}', space=sflag, size = 0x4, scoped, tag = 'scoped memory for tpu_custom_call.1']
    #allocation15 [shape = 'u8[32768]{0}', space=vmem, size = 0x8000, scoped, tag = 'input window, operand 4, single buffered']
    #allocation16 [shape = 'u8[512]{0}', space=vmem, size = 0x400, scoped, tag = 'input window, operand 5, single buffered']
    #allocation17 [shape = 's32[1]{0}', space=sflag, size = 0x4, scoped, tag = 'scoped memory for tpu_custom_call.1']
    #allocation18 [shape = 'u8[512]{0}', space=vmem, size = 0x400, scoped, tag = 'input window, operand 6, single buffered']
    #allocation19 [shape = 'u8[32768]{0}', space=vmem, size = 0x8000, scoped, tag = 'input window, operand 7, single buffered']
    #allocation20 [shape = 's32[1]{0}', space=sflag, size = 0x4, scoped, tag = 'scoped memory for tpu_custom_call.1']
    #allocation21 [shape = 'u8[512]{0}', space=vmem, size = 0x400, scoped, tag = 'input window, operand 8, single buffered']
    #allocation22 [shape = 'u8[512]{0}', space=vmem, size = 0x400, scoped, tag = 'input window, operand 9, single buffered']
    #allocation23 [shape = 's32[1]{0}', space=sflag, size = 0x4, scoped, tag = 'scoped memory for tpu_custom_call.1']
    #allocation24 [shape = 'u8[512]{0}', space=vmem, size = 0x400, scoped, tag = 'input window, operand 10, single buffered']
    #allocation25 [shape = 'u8[32768]{0}', space=vmem, size = 0x8000, scoped, tag = 'input window, operand 11, single buffered']
    #allocation26 [shape = 's32[1]{0}', space=sflag, size = 0x4, scoped, tag = 'scoped memory for tpu_custom_call.1']
    #allocation27 [shape = 'u8[512]{0}', space=vmem, size = 0x400, scoped, tag = 'input window, operand 12, single buffered']
    #allocation28 [shape = 'u8[512]{0}', space=vmem, size = 0x400, scoped, tag = 'input window, operand 13, single buffered']
    #allocation29 [shape = 's32[1]{0}', space=sflag, size = 0x4, scoped, tag = 'scoped memory for tpu_custom_call.1']
    #allocation30 [shape = 'u8[32768]{0}', space=vmem, size = 0x8000, scoped, tag = 'input window, operand 14, single buffered']
    #allocation31 [shape = 'u8[512]{0}', space=vmem, size = 0x400, scoped, tag = 'input window, operand 15, single buffered']
    #allocation32 [shape = 's32[1]{0}', space=sflag, size = 0x4, scoped, tag = 'scoped memory for tpu_custom_call.1']
    #allocation33 [shape = 'u8[8192]{0}', space=vmem, size = 0x2000, scoped, tag = 'output window, operand 0']
    %21 = vsyncpa [#allocation8], 0
    %s22 = scalar_lea.sflag [#allocation8], 1
    %23 = vsyncpa %s22, 0
    %24 = vsyncpa [#allocation11], 0
    %25 = vsyncpa [#allocation14], 0
    %26 = vsyncpa [#allocation17], 0
    %27 = vsyncpa [#allocation20], 0
    %28 = vsyncpa [#allocation23], 0
    %29 = vsyncpa [#allocation26], 0
    %30 = vsyncpa [#allocation29], 0
    %31 = vsyncpa [#allocation32], 0
    %32 = vsyncpa [#allocation9], 0
    %s33 = scalar_lea.sflag [#allocation9], 1
    %34 = vsyncpa %s33, 0
    loop: start=0, step=1, limit=7
    $region2: #{tpu_custom_call.1} parent=1 // loop_pre_header
      _
    $region3: #{tpu_custom_call.1} parent=1 // loop_header
      %s36 = sphi 0, %s40
      %p37 = scmp.ge.s32.totalorder %s36, 7
      %s43 = sphi 0, %s55
      %s44 = sphi 0, %s51
      %s45 = sphi 0, %s43
      %s46 = sphi 0, %s44
      %s47 = sphi 0, %s45
      %s48 = sphi 0, %s46
      %s62 = sphi 0, %s64
      %s65 = sphi 0, %s62
      %s66 = sphi 0, %s65
      %s82 = sphi 0, %s66
      %s86 = sphi 0, %s86
      %s88 = sphi 0, %s86
      %s89 = sphi 0, %s88
      %s103 = sphi 0, %s89
      %s107 = sphi 0, %s107
      %s109 = sphi 0, %s107
      %s110 = sphi 0, %s109
      %s124 = sphi 0, %s110
      %s128 = sphi 0, %s128
      %s130 = sphi 0, %s128
      %s131 = sphi 0, %s130
      %s145 = sphi 0, %s131
      %s149 = sphi 0, %s149
      %s151 = sphi 0, %s149
      %s152 = sphi 0, %s151
      %s166 = sphi 0, %s152
      %s170 = sphi 0, %s170
      %s172 = sphi 0, %s170
      %s173 = sphi 0, %s172
      %s187 = sphi 0, %s173
      %s191 = sphi 0, %s191
      %s193 = sphi 0, %s191
      %s194 = sphi 0, %s193
      %s208 = sphi 0, %s194
      %s212 = sphi 0, %s212
      %s214 = sphi 0, %s212
      %s215 = sphi 0, %s214
      %s229 = sphi 0, %s215
      %s233 = sphi 0, %s233
      %s235 = sphi 0, %s233
      %s236 = sphi 0, %s235
      %s250 = sphi 0, %s236
      %s254 = sphi 0, %s254
      %s256 = sphi 0, %s254
      %s257 = sphi 0, %s256
      %s271 = sphi 0, %s257
      %s275 = sphi 0, %s275
      %s277 = sphi 0, %s275
      %s278 = sphi 0, %s277
      %s292 = sphi 0, %s278
      %s296 = sphi 0, %s296
      %s298 = sphi 0, %s296
      %s299 = sphi 0, %s298
      %s313 = sphi 0, %s299
      %s317 = sphi 0, %s317
      %s319 = sphi 0, %s317
      %s320 = sphi 0, %s319
      %s334 = sphi 0, %s320
      %s338 = sphi 0, %s338
      %s340 = sphi 0, %s338
      %s341 = sphi 0, %s340
      %s355 = sphi 0, %s341
      %s359 = sphi 0, %s359
      %s361 = sphi 0, %s359
      %s362 = sphi 0, %s361
      %s376 = sphi 0, %s362
      %s380 = sphi 0, %s380
      %s382 = sphi 0, %s380
      %s383 = sphi 0, %s382
      %s397 = sphi 0, %s383
      %s407 = sphi 0, %s409
      %s410 = sphi 0, %s407
      %s411 = sphi 0, %s410
      %s427 = sphi 0, %s411
    $region4: #{tpu_custom_call.1} parent=1 // loop_header_branch
      %39 = sbr.rel (%p37) target = $region8
    $region5: #{tpu_custom_call.1} parent=1 // loop_body
      %s41 = ssub.s32 %s36, 1
      %s42 = ssub.s32 %s36, 2
      %s49 = sadd.s32 1, %s44
      %p50 = scmp.ge.s32.totalorder %s49, 1
      %s51 = scalar_select %p50, 0, %s49
      %s52 = sadd.s32 1, %s43
      %s53 = scalar_select %p50, %s52, %s43
      %p54 = scmp.ge.s32.totalorder %s53, 5
      %s55 = scalar_select %p54, 0, %s53
      %p56 = scmp.eq.s32.totalorder %s43, 0
      %s57 = scalar_select %p56, %s44, 0
      %p58 = scmp.eq.s32.totalorder %s55, 0
      %s59 = scalar_select %p58, %s51, 0
      %s60 = ssub.s32 %s57, %s59
      %p61 = scmp.eq.s32.totalorder %s60, 0
      %s63 = sadd.s32 %s62, 1
      %s64 = scalar_select %p61, %s62, %s63
      %p67 = pneg %p61
      %p68 = scmp.eq.s32.totalorder %s36, 4
      %p69 = por %p67, %p68
      %p70 = scmp.ne.s32.totalorder %s62, %s65
      %p71 = scmp.eq.s32.totalorder %s36, 0
      %p72 = por %p70, %p71
      %p73 = scmp.ne.s32.totalorder %s62, %s65
      %p74 = scmp.eq.s32.totalorder %s41, 4
      %p75 = por %p73, %p74
      %p76 = scmp.ne.s32.totalorder %s65, %s66
      %p77 = scmp.eq.s32.totalorder %s41, 0
      %p78 = por %p76, %p77
      %p79 = scmp.ne.s32.totalorder %s65, %s66
      %p80 = scmp.eq.s32.totalorder %s42, 4
      %p81 = por %p79, %p80
      %p83 = scmp.ne.s32.totalorder %s66, %s82
      %p84 = scmp.eq.s32.totalorder %s42, 0
      %p85 = por %p83, %p84
      %s87 = sadd.s32 %s86, 1
      %p90 = scmp.eq.s32.totalorder %s36, 4
      %p91 = scmp.ne.s32.totalorder %s86, %s88
      %p92 = scmp.eq.s32.totalorder %s36, 0
      %p93 = por %p91, %p92
      %p94 = scmp.ne.s32.totalorder %s86, %s88
      %p95 = scmp.eq.s32.totalorder %s41, 4
      %p96 = por %p94, %p95
      %p97 = scmp.ne.s32.totalorder %s88, %s89
      %p98 = scmp.eq.s32.totalorder %s41, 0
      %p99 = por %p97, %p98
      %p100 = scmp.ne.s32.totalorder %s88, %s89
      %p101 = scmp.eq.s32.totalorder %s42, 4
      %p102 = por %p100, %p101
      %p104 = scmp.ne.s32.totalorder %s89, %s103
      %p105 = scmp.eq.s32.totalorder %s42, 0
      %p106 = por %p104, %p105
      %s108 = sadd.s32 %s107, 1
      %p111 = scmp.eq.s32.totalorder %s36, 4
      %p112 = scmp.ne.s32.totalorder %s107, %s109
      %p113 = scmp.eq.s32.totalorder %s36, 0
      %p114 = por %p112, %p113
      %p115 = scmp.ne.s32.totalorder %s107, %s109
      %p116 = scmp.eq.s32.totalorder %s41, 4
      %p117 = por %p115, %p116
      %p118 = scmp.ne.s32.totalorder %s109, %s110
      %p119 = scmp.eq.s32.totalorder %s41, 0
      %p120 = por %p118, %p119
      %p121 = scmp.ne.s32.totalorder %s109, %s110
      %p122 = scmp.eq.s32.totalorder %s42, 4
      %p123 = por %p121, %p122
      %p125 = scmp.ne.s32.totalorder %s110, %s124
      %p126 = scmp.eq.s32.totalorder %s42, 0
      %p127 = por %p125, %p126
      %s129 = sadd.s32 %s128, 1
      %p132 = scmp.eq.s32.totalorder %s36, 4
      %p133 = scmp.ne.s32.totalorder %s128, %s130
      %p134 = scmp.eq.s32.totalorder %s36, 0
      %p135 = por %p133, %p134
      %p136 = scmp.ne.s32.totalorder %s128, %s130
      %p137 = scmp.eq.s32.totalorder %s41, 4
      %p138 = por %p136, %p137
      %p139 = scmp.ne.s32.totalorder %s130, %s131
      %p140 = scmp.eq.s32.totalorder %s41, 0
      %p141 = por %p139, %p140
      %p142 = scmp.ne.s32.totalorder %s130, %s131
      %p143 = scmp.eq.s32.totalorder %s42, 4
      %p144 = por %p142, %p143
      %p146 = scmp.ne.s32.totalorder %s131, %s145
      %p147 = scmp.eq.s32.totalorder %s42, 0
      %p148 = por %p146, %p147
      %s150 = sadd.s32 %s149, 1
      %p153 = scmp.eq.s32.totalorder %s36, 4
      %p154 = scmp.ne.s32.totalorder %s149, %s151
      %p155 = scmp.eq.s32.totalorder %s36, 0
      %p156 = por %p154, %p155
      %p157 = scmp.ne.s32.totalorder %s149, %s151
      %p158 = scmp.eq.s32.totalorder %s41, 4
      %p159 = por %p157, %p158
      %p160 = scmp.ne.s32.totalorder %s151, %s152
      %p161 = scmp.eq.s32.totalorder %s41, 0
      %p162 = por %p160, %p161
      %p163 = scmp.ne.s32.totalorder %s151, %s152
      %p164 = scmp.eq.s32.totalorder %s42, 4
      %p165 = por %p163, %p164
      %p167 = scmp.ne.s32.totalorder %s152, %s166
      %p168 = scmp.eq.s32.totalorder %s42, 0
      %p169 = por %p167, %p168
      %s171 = sadd.s32 %s170, 1
      %p174 = scmp.eq.s32.totalorder %s36, 4
      %p175 = scmp.ne.s32.totalorder %s170, %s172
      %p176 = scmp.eq.s32.totalorder %s36, 0
      %p177 = por %p175, %p176
      %p178 = scmp.ne.s32.totalorder %s170, %s172
      %p179 = scmp.eq.s32.totalorder %s41, 4
      %p180 = por %p178, %p179
      %p181 = scmp.ne.s32.totalorder %s172, %s173
      %p182 = scmp.eq.s32.totalorder %s41, 0
      %p183 = por %p181, %p182
      %p184 = scmp.ne.s32.totalorder %s172, %s173
      %p185 = scmp.eq.s32.totalorder %s42, 4
      %p186 = por %p184, %p185
      %p188 = scmp.ne.s32.totalorder %s173, %s187
      %p189 = scmp.eq.s32.totalorder %s42, 0
      %p190 = por %p188, %p189
      %s192 = sadd.s32 %s191, 1
      %p195 = scmp.eq.s32.totalorder %s36, 4
      %p196 = scmp.ne.s32.totalorder %s191, %s193
      %p197 = scmp.eq.s32.totalorder %s36, 0
      %p198 = por %p196, %p197
      %p199 = scmp.ne.s32.totalorder %s191, %s193
      %p200 = scmp.eq.s32.totalorder %s41, 4
      %p201 = por %p199, %p200
      %p202 = scmp.ne.s32.totalorder %s193, %s194
      %p203 = scmp.eq.s32.totalorder %s41, 0
      %p204 = por %p202, %p203
      %p205 = scmp.ne.s32.totalorder %s193, %s194
      %p206 = scmp.eq.s32.totalorder %s42, 4
      %p207 = por %p205, %p206
      %p209 = scmp.ne.s32.totalorder %s194, %s208
      %p210 = scmp.eq.s32.totalorder %s42, 0
      %p211 = por %p209, %p210
      %s213 = sadd.s32 %s212, 1
      %p216 = scmp.eq.s32.totalorder %s36, 4
      %p217 = scmp.ne.s32.totalorder %s212, %s214
      %p218 = scmp.eq.s32.totalorder %s36, 0
      %p219 = por %p217, %p218
      %p220 = scmp.ne.s32.totalorder %s212, %s214
      %p221 = scmp.eq.s32.totalorder %s41, 4
      %p222 = por %p220, %p221
      %p223 = scmp.ne.s32.totalorder %s214, %s215
      %p224 = scmp.eq.s32.totalorder %s41, 0
      %p225 = por %p223, %p224
      %p226 = scmp.ne.s32.totalorder %s214, %s215
      %p227 = scmp.eq.s32.totalorder %s42, 4
      %p228 = por %p226, %p227
      %p230 = scmp.ne.s32.totalorder %s215, %s229
      %p231 = scmp.eq.s32.totalorder %s42, 0
      %p232 = por %p230, %p231
      %s234 = sadd.s32 %s233, 1
      %p237 = scmp.eq.s32.totalorder %s36, 4
      %p238 = scmp.ne.s32.totalorder %s233, %s235
      %p239 = scmp.eq.s32.totalorder %s36, 0
      %p240 = por %p238, %p239
      %p241 = scmp.ne.s32.totalorder %s233, %s235
      %p242 = scmp.eq.s32.totalorder %s41, 4
      %p243 = por %p241, %p242
      %p244 = scmp.ne.s32.totalorder %s235, %s236
      %p245 = scmp.eq.s32.totalorder %s41, 0
      %p246 = por %p244, %p245
      %p247 = scmp.ne.s32.totalorder %s235, %s236
      %p248 = scmp.eq.s32.totalorder %s42, 4
      %p249 = por %p247, %p248
      %p251 = scmp.ne.s32.totalorder %s236, %s250
      %p252 = scmp.eq.s32.totalorder %s42, 0
      %p253 = por %p251, %p252
      %s255 = sadd.s32 %s254, 1
      %p258 = scmp.eq.s32.totalorder %s36, 4
      %p259 = scmp.ne.s32.totalorder %s254, %s256
      %p260 = scmp.eq.s32.totalorder %s36, 0
      %p261 = por %p259, %p260
      %p262 = scmp.ne.s32.totalorder %s254, %s256
      %p263 = scmp.eq.s32.totalorder %s41, 4
      %p264 = por %p262, %p263
      %p265 = scmp.ne.s32.totalorder %s256, %s257
      %p266 = scmp.eq.s32.totalorder %s41, 0
      %p267 = por %p265, %p266
      %p268 = scmp.ne.s32.totalorder %s256, %s257
      %p269 = scmp.eq.s32.totalorder %s42, 4
      %p270 = por %p268, %p269
      %p272 = scmp.ne.s32.totalorder %s257, %s271
      %p273 = scmp.eq.s32.totalorder %s42, 0
      %p274 = por %p272, %p273
      %s276 = sadd.s32 %s275, 1
      %p279 = scmp.eq.s32.totalorder %s36, 4
      %p280 = scmp.ne.s32.totalorder %s275, %s277
      %p281 = scmp.eq.s32.totalorder %s36, 0
      %p282 = por %p280, %p281
      %p283 = scmp.ne.s32.totalorder %s275, %s277
      %p284 = scmp.eq.s32.totalorder %s41, 4
      %p285 = por %p283, %p284
      %p286 = scmp.ne.s32.totalorder %s277, %s278
      %p287 = scmp.eq.s32.totalorder %s41, 0
      %p288 = por %p286, %p287
      %p289 = scmp.ne.s32.totalorder %s277, %s278
      %p290 = scmp.eq.s32.totalorder %s42, 4
      %p291 = por %p289, %p290
      %p293 = scmp.ne.s32.totalorder %s278, %s292
      %p294 = scmp.eq.s32.totalorder %s42, 0
      %p295 = por %p293, %p294
      %s297 = sadd.s32 %s296, 1
      %p300 = scmp.eq.s32.totalorder %s36, 4
      %p301 = scmp.ne.s32.totalorder %s296, %s298
      %p302 = scmp.eq.s32.totalorder %s36, 0
      %p303 = por %p301, %p302
      %p304 = scmp.ne.s32.totalorder %s296, %s298
      %p305 = scmp.eq.s32.totalorder %s41, 4
      %p306 = por %p304, %p305
      %p307 = scmp.ne.s32.totalorder %s298, %s299
      %p308 = scmp.eq.s32.totalorder %s41, 0
      %p309 = por %p307, %p308
      %p310 = scmp.ne.s32.totalorder %s298, %s299
      %p311 = scmp.eq.s32.totalorder %s42, 4
      %p312 = por %p310, %p311
      %p314 = scmp.ne.s32.totalorder %s299, %s313
      %p315 = scmp.eq.s32.totalorder %s42, 0
      %p316 = por %p314, %p315
      %s318 = sadd.s32 %s317, 1
      %p321 = scmp.eq.s32.totalorder %s36, 4
      %p322 = scmp.ne.s32.totalorder %s317, %s319
      %p323 = scmp.eq.s32.totalorder %s36, 0
      %p324 = por %p322, %p323
      %p325 = scmp.ne.s32.totalorder %s317, %s319
      %p326 = scmp.eq.s32.totalorder %s41, 4
      %p327 = por %p325, %p326
      %p328 = scmp.ne.s32.totalorder %s319, %s320
      %p329 = scmp.eq.s32.totalorder %s41, 0
      %p330 = por %p328, %p329
      %p331 = scmp.ne.s32.totalorder %s319, %s320
      %p332 = scmp.eq.s32.totalorder %s42, 4
      %p333 = por %p331, %p332
      %p335 = scmp.ne.s32.totalorder %s320, %s334
      %p336 = scmp.eq.s32.totalorder %s42, 0
      %p337 = por %p335, %p336
      %s339 = sadd.s32 %s338, 1
      %p342 = scmp.eq.s32.totalorder %s36, 4
      %p343 = scmp.ne.s32.totalorder %s338, %s340
      %p344 = scmp.eq.s32.totalorder %s36, 0
      %p345 = por %p343, %p344
      %p346 = scmp.ne.s32.totalorder %s338, %s340
      %p347 = scmp.eq.s32.totalorder %s41, 4
      %p348 = por %p346, %p347
      %p349 = scmp.ne.s32.totalorder %s340, %s341
      %p350 = scmp.eq.s32.totalorder %s41, 0
      %p351 = por %p349, %p350
      %p352 = scmp.ne.s32.totalorder %s340, %s341
      %p353 = scmp.eq.s32.totalorder %s42, 4
      %p354 = por %p352, %p353
      %p356 = scmp.ne.s32.totalorder %s341, %s355
      %p357 = scmp.eq.s32.totalorder %s42, 0
      %p358 = por %p356, %p357
      %s360 = sadd.s32 %s359, 1
      %p363 = scmp.eq.s32.totalorder %s36, 4
      %p364 = scmp.ne.s32.totalorder %s359, %s361
      %p365 = scmp.eq.s32.totalorder %s36, 0
      %p366 = por %p364, %p365
      %p367 = scmp.ne.s32.totalorder %s359, %s361
      %p368 = scmp.eq.s32.totalorder %s41, 4
      %p369 = por %p367, %p368
      %p370 = scmp.ne.s32.totalorder %s361, %s362
      %p371 = scmp.eq.s32.totalorder %s41, 0
      %p372 = por %p370, %p371
      %p373 = scmp.ne.s32.totalorder %s361, %s362
      %p374 = scmp.eq.s32.totalorder %s42, 4
      %p375 = por %p373, %p374
      %p377 = scmp.ne.s32.totalorder %s362, %s376
      %p378 = scmp.eq.s32.totalorder %s42, 0
      %p379 = por %p377, %p378
      %s381 = sadd.s32 %s380, 1
      %p384 = scmp.eq.s32.totalorder %s36, 4
      %p385 = scmp.ne.s32.totalorder %s380, %s382
      %p386 = scmp.eq.s32.totalorder %s36, 0
      %p387 = por %p385, %p386
      %p388 = scmp.ne.s32.totalorder %s380, %s382
      %p389 = scmp.eq.s32.totalorder %s41, 4
      %p390 = por %p388, %p389
      %p391 = scmp.ne.s32.totalorder %s382, %s383
      %p392 = scmp.eq.s32.totalorder %s41, 0
      %p393 = por %p391, %p392
      %p394 = scmp.ne.s32.totalorder %s382, %s383
      %p395 = scmp.eq.s32.totalorder %s42, 4
      %p396 = por %p394, %p395
      %p398 = scmp.ne.s32.totalorder %s383, %s397
      %p399 = scmp.eq.s32.totalorder %s42, 0
      %p400 = por %p398, %p399
      %p401 = scmp.eq.s32.totalorder %s43, 4
      %s402 = scalar_select %p401, %s44, 0
      %p403 = scmp.eq.s32.totalorder %s55, 4
      %s404 = scalar_select %p403, %s51, 0
      %s405 = ssub.s32 %s402, %s404
      %p406 = scmp.eq.s32.totalorder %s405, 0
      %s408 = sadd.s32 %s407, 1
      %s409 = scalar_select %p406, %s407, %s408
      %p412 = pneg %p406
      %p413 = scmp.eq.s32.totalorder %s36, 4
      %p414 = por %p412, %p413
      %p415 = scmp.ne.s32.totalorder %s407, %s410
      %p416 = scmp.eq.s32.totalorder %s36, 0
      %p417 = por %p415, %p416
      %p418 = scmp.ne.s32.totalorder %s407, %s410
      %p419 = scmp.eq.s32.totalorder %s41, 4
      %p420 = por %p418, %p419
      %p421 = scmp.ne.s32.totalorder %s410, %s411
      %p422 = scmp.eq.s32.totalorder %s41, 0
      %p423 = por %p421, %p422
      %p424 = scmp.ne.s32.totalorder %s410, %s411
      %p425 = scmp.eq.s32.totalorder %s42, 4
      %p426 = por %p424, %p425
      %p428 = scmp.ne.s32.totalorder %s411, %s427
      %p429 = scmp.eq.s32.totalorder %s42, 0
      %p430 = por %p428, %p429
      %p431 = scmp.le.s32.totalorder 1, %s36
      %p432 = scmp.lt.s32.totalorder %s36, 6
      %p433 = pnand %p431, %p432
      %p434 = pneg %p433
      // Predicated region
      $region9: #{tpu_custom_call.1} parent=5 // pred_check
        _
      $region10: #{tpu_custom_call.1} parent=5 // pred_check_branch
        %436 = sbr.rel (%p433) target = $region12
      $region11: #{tpu_custom_call.1} parent=5 // pred_region
        %s437 = ssub.s32 %s36, 1
        // Predicated region
        $region13: #{tpu_custom_call.1} parent=11 // pred_check
          %p438 = pneg %p99
        $region14: #{tpu_custom_call.1} parent=11 // pred_check_branch
          %440 = sbr.rel (%p438) target = $region16
        $region15: #{tpu_custom_call.1} parent=11 // pred_region
          %s442 = ssub.s32 256, 256
          %443 = vsyncadd [#allocation11], %s442
          %s444 = sshll.u32 [#allocation10], 4
          %s445 = int_to_ptr.vmem [resolvable:$true] %s444
          %450 = dma.hbm_to_vmem [thread:$0]  %s1, 256, %s445, [#allocation11], 64, 64, 4
        $region16: #{tpu_custom_call.1} parent=11 // pred_fallthru
          _
        // Predicated region
        $region17: #{tpu_custom_call.1} parent=11 // pred_check
          %p451 = pneg %p120
        $region18: #{tpu_custom_call.1} parent=11 // pred_check_branch
          %453 = sbr.rel (%p451) target = $region20
        $region19: #{tpu_custom_call.1} parent=11 // pred_region
          %s455 = ssub.s32 16, 16
          %456 = vsyncadd [#allocation11], %s455
          %s458 = sshll.u32 [#allocation12], 4
          %s459 = int_to_ptr.vmem [resolvable:$true] %s458
          %461 = dma.hbm_to_vmem [thread:$0]  %s2, 16, %s459, [#allocation11]
        $region20: #{tpu_custom_call.1} parent=11 // pred_fallthru
          _
        // Predicated region
        $region21: #{tpu_custom_call.1} parent=11 // pred_check
          %p462 = pneg %p141
        $region22: #{tpu_custom_call.1} parent=11 // pred_check_branch
          %464 = sbr.rel (%p462) target = $region24
        $region23: #{tpu_custom_call.1} parent=11 // pred_region
          %s466 = ssub.s32 16, 16
          %467 = vsyncadd [#allocation14], %s466
          %s469 = sshll.u32 [#allocation13], 4
          %s470 = int_to_ptr.vmem [resolvable:$true] %s469
          %472 = dma.hbm_to_vmem [thread:$0]  %s3, 16, %s470, [#allocation14]
        $region24: #{tpu_custom_call.1} parent=11 // pred_fallthru
          _
        // Predicated region
        $region25: #{tpu_custom_call.1} parent=11 // pred_check
          %p473 = pneg %p162
        $region26: #{tpu_custom_call.1} parent=11 // pred_check_branch
          %475 = sbr.rel (%p473) target = $region28
        $region27: #{tpu_custom_call.1} parent=11 // pred_region
          %s477 = ssub.s32 1024, 1024
          %478 = vsyncadd [#allocation14], %s477
          %s479 = sshll.u32 [#allocation15], 4
          %s480 = int_to_ptr.vmem [resolvable:$true] %s479
          %485 = dma.hbm_to_vmem [thread:$0]  %s4, 1024, %s480, [#allocation14], 64, 64, 4
        $region28: #{tpu_custom_call.1} parent=11 // pred_fallthru
          _
        // Predicated region
        $region29: #{tpu_custom_call.1} parent=11 // pred_check
          %p486 = pneg %p183
        $region30: #{tpu_custom_call.1} parent=11 // pred_check_branch
          %488 = sbr.rel (%p486) target = $region32
        $region31: #{tpu_custom_call.1} parent=11 // pred_region
          %s490 = ssub.s32 16, 16
          %491 = vsyncadd [#allocation17], %s490
          %s493 = sshll.u32 [#allocation16], 4
          %s494 = int_to_ptr.vmem [resolvable:$true] %s493
          %496 = dma.hbm_to_vmem [thread:$0]  %s5, 16, %s494, [#allocation17]
        $region32: #{tpu_custom_call.1} parent=11 // pred_fallthru
          _
        // Predicated region
        $region33: #{tpu_custom_call.1} parent=11 // pred_check
          %p497 = pneg %p204
        $region34: #{tpu_custom_call.1} parent=11 // pred_check_branch
          %499 = sbr.rel (%p497) target = $region36
        $region35: #{tpu_custom_call.1} parent=11 // pred_region
          %s501 = ssub.s32 16, 16
          %502 = vsyncadd [#allocation17], %s501
          %s504 = sshll.u32 [#allocation18], 4
          %s505 = int_to_ptr.vmem [resolvable:$true] %s504
          %507 = dma.hbm_to_vmem [thread:$0]  %s6, 16, %s505, [#allocation17]
        $region36: #{tpu_custom_call.1} parent=11 // pred_fallthru
          _
        // Predicated region
        $region37: #{tpu_custom_call.1} parent=11 // pred_check
          %p508 = pneg %p225
        $region38: #{tpu_custom_call.1} parent=11 // pred_check_branch
          %510 = sbr.rel (%p508) target = $region40
        $region39: #{tpu_custom_call.1} parent=11 // pred_region
          %s512 = ssub.s32 1024, 1024
          %513 = vsyncadd [#allocation20], %s512
          %s514 = sshll.u32 [#allocation19], 4
          %s515 = int_to_ptr.vmem [resolvable:$true] %s514
          %520 = dma.hbm_to_vmem [thread:$0]  %s7, 1024, %s515, [#allocation20], 64, 64, 4
        $region40: #{tpu_custom_call.1} parent=11 // pred_fallthru
          _
        // Predicated region
        $region41: #{tpu_custom_call.1} parent=11 // pred_check
          %p521 = pneg %p246
        $region42: #{tpu_custom_call.1} parent=11 // pred_check_branch
          %523 = sbr.rel (%p521) target = $region44
        $region43: #{tpu_custom_call.1} parent=11 // pred_region
          %s525 = ssub.s32 16, 16
          %526 = vsyncadd [#allocation20], %s525
          %s528 = sshll.u32 [#allocation21], 4
          %s529 = int_to_ptr.vmem [resolvable:$true] %s528
          %531 = dma.hbm_to_vmem [thread:$0]  %s8, 16, %s529, [#allocation20]
        $region44: #{tpu_custom_call.1} parent=11 // pred_fallthru
          _
        // Predicated region
        $region45: #{tpu_custom_call.1} parent=11 // pred_check
          %p532 = pneg %p267
        $region46: #{tpu_custom_call.1} parent=11 // pred_check_branch
          %534 = sbr.rel (%p532) target = $region48
        $region47: #{tpu_custom_call.1} parent=11 // pred_region
          %s536 = ssub.s32 16, 16
          %537 = vsyncadd [#allocation23], %s536
          %s539 = sshll.u32 [#allocation22], 4
          %s540 = int_to_ptr.vmem [resolvable:$true] %s539
          %542 = dma.hbm_to_vmem [thread:$0]  %s9, 16, %s540, [#allocation23]
        $region48: #{tpu_custom_call.1} parent=11 // pred_fallthru
          _
        // Predicated region
        $region49: #{tpu_custom_call.1} parent=11 // pred_check
          %p543 = pneg %p288
        $region50: #{tpu_custom_call.1} parent=11 // pred_check_branch
          %545 = sbr.rel (%p543) target = $region52
        $region51: #{tpu_custom_call.1} parent=11 // pred_region
          %s547 = ssub.s32 16, 16
          %548 = vsyncadd [#allocation23], %s547
          %s550 = sshll.u32 [#allocation24], 4
          %s551 = int_to_ptr.vmem [resolvable:$true] %s550
          %553 = dma.hbm_to_vmem [thread:$0]  %s10, 16, %s551, [#allocation23]
        $region52: #{tpu_custom_call.1} parent=11 // pred_fallthru
          _
        // Predicated region
        $region53: #{tpu_custom_call.1} parent=11 // pred_check
          %p554 = pneg %p309
        $region54: #{tpu_custom_call.1} parent=11 // pred_check_branch
          %556 = sbr.rel (%p554) target = $region56
        $region55: #{tpu_custom_call.1} parent=11 // pred_region
          %s558 = ssub.s32 1024, 1024
          %559 = vsyncadd [#allocation26], %s558
          %s560 = sshll.u32 [#allocation25], 4
          %s561 = int_to_ptr.vmem [resolvable:$true] %s560
          %566 = dma.hbm_to_vmem [thread:$0]  %s11, 1024, %s561, [#allocation26], 64, 64, 4
        $region56: #{tpu_custom_call.1} parent=11 // pred_fallthru
          _
        // Predicated region
        $region57: #{tpu_custom_call.1} parent=11 // pred_check
          %p567 = pneg %p330
        $region58: #{tpu_custom_call.1} parent=11 // pred_check_branch
          %569 = sbr.rel (%p567) target = $region60
        $region59: #{tpu_custom_call.1} parent=11 // pred_region
          %s571 = ssub.s32 16, 16
          %572 = vsyncadd [#allocation26], %s571
          %s574 = sshll.u32 [#allocation27], 4
          %s575 = int_to_ptr.vmem [resolvable:$true] %s574
          %577 = dma.hbm_to_vmem [thread:$0]  %s12, 16, %s575, [#allocation26]
        $region60: #{tpu_custom_call.1} parent=11 // pred_fallthru
          _
        // Predicated region
        $region61: #{tpu_custom_call.1} parent=11 // pred_check
          %p578 = pneg %p351
        $region62: #{tpu_custom_call.1} parent=11 // pred_check_branch
          %580 = sbr.rel (%p578) target = $region64
        $region63: #{tpu_custom_call.1} parent=11 // pred_region
          %s582 = ssub.s32 16, 16
          %583 = vsyncadd [#allocation29], %s582
          %s585 = sshll.u32 [#allocation28], 4
          %s586 = int_to_ptr.vmem [resolvable:$true] %s585
          %588 = dma.hbm_to_vmem [thread:$0]  %s13, 16, %s586, [#allocation29]
        $region64: #{tpu_custom_call.1} parent=11 // pred_fallthru
          _
        // Predicated region
        $region65: #{tpu_custom_call.1} parent=11 // pred_check
          %p589 = pneg %p372
        $region66: #{tpu_custom_call.1} parent=11 // pred_check_branch
          %591 = sbr.rel (%p589) target = $region68
        $region67: #{tpu_custom_call.1} parent=11 // pred_region
          %s593 = ssub.s32 1024, 1024
          %594 = vsyncadd [#allocation29], %s593
          %s595 = sshll.u32 [#allocation30], 4
          %s596 = int_to_ptr.vmem [resolvable:$true] %s595
          %601 = dma.hbm_to_vmem [thread:$0]  %s14, 1024, %s596, [#allocation29], 64, 64, 4
        $region68: #{tpu_custom_call.1} parent=11 // pred_fallthru
          _
        // Predicated region
        $region69: #{tpu_custom_call.1} parent=11 // pred_check
          %p602 = pneg %p393
        $region70: #{tpu_custom_call.1} parent=11 // pred_check_branch
          %604 = sbr.rel (%p602) target = $region72
        $region71: #{tpu_custom_call.1} parent=11 // pred_region
          %s606 = ssub.s32 16, 16
          %607 = vsyncadd [#allocation32], %s606
          %s609 = sshll.u32 [#allocation31], 4
          %s610 = int_to_ptr.vmem [resolvable:$true] %s609
          %612 = dma.hbm_to_vmem [thread:$0]  %s15, 16, %s610, [#allocation32]
        $region72: #{tpu_custom_call.1} parent=11 // pred_fallthru
          _
      $region12: #{tpu_custom_call.1} parent=5 // pred_fallthru
        _
      %p613 = scmp.lt.s32.totalorder %s36, 5
      // Predicated region
      $region73: #{tpu_custom_call.1} parent=5 // pred_check
        %p614 = pneg %p613
      $region74: #{tpu_custom_call.1} parent=5 // pred_check_branch
        %616 = sbr.rel (%p614) target = $region76
      $region75: #{tpu_custom_call.1} parent=5 // pred_region
        // Predicated region
        $region77: #{tpu_custom_call.1} parent=75 // pred_check
          %p617 = pneg %p72
        $region78: #{tpu_custom_call.1} parent=75 // pred_check_branch
          %619 = sbr.rel (%p617) target = $region80
        $region79: #{tpu_custom_call.1} parent=75 // pred_region
          %s620 = sand.u32 %s62, 1
          %s621 = scalar_lea.sflag [#allocation8], %s620
          %s622 = sand.u32 %s62, 1
          %s623 = smul.addr %s622, 4
          %s624 = scalar_lea.vmem [#allocation7], %s623
          %p625 = scmp.eq.s32.totalorder %s43, 0
          %s626 = scalar_select %p625, %s44, 0
          %s628 = ssub.s32 64, 64
          %629 = vsyncadd %s621, %s628
          %s630 = smul.addr %s626, 64
          %s631 = scalar_lea.hbm %s0, %s630
          %s633 = sshll.u32 %s624, 4
          %s634 = int_to_ptr.vmem [resolvable:$true] %s633
          %636 = dma.hbm_to_vmem [thread:$0]  %s631, 64, %s634, %s621
        $region80: #{tpu_custom_call.1} parent=75 // pred_fallthru
          _
      $region76: #{tpu_custom_call.1} parent=5 // pred_fallthru
        _
      %p637 = scmp.le.s32.totalorder 1, %s36
      %p638 = scmp.lt.s32.totalorder %s36, 6
      %p639 = pnand %p637, %p638
      %p640 = pneg %p639
      // Predicated region
      $region81: #{tpu_custom_call.1} parent=5 // pred_check
        _
      $region82: #{tpu_custom_call.1} parent=5 // pred_check_branch
        %642 = sbr.rel (%p639) target = $region84
      $region83: #{tpu_custom_call.1} parent=5 // pred_region
        %s643 = ssub.s32 %s36, 1
        %s644 = sand.u32 %s65, 1
        %s645 = scalar_lea.sflag [#allocation8], %s644
        %s646 = sand.u32 %s65, 1
        %s647 = smul.addr %s646, 4
        %s648 = scalar_lea.vmem [#allocation7], %s647
        // Predicated region
        $region85: #{tpu_custom_call.1} parent=83 // pred_check
          %p649 = pneg %p78
        $region86: #{tpu_custom_call.1} parent=83 // pred_check_branch
          %651 = sbr.rel (%p649) target = $region88
        $region87: #{tpu_custom_call.1} parent=83 // pred_region
          %652 = dma.done %s645, 64
        $region88: #{tpu_custom_call.1} parent=83 // pred_fallthru
          _
        // Predicated region
        $region89: #{tpu_custom_call.1} parent=83 // pred_check
          %p653 = pneg %p99
        $region90: #{tpu_custom_call.1} parent=83 // pred_check_branch
          %655 = sbr.rel (%p653) target = $region92
        $region91: #{tpu_custom_call.1} parent=83 // pred_region
          %656 = dma.done [#allocation11], 256
        $region92: #{tpu_custom_call.1} parent=83 // pred_fallthru
          _
        // Predicated region
        $region93: #{tpu_custom_call.1} parent=83 // pred_check
          %p657 = pneg %p120
        $region94: #{tpu_custom_call.1} parent=83 // pred_check_branch
          %659 = sbr.rel (%p657) target = $region96
        $region95: #{tpu_custom_call.1} parent=83 // pred_region
          %660 = dma.done [#allocation11], 16
        $region96: #{tpu_custom_call.1} parent=83 // pred_fallthru
          _
        // Predicated region
        $region97: #{tpu_custom_call.1} parent=83 // pred_check
          %p661 = pneg %p141
        $region98: #{tpu_custom_call.1} parent=83 // pred_check_branch
          %663 = sbr.rel (%p661) target = $region100
        $region99: #{tpu_custom_call.1} parent=83 // pred_region
          %664 = dma.done [#allocation14], 16
        $region100: #{tpu_custom_call.1} parent=83 // pred_fallthru
          _
        // Predicated region
        $region101: #{tpu_custom_call.1} parent=83 // pred_check
          %p665 = pneg %p162
        $region102: #{tpu_custom_call.1} parent=83 // pred_check_branch
          %667 = sbr.rel (%p665) target = $region104
        $region103: #{tpu_custom_call.1} parent=83 // pred_region
          %668 = dma.done [#allocation14], 1024
        $region104: #{tpu_custom_call.1} parent=83 // pred_fallthru
          _
        // Predicated region
        $region105: #{tpu_custom_call.1} parent=83 // pred_check
          %p669 = pneg %p183
        $region106: #{tpu_custom_call.1} parent=83 // pred_check_branch
          %671 = sbr.rel (%p669) target = $region108
        $region107: #{tpu_custom_call.1} parent=83 // pred_region
          %672 = dma.done [#allocation17], 16
        $region108: #{tpu_custom_call.1} parent=83 // pred_fallthru
          _
        // Predicated region
        $region109: #{tpu_custom_call.1} parent=83 // pred_check
          %p673 = pneg %p204
        $region110: #{tpu_custom_call.1} parent=83 // pred_check_branch
          %675 = sbr.rel (%p673) target = $region112
        $region111: #{tpu_custom_call.1} parent=83 // pred_region
          %676 = dma.done [#allocation17], 16
        $region112: #{tpu_custom_call.1} parent=83 // pred_fallthru
          _
        // Predicated region
        $region113: #{tpu_custom_call.1} parent=83 // pred_check
          %p677 = pneg %p225
        $region114: #{tpu_custom_call.1} parent=83 // pred_check_branch
          %679 = sbr.rel (%p677) target = $region116
        $region115: #{tpu_custom_call.1} parent=83 // pred_region
          %680 = dma.done [#allocation20], 1024
        $region116: #{tpu_custom_call.1} parent=83 // pred_fallthru
          _
        // Predicated region
        $region117: #{tpu_custom_call.1} parent=83 // pred_check
          %p681 = pneg %p246
        $region118: #{tpu_custom_call.1} parent=83 // pred_check_branch
          %683 = sbr.rel (%p681) target = $region120
        $region119: #{tpu_custom_call.1} parent=83 // pred_region
          %684 = dma.done [#allocation20], 16
        $region120: #{tpu_custom_call.1} parent=83 // pred_fallthru
          _
        // Predicated region
        $region121: #{tpu_custom_call.1} parent=83 // pred_check
          %p685 = pneg %p267
        $region122: #{tpu_custom_call.1} parent=83 // pred_check_branch
          %687 = sbr.rel (%p685) target = $region124
        $region123: #{tpu_custom_call.1} parent=83 // pred_region
          %688 = dma.done [#allocation23], 16
        $region124: #{tpu_custom_call.1} parent=83 // pred_fallthru
          _
        // Predicated region
        $region125: #{tpu_custom_call.1} parent=83 // pred_check
          %p689 = pneg %p288
        $region126: #{tpu_custom_call.1} parent=83 // pred_check_branch
          %691 = sbr.rel (%p689) target = $region128
        $region127: #{tpu_custom_call.1} parent=83 // pred_region
          %692 = dma.done [#allocation23], 16
        $region128: #{tpu_custom_call.1} parent=83 // pred_fallthru
          _
        // Predicated region
        $region129: #{tpu_custom_call.1} parent=83 // pred_check
          %p693 = pneg %p309
        $region130: #{tpu_custom_call.1} parent=83 // pred_check_branch
          %695 = sbr.rel (%p693) target = $region132
        $region131: #{tpu_custom_call.1} parent=83 // pred_region
          %696 = dma.done [#allocation26], 1024
        $region132: #{tpu_custom_call.1} parent=83 // pred_fallthru
          _
        // Predicated region
        $region133: #{tpu_custom_call.1} parent=83 // pred_check
          %p697 = pneg %p330
        $region134: #{tpu_custom_call.1} parent=83 // pred_check_branch
          %699 = sbr.rel (%p697) target = $region136
        $region135: #{tpu_custom_call.1} parent=83 // pred_region
          %700 = dma.done [#allocation26], 16
        $region136: #{tpu_custom_call.1} parent=83 // pred_fallthru
          _
        // Predicated region
        $region137: #{tpu_custom_call.1} parent=83 // pred_check
          %p701 = pneg %p351
        $region138: #{tpu_custom_call.1} parent=83 // pred_check_branch
          %703 = sbr.rel (%p701) target = $region140
        $region139: #{tpu_custom_call.1} parent=83 // pred_region
          %704 = dma.done [#allocation29], 16
        $region140: #{tpu_custom_call.1} parent=83 // pred_fallthru
          _
        // Predicated region
        $region141: #{tpu_custom_call.1} parent=83 // pred_check
          %p705 = pneg %p372
        $region142: #{tpu_custom_call.1} parent=83 // pred_check_branch
          %707 = sbr.rel (%p705) target = $region144
        $region143: #{tpu_custom_call.1} parent=83 // pred_region
          %708 = dma.done [#allocation29], 1024
        $region144: #{tpu_custom_call.1} parent=83 // pred_fallthru
          _
        // Predicated region
        $region145: #{tpu_custom_call.1} parent=83 // pred_check
          %p709 = pneg %p393
        $region146: #{tpu_custom_call.1} parent=83 // pred_check_branch
          %711 = sbr.rel (%p709) target = $region148
        $region147: #{tpu_custom_call.1} parent=83 // pred_region
          %712 = dma.done [#allocation32], 16
        $region148: #{tpu_custom_call.1} parent=83 // pred_fallthru
          _
        %s713 = sand.u32 %s65, 1
        %s714 = scalar_lea.sflag [#allocation8], %s713
        %s715 = sand.u32 %s65, 1
        %s716 = smul.addr %s715, 4
        %s717 = scalar_lea.vmem [#allocation7], %s716
        %p718 = pneg %p78
        %p719 = pneg %p75
        %p720 = pneg %p99
        %p721 = pneg %p96
        %p722 = pneg %p120
        %p723 = pneg %p117
        %p724 = pneg %p141
        %p725 = pneg %p138
        %p726 = pneg %p162
        %p727 = pneg %p159
        %p728 = pneg %p183
        %p729 = pneg %p180
        %p730 = pneg %p204
        %p731 = pneg %p201
        %p732 = pneg %p225
        %p733 = pneg %p222
        %p734 = pneg %p246
        %p735 = pneg %p243
        %p736 = pneg %p267
        %p737 = pneg %p264
        %p738 = pneg %p288
        %p739 = pneg %p285
        %p740 = pneg %p309
        %p741 = pneg %p306
        %p742 = pneg %p330
        %p743 = pneg %p327
        %p744 = pneg %p351
        %p745 = pneg %p348
        %p746 = pneg %p372
        %p747 = pneg %p369
        %p748 = pneg %p393
        %p749 = pneg %p390
        %p750 = pneg %p423
        %p751 = pneg %p420
        %s752 = sand.u32 %s410, 1
        %s753 = scalar_lea.sflag [#allocation9], %s752
        %s754 = sand.u32 %s410, 1
        %s755 = smul.addr %s754, 8
        %s756 = scalar_lea.vmem [#allocation33], %s755
        %p757 = scmp.eq.s32.totalorder %s45, 0
        %s758 = scalar_select %p757, %s46, 0
        %p759 = scmp.eq.s32.totalorder %s45, 4
        %s760 = scalar_select %p759, %s46, 0
        %p762 = scmp.eq.s32.totalorder %s46, 0
        %p763 = scmp.eq.s32.totalorder %s45, 0
        // Predicated region
        $region149: #{tpu_custom_call.1} parent=83 // pred_check
          %p764 = pneg %p763
        $region150: #{tpu_custom_call.1} parent=83 // pred_check_branch
          %766 = sbr.rel (%p764) target = $region152
        $region151: #{tpu_custom_call.1} parent=83 // pred_region
          // Predicated region
          $region153: #{tpu_custom_call.1} parent=151 // pred_check
            %p767 = pneg %p762
          $region154: #{tpu_custom_call.1} parent=151 // pred_check_branch
            %769 = sbr.rel (%p767) target = $region156
          $region155: #{tpu_custom_call.1} parent=151 // pred_region
            %vm770 = vcmask 261120
            %771 = vst.msk [vmem:[%s756] sm:$0xff] %vm770, 0.0
          $region156: #{tpu_custom_call.1} parent=151 // pred_fallthru
            _
          %v772 = vld [vmem:[%s648] sm:$0xf]
          %v773 = vld [vmem:[#allocation10] sm:$0xf]
          %v774 = vld [vmem:[#allocation10 + $0x4] sm:$0xf]
          %v775 = vld [vmem:[#allocation10 + $0x8] sm:$0xf]
          %v776 = vld [vmem:[#allocation10 + $0xc] sm:$0xf]
          %v781 = vunpack.c.l.b16 %v773
          %v782 = vunpack.c.l.b16 %v774
          %v783 = vunpack.c.l.b16 %v775
          %v784 = vunpack.c.l.b16 %v776
          %v785 = vpack.c.b16 %v782, %v781
          %v786 = vpack.c.b16 %v784, %v783
          %vm789 = vcmask 261120
          %v791 = vsel %vm789, %v772, 0
          %793 = vmatprep.subr.bf16.mxu0 0
          %794 = vmatpush1.bf16.msra.mxu0 %v785
          %795 = vmatprep.subr.bf16.mxu0 0
          %796 = vmatpush1.bf16.msra.mxu0 %v786
          %797 = vmatprep.subr.bf16.mxu0 0
          %798 = vmatpush1.bf16.msra.mxu0 0
          %799 = vmatprep.subr.bf16.mxu0 0
          %800 = vmatpush1.bf16.msra.mxu0 0
          %801 = vmatprep.subr.bf16.mxu0 0
          %802 = vmatpush1.bf16.msra.mxu0 0
          %803 = vmatprep.subr.bf16.mxu0 0
          %804 = vmatpush1.bf16.msra.mxu0 0
          %805 = vmatprep.subr.bf16.mxu0 0
          %806 = vmatpush1.bf16.msra.mxu0 0
          %807 = vmatprep.subr.bf16.mxu0 0
          %808 = vmatpush1.bf16.msra.mxu0 0
          %809 = vmatprep.subr.bf16.mxu0 0
          %810 = vmatpush1.bf16.msra.mxu0 0
          %811 = vmatprep.subr.bf16.mxu0 0
          %812 = vmatpush1.bf16.msra.mxu0 0
          %813 = vmatprep.subr.bf16.mxu0 0
          %814 = vmatpush1.bf16.msra.mxu0 0
          %815 = vmatprep.subr.bf16.mxu0 0
          %816 = vmatpush1.bf16.msra.mxu0 0
          %817 = vmatprep.subr.bf16.mxu0 0
          %818 = vmatpush1.bf16.msra.mxu0 0
          %819 = vmatprep.subr.bf16.mxu0 0
          %820 = vmatpush1.bf16.msra.mxu0 0
          %821 = vmatprep.subr.bf16.mxu0 0
          %822 = vmatpush1.bf16.msra.mxu0 0
          %823 = vmatprep.subr.bf16.mxu0 0
          %824 = vmatpush1.bf16.msra.mxu0 0
          %825 = vmatprep.mubr.bf16.mxu0 0
          %826 = vmatmul.mubr.bf16.gmra.mrb[0].mxu0 %v791
          %v827 = vpop.f32.mrb[0].mxu0
          %v828 = vadd.f32 0.0, %v827
          %v829 = vpop.f32.mrb[0].mxu0
          %v830 = vpop.f32.mrb[0].mxu0
          %v831 = vpop.f32.mrb[0].mxu0
          %832 = vdwg.mxu0
          // Predicated region
          $region157: #{tpu_custom_call.1} parent=151 // pred_check
            %p833 = pneg %p762
          $region158: #{tpu_custom_call.1} parent=151 // pred_check_branch
            %835 = sbr.rel (%p833) target = $region160
          $region159: #{tpu_custom_call.1} parent=151 // pred_region
            %836 = vst [vmem:[#allocation3] sm:$0x3] 0.0
          $region160: #{tpu_custom_call.1} parent=151 // pred_fallthru
            _
          %vm837 = vcmask 64512
          %v839 = vsel %vm837, 1.0, 0
          %841 = vmatprep.subr.mxu0 0.0
          %v842 = vand.u32 %v828, 4294901760
          %843 = vmatpush1.msra.mxu0 %v842
          %844 = vmatprep.subr.mxu0 0.0
          %845 = vmatpush1.msra.mxu0 0.0
          %846 = vmatprep.subr.mxu0 0.0
          %847 = vmatpush1.msra.mxu0 0.0
          %848 = vmatprep.subr.mxu0 0.0
          %849 = vmatpush1.msra.mxu0 0.0
          %850 = vmatprep.subr.mxu0 0.0
          %851 = vmatpush1.msra.mxu0 0.0
          %852 = vmatprep.subr.mxu0 0.0
          %853 = vmatpush1.msra.mxu0 0.0
          %854 = vmatprep.subr.mxu0 0.0
          %855 = vmatpush1.msra.mxu0 0.0
          %856 = vmatprep.subr.mxu0 0.0
          %857 = vmatpush1.msra.mxu0 0.0
          %858 = vmatprep.subr.mxu0 0.0
          %859 = vmatpush1.msra.mxu0 0.0
          %860 = vmatprep.subr.mxu0 0.0
          %861 = vmatpush1.msra.mxu0 0.0
          %862 = vmatprep.subr.mxu0 0.0
          %863 = vmatpush1.msra.mxu0 0.0
          %864 = vmatprep.subr.mxu0 0.0
          %865 = vmatpush1.msra.mxu0 0.0
          %866 = vmatprep.subr.mxu0 0.0
          %867 = vmatpush1.msra.mxu0 0.0
          %868 = vmatprep.subr.mxu0 0.0
          %869 = vmatpush1.msra.mxu0 0.0
          %870 = vmatprep.subr.mxu0 0.0
          %871 = vmatpush1.msra.mxu0 0.0
          %872 = vmatprep.subr.mxu0 0.0
          %873 = vmatpush1.msra.mxu0 0.0
          %874 = vmatprep.subr.mxu0 0.0
          %875 = vmatpush1.msra.mxu0 0.0
          %876 = vmatprep.subr.mxu0 0.0
          %877 = vmatpush1.msra.mxu0 0.0
          %878 = vmatprep.subr.mxu0 0.0
          %879 = vmatpush1.msra.mxu0 0.0
          %880 = vmatprep.subr.mxu0 0.0
          %881 = vmatpush1.msra.mxu0 0.0
          %882 = vmatprep.subr.mxu0 0.0
          %883 = vmatpush1.msra.mxu0 0.0
          %884 = vmatprep.subr.mxu0 0.0
          %885 = vmatpush1.msra.mxu0 0.0
          %886 = vmatprep.subr.mxu0 0.0
          %887 = vmatpush1.msra.mxu0 0.0
          %888 = vmatprep.subr.mxu0 0.0
          %889 = vmatpush1.msra.mxu0 0.0
          %890 = vmatprep.subr.mxu0 0.0
          %891 = vmatpush1.msra.mxu0 0.0
          %892 = vmatprep.subr.mxu0 0.0
          %893 = vmatpush1.msra.mxu0 0.0
          %894 = vmatprep.subr.mxu0 0.0
          %895 = vmatpush1.msra.mxu0 0.0
          %896 = vmatprep.subr.mxu0 0.0
          %897 = vmatpush1.msra.mxu0 0.0
          %898 = vmatprep.subr.mxu0 0.0
          %899 = vmatpush1.msra.mxu0 0.0
          %900 = vmatprep.subr.mxu0 0.0
          %901 = vmatpush1.msra.mxu0 0.0
          %902 = vmatprep.subr.mxu0 0.0
          %903 = vmatpush1.msra.mxu0 0.0
          %904 = vmatprep.subr.mxu0 0.0
          %905 = vmatpush1.msra.mxu0 0.0
          %906 = vmatprep.mubr.f32.mxu0 0.0
          %v907 = vand.u32 %v839, 4294901760
          %v908 = vsub.f32 %v839, %v907
          %v909 = vand.u32 %v908, 4294901760
          %v910 = vsub.f32 %v908, %v909
          %v911 = vand.u32 %v910, 4294901760
          %912 = vmatmul.mubr.f32.gmra.mrb[0].mxu0 %v911
          %v913 = vpop.f32.mrb[0].mxu0
          %v914 = vadd.f32 0.0, %v913
          %v915 = vpop.f32.mrb[0].mxu0
          %916 = vdwg.mxu0
          %917 = vmatprep.subr.mxu0 0.0
          %v918 = vand.u32 %v828, 4294901760
          %v919 = vsub.f32 %v828, %v918
          %v920 = vand.u32 %v919, 4294901760
          %v921 = vsub.f32 %v919, %v920
          %v922 = vand.u32 %v921, 4294901760
          %923 = vmatpush1.msra.mxu0 %v922
          %924 = vmatprep.subr.mxu0 0.0
          %925 = vmatpush1.msra.mxu0 0.0
          %926 = vmatprep.subr.mxu0 0.0
          %927 = vmatpush1.msra.mxu0 0.0
          %928 = vmatprep.subr.mxu0 0.0
          %929 = vmatpush1.msra.mxu0 0.0
          %930 = vmatprep.subr.mxu0 0.0
          %931 = vmatpush1.msra.mxu0 0.0
          %932 = vmatprep.subr.mxu0 0.0
          %933 = vmatpush1.msra.mxu0 0.0
          %934 = vmatprep.subr.mxu0 0.0
          %935 = vmatpush1.msra.mxu0 0.0
          %936 = vmatprep.subr.mxu0 0.0
          %937 = vmatpush1.msra.mxu0 0.0
          %938 = vmatprep.subr.mxu0 0.0
          %939 = vmatpush1.msra.mxu0 0.0
          %940 = vmatprep.subr.mxu0 0.0
          %941 = vmatpush1.msra.mxu0 0.0
          %942 = vmatprep.subr.mxu0 0.0
          %943 = vmatpush1.msra.mxu0 0.0
          %944 = vmatprep.subr.mxu0 0.0
          %945 = vmatpush1.msra.mxu0 0.0
          %946 = vmatprep.subr.mxu0 0.0
          %947 = vmatpush1.msra.mxu0 0.0
          %948 = vmatprep.subr.mxu0 0.0
          %949 = vmatpush1.msra.mxu0 0.0
          %950 = vmatprep.subr.mxu0 0.0
          %951 = vmatpush1.msra.mxu0 0.0
          %952 = vmatprep.subr.mxu0 0.0
          %953 = vmatpush1.msra.mxu0 0.0
          %954 = vmatprep.subr.mxu0 0.0
          %955 = vmatpush1.msra.mxu0 0.0
          %956 = vmatprep.subr.mxu0 0.0
          %957 = vmatpush1.msra.mxu0 0.0
          %958 = vmatprep.subr.mxu0 0.0
          %959 = vmatpush1.msra.mxu0 0.0
          %960 = vmatprep.subr.mxu0 0.0
          %961 = vmatpush1.msra.mxu0 0.0
          %962 = vmatprep.subr.mxu0 0.0
          %963 = vmatpush1.msra.mxu0 0.0
          %964 = vmatprep.subr.mxu0 0.0
          %965 = vmatpush1.msra.mxu0 0.0
          %966 = vmatprep.subr.mxu0 0.0
          %967 = vmatpush1.msra.mxu0 0.0
          %968 = vmatprep.subr.mxu0 0.0
          %969 = vmatpush1.msra.mxu0 0.0
          %970 = vmatprep.subr.mxu0 0.0
          %971 = vmatpush1.msra.mxu0 0.0
          %972 = vmatprep.subr.mxu0 0.0
          %973 = vmatpush1.msra.mxu0 0.0
          %974 = vmatprep.subr.mxu0 0.0
          %975 = vmatpush1.msra.mxu0 0.0
          %976 = vmatprep.subr.mxu0 0.0
          %977 = vmatpush1.msra.mxu0 0.0
          %978 = vmatprep.subr.mxu0 0.0
          %979 = vmatpush1.msra.mxu0 0.0
          %980 = vmatprep.subr.mxu0 0.0
          %981 = vmatpush1.msra.mxu0 0.0
          %982 = vmatprep.subr.mxu0 0.0
          %983 = vmatpush1.msra.mxu0 0.0
          %984 = vmatprep.subr.mxu0 0.0
          %985 = vmatpush1.msra.mxu0 0.0
          %986 = vmatprep.mubr.f32.mxu0 0.0
          %v987 = vand.u32 %v839, 4294901760
          %988 = vmatmul.mubr.f32.gmra.mrb[0].mxu0 %v987
          %v989 = vpop.f32.mrb[0].mxu0
          %v990 = vadd.f32 %v914, %v989
          %v991 = vpop.f32.mrb[0].mxu0
          %992 = vdwg.mxu0
          %993 = vmatprep.subr.mxu0 0.0
          %v994 = vand.u32 %v828, 4294901760
          %v995 = vsub.f32 %v828, %v994
          %996 = vmatpush1.msra.mxu0 %v995
          %997 = vmatprep.subr.mxu0 0.0
          %998 = vmatpush1.msra.mxu0 0.0
          %999 = vmatprep.subr.mxu0 0.0
          %1000 = vmatpush1.msra.mxu0 0.0
          %1001 = vmatprep.subr.mxu0 0.0
          %1002 = vmatpush1.msra.mxu0 0.0
          %1003 = vmatprep.subr.mxu0 0.0
          %1004 = vmatpush1.msra.mxu0 0.0
          %1005 = vmatprep.subr.mxu0 0.0
          %1006 = vmatpush1.msra.mxu0 0.0
          %1007 = vmatprep.subr.mxu0 0.0
          %1008 = vmatpush1.msra.mxu0 0.0
          %1009 = vmatprep.subr.mxu0 0.0
          %1010 = vmatpush1.msra.mxu0 0.0
          %1011 = vmatprep.subr.mxu0 0.0
          %1012 = vmatpush1.msra.mxu0 0.0
          %1013 = vmatprep.subr.mxu0 0.0
          %1014 = vmatpush1.msra.mxu0 0.0
          %1015 = vmatprep.subr.mxu0 0.0
          %1016 = vmatpush1.msra.mxu0 0.0
          %1017 = vmatprep.subr.mxu0 0.0
          %1018 = vmatpush1.msra.mxu0 0.0
          %1019 = vmatprep.subr.mxu0 0.0
          %1020 = vmatpush1.msra.mxu0 0.0
          %1021 = vmatprep.subr.mxu0 0.0
          %1022 = vmatpush1.msra.mxu0 0.0
          %1023 = vmatprep.subr.mxu0 0.0
          %1024 = vmatpush1.msra.mxu0 0.0
          %1025 = vmatprep.subr.mxu0 0.0
          %1026 = vmatpush1.msra.mxu0 0.0
          %1027 = vmatprep.subr.mxu0 0.0
          %1028 = vmatpush1.msra.mxu0 0.0
          %1029 = vmatprep.subr.mxu0 0.0
          %1030 = vmatpush1.msra.mxu0 0.0
          %1031 = vmatprep.subr.mxu0 0.0
          %1032 = vmatpush1.msra.mxu0 0.0
          %1033 = vmatprep.subr.mxu0 0.0
          %1034 = vmatpush1.msra.mxu0 0.0
          %1035 = vmatprep.subr.mxu0 0.0
          %1036 = vmatpush1.msra.mxu0 0.0
          %1037 = vmatprep.subr.mxu0 0.0
          %1038 = vmatpush1.msra.mxu0 0.0
          %1039 = vmatprep.subr.mxu0 0.0
          %1040 = vmatpush1.msra.mxu0 0.0
          %1041 = vmatprep.subr.mxu0 0.0
          %1042 = vmatpush1.msra.mxu0 0.0
          %1043 = vmatprep.subr.mxu0 0.0
          %1044 = vmatpush1.msra.mxu0 0.0
          %1045 = vmatprep.subr.mxu0 0.0
          %1046 = vmatpush1.msra.mxu0 0.0
          %1047 = vmatprep.subr.mxu0 0.0
          %1048 = vmatpush1.msra.mxu0 0.0
          %1049 = vmatprep.subr.mxu0 0.0
          %1050 = vmatpush1.msra.mxu0 0.0
          %1051 = vmatprep.subr.mxu0 0.0
          %1052 = vmatpush1.msra.mxu0 0.0
          %1053 = vmatprep.subr.mxu0 0.0
          %1054 = vmatpush1.msra.mxu0 0.0
          %1055 = vmatprep.subr.mxu0 0.0
          %1056 = vmatpush1.msra.mxu0 0.0
          %1057 = vmatprep.subr.mxu0 0.0
          %1058 = vmatpush1.msra.mxu0 0.0
          %1059 = vmatprep.mubr.f32.mxu0 0.0
          %v1060 = vand.u32 %v839, 4294901760
          %v1061 = vsub.f32 %v839, %v1060
          %1062 = vmatmul.mubr.f32.gmra.mrb[0].mxu0 %v1061
          %v1063 = vpop.f32.mrb[0].mxu0
          %v1064 = vadd.f32 %v990, %v1063
          %v1065 = vpop.f32.mrb[0].mxu0
          %1066 = vdwg.mxu0
          %1067 = vmatprep.subr.mxu0 0.0
          %v1068 = vand.u32 %v828, 4294901760
          %1069 = vmatpush1.msra.mxu0 %v1068
          %1070 = vmatprep.subr.mxu0 0.0
          %1071 = vmatpush1.msra.mxu0 0.0
          %1072 = vmatprep.subr.mxu0 0.0
          %1073 = vmatpush1.msra.mxu0 0.0
          %1074 = vmatprep.subr.mxu0 0.0
          %1075 = vmatpush1.msra.mxu0 0.0
          %1076 = vmatprep.subr.mxu0 0.0
          %1077 = vmatpush1.msra.mxu0 0.0
          %1078 = vmatprep.subr.mxu0 0.0
          %1079 = vmatpush1.msra.mxu0 0.0
          %1080 = vmatprep.subr.mxu0 0.0
          %1081 = vmatpush1.msra.mxu0 0.0
          %1082 = vmatprep.subr.mxu0 0.0
          %1083 = vmatpush1.msra.mxu0 0.0
          %1084 = vmatprep.subr.mxu0 0.0
          %1085 = vmatpush1.msra.mxu0 0.0
          %1086 = vmatprep.subr.mxu0 0.0
          %1087 = vmatpush1.msra.mxu0 0.0
          %1088 = vmatprep.subr.mxu0 0.0
          %1089 = vmatpush1.msra.mxu0 0.0
          %1090 = vmatprep.subr.mxu0 0.0
          %1091 = vmatpush1.msra.mxu0 0.0
          %1092 = vmatprep.subr.mxu0 0.0
          %1093 = vmatpush1.msra.mxu0 0.0
          %1094 = vmatprep.subr.mxu0 0.0
          %1095 = vmatpush1.msra.mxu0 0.0
          %1096 = vmatprep.subr.mxu0 0.0
          %1097 = vmatpush1.msra.mxu0 0.0
          %1098 = vmatprep.subr.mxu0 0.0
          %1099 = vmatpush1.msra.mxu0 0.0
          %1100 = vmatprep.subr.mxu0 0.0
          %1101 = vmatpush1.msra.mxu0 0.0
          %1102 = vmatprep.subr.mxu0 0.0
          %1103 = vmatpush1.msra.mxu0 0.0
          %1104 = vmatprep.subr.mxu0 0.0
          %1105 = vmatpush1.msra.mxu0 0.0
          %1106 = vmatprep.subr.mxu0 0.0
          %1107 = vmatpush1.msra.mxu0 0.0
          %1108 = vmatprep.subr.mxu0 0.0
          %1109 = vmatpush1.msra.mxu0 0.0
          %1110 = vmatprep.subr.mxu0 0.0
          %1111 = vmatpush1.msra.mxu0 0.0
          %1112 = vmatprep.subr.mxu0 0.0
          %1113 = vmatpush1.msra.mxu0 0.0
          %1114 = vmatprep.subr.mxu0 0.0
          %1115 = vmatpush1.msra.mxu0 0.0
          %1116 = vmatprep.subr.mxu0 0.0
          %1117 = vmatpush1.msra.mxu0 0.0
          %1118 = vmatprep.subr.mxu0 0.0
          %1119 = vmatpush1.msra.mxu0 0.0
          %1120 = vmatprep.subr.mxu0 0.0
          %1121 = vmatpush1.msra.mxu0 0.0
          %1122 = vmatprep.subr.mxu0 0.0
          %1123 = vmatpush1.msra.mxu0 0.0
          %1124 = vmatprep.subr.mxu0 0.0
          %1125 = vmatpush1.msra.mxu0 0.0
          %1126 = vmatprep.subr.mxu0 0.0
          %1127 = vmatpush1.msra.mxu0 0.0
          %1128 = vmatprep.subr.mxu0 0.0
          %1129 = vmatpush1.msra.mxu0 0.0
          %1130 = vmatprep.subr.mxu0 0.0
          %1131 = vmatpush1.msra.mxu0 0.0
          %1132 = vmatprep.mubr.f32.mxu0 0.0
          %v1133 = vand.u32 %v839, 4294901760
          %v1134 = vsub.f32 %v839, %v1133
          %v1135 = vand.u32 %v1134, 4294901760
          %1136 = vmatmul.mubr.f32.gmra.mrb[0].mxu0 %v1135
          %v1137 = vpop.f32.mrb[0].mxu0
          %v1138 = vadd.f32 %v1064, %v1137
          %v1139 = vpop.f32.mrb[0].mxu0
          %1140 = vdwg.mxu0
          %1141 = vmatprep.subr.mxu0 0.0
          %v1142 = vand.u32 %v828, 4294901760
          %v1143 = vsub.f32 %v828, %v1142
          %v1144 = vand.u32 %v1143, 4294901760
          %1145 = vmatpush1.msra.mxu0 %v1144
          %1146 = vmatprep.subr.mxu0 0.0
          %1147 = vmatpush1.msra.mxu0 0.0
          %1148 = vmatprep.subr.mxu0 0.0
          %1149 = vmatpush1.msra.mxu0 0.0
          %1150 = vmatprep.subr.mxu0 0.0
          %1151 = vmatpush1.msra.mxu0 0.0
          %1152 = vmatprep.subr.mxu0 0.0
          %1153 = vmatpush1.msra.mxu0 0.0
          %1154 = vmatprep.subr.mxu0 0.0
          %1155 = vmatpush1.msra.mxu0 0.0
          %1156 = vmatprep.subr.mxu0 0.0
          %1157 = vmatpush1.msra.mxu0 0.0
          %1158 = vmatprep.subr.mxu0 0.0
          %1159 = vmatpush1.msra.mxu0 0.0
          %1160 = vmatprep.subr.mxu0 0.0
          %1161 = vmatpush1.msra.mxu0 0.0
          %1162 = vmatprep.subr.mxu0 0.0
          %1163 = vmatpush1.msra.mxu0 0.0
          %1164 = vmatprep.subr.mxu0 0.0
          %1165 = vmatpush1.msra.mxu0 0.0
          %1166 = vmatprep.subr.mxu0 0.0
          %1167 = vmatpush1.msra.mxu0 0.0
          %1168 = vmatprep.subr.mxu0 0.0
          %1169 = vmatpush1.msra.mxu0 0.0
          %1170 = vmatprep.subr.mxu0 0.0
          %1171 = vmatpush1.msra.mxu0 0.0
          %1172 = vmatprep.subr.mxu0 0.0
          %1173 = vmatpush1.msra.mxu0 0.0
          %1174 = vmatprep.subr.mxu0 0.0
          %1175 = vmatpush1.msra.mxu0 0.0
          %1176 = vmatprep.subr.mxu0 0.0
          %1177 = vmatpush1.msra.mxu0 0.0
          %1178 = vmatprep.subr.mxu0 0.0
          %1179 = vmatpush1.msra.mxu0 0.0
          %1180 = vmatprep.subr.mxu0 0.0
          %1181 = vmatpush1.msra.mxu0 0.0
          %1182 = vmatprep.subr.mxu0 0.0
          %1183 = vmatpush1.msra.mxu0 0.0
          %1184 = vmatprep.subr.mxu0 0.0
          %1185 = vmatpush1.msra.mxu0 0.0
          %1186 = vmatprep.subr.mxu0 0.0
          %1187 = vmatpush1.msra.mxu0 0.0
          %1188 = vmatprep.subr.mxu0 0.0
          %1189 = vmatpush1.msra.mxu0 0.0
          %1190 = vmatprep.subr.mxu0 0.0
          %1191 = vmatpush1.msra.mxu0 0.0
          %1192 = vmatprep.subr.mxu0 0.0
          %1193 = vmatpush1.msra.mxu0 0.0
          %1194 = vmatprep.subr.mxu0 0.0
          %1195 = vmatpush1.msra.mxu0 0.0
          %1196 = vmatprep.subr.mxu0 0.0
          %1197 = vmatpush1.msra.mxu0 0.0
          %1198 = vmatprep.subr.mxu0 0.0
          %1199 = vmatpush1.msra.mxu0 0.0
          %1200 = vmatprep.subr.mxu0 0.0
          %1201 = vmatpush1.msra.mxu0 0.0
          %1202 = vmatprep.subr.mxu0 0.0
          %1203 = vmatpush1.msra.mxu0 0.0
          %1204 = vmatprep.subr.mxu0 0.0
          %1205 = vmatpush1.msra.mxu0 0.0
          %1206 = vmatprep.subr.mxu0 0.0
          %1207 = vmatpush1.msra.mxu0 0.0
          %1208 = vmatprep.mubr.f32.mxu0 0.0
          %v1209 = vand.u32 %v839, 4294901760
          %1210 = vmatmul.mubr.f32.gmra.mrb[0].mxu0 %v1209
          %v1211 = vpop.f32.mrb[0].mxu0
          %v1212 = vadd.f32 %v1138, %v1211
          %v1213 = vpop.f32.mrb[0].mxu0
          %1214 = vdwg.mxu0
          %1215 = vmatprep.subr.mxu0 0.0
          %v1216 = vand.u32 %v828, 4294901760
          %1217 = vmatpush1.msra.mxu0 %v1216
          %1218 = vmatprep.subr.mxu0 0.0
          %1219 = vmatpush1.msra.mxu0 0.0
          %1220 = vmatprep.subr.mxu0 0.0
          %1221 = vmatpush1.msra.mxu0 0.0
          %1222 = vmatprep.subr.mxu0 0.0
          %1223 = vmatpush1.msra.mxu0 0.0
          %1224 = vmatprep.subr.mxu0 0.0
          %1225 = vmatpush1.msra.mxu0 0.0
          %1226 = vmatprep.subr.mxu0 0.0
          %1227 = vmatpush1.msra.mxu0 0.0
          %1228 = vmatprep.subr.mxu0 0.0
          %1229 = vmatpush1.msra.mxu0 0.0
          %1230 = vmatprep.subr.mxu0 0.0
          %1231 = vmatpush1.msra.mxu0 0.0
          %1232 = vmatprep.subr.mxu0 0.0
          %1233 = vmatpush1.msra.mxu0 0.0
          %1234 = vmatprep.subr.mxu0 0.0
          %1235 = vmatpush1.msra.mxu0 0.0
          %1236 = vmatprep.subr.mxu0 0.0
          %1237 = vmatpush1.msra.mxu0 0.0
          %1238 = vmatprep.subr.mxu0 0.0
          %1239 = vmatpush1.msra.mxu0 0.0
          %1240 = vmatprep.subr.mxu0 0.0
          %1241 = vmatpush1.msra.mxu0 0.0
          %1242 = vmatprep.subr.mxu0 0.0
          %1243 = vmatpush1.msra.mxu0 0.0
          %1244 = vmatprep.subr.mxu0 0.0
          %1245 = vmatpush1.msra.mxu0 0.0
          %1246 = vmatprep.subr.mxu0 0.0
          %1247 = vmatpush1.msra.mxu0 0.0
          %1248 = vmatprep.subr.mxu0 0.0
          %1249 = vmatpush1.msra.mxu0 0.0
          %1250 = vmatprep.subr.mxu0 0.0
          %1251 = vmatpush1.msra.mxu0 0.0
          %1252 = vmatprep.subr.mxu0 0.0
          %1253 = vmatpush1.msra.mxu0 0.0
          %1254 = vmatprep.subr.mxu0 0.0
          %1255 = vmatpush1.msra.mxu0 0.0
          %1256 = vmatprep.subr.mxu0 0.0
          %1257 = vmatpush1.msra.mxu0 0.0
          %1258 = vmatprep.subr.mxu0 0.0
          %1259 = vmatpush1.msra.mxu0 0.0
          %1260 = vmatprep.subr.mxu0 0.0
          %1261 = vmatpush1.msra.mxu0 0.0
          %1262 = vmatprep.subr.mxu0 0.0
          %1263 = vmatpush1.msra.mxu0 0.0
          %1264 = vmatprep.subr.mxu0 0.0
          %1265 = vmatpush1.msra.mxu0 0.0
          %1266 = vmatprep.subr.mxu0 0.0
          %1267 = vmatpush1.msra.mxu0 0.0
          %1268 = vmatprep.subr.mxu0 0.0
          %1269 = vmatpush1.msra.mxu0 0.0
          %1270 = vmatprep.subr.mxu0 0.0
          %1271 = vmatpush1.msra.mxu0 0.0
          %1272 = vmatprep.subr.mxu0 0.0
          %1273 = vmatpush1.msra.mxu0 0.0
          %1274 = vmatprep.subr.mxu0 0.0
          %1275 = vmatpush1.msra.mxu0 0.0
          %1276 = vmatprep.subr.mxu0 0.0
          %1277 = vmatpush1.msra.mxu0 0.0
          %1278 = vmatprep.subr.mxu0 0.0
          %1279 = vmatpush1.msra.mxu0 0.0
          %1280 = vmatprep.mubr.f32.mxu0 0.0
          %v1281 = vand.u32 %v839, 4294901760
          %1282 = vmatmul.mubr.f32.gmra.mrb[0].mxu0 %v1281
          %v1283 = vpop.f32.mrb[0].mxu0
          %v1284 = vadd.f32 %v1212, %v1283
          %v1285 = vpop.f32.mrb[0].mxu0
          %1286 = vdwg.mxu0
          %v1287 = vmul.f32 %v828, %v828
          %1288 = vmatprep.subr.mxu0 0.0
          %v1289 = vand.u32 %v1287, 4294901760
          %1290 = vmatpush1.msra.mxu0 %v1289
          %1291 = vmatprep.subr.mxu0 0.0
          %1292 = vmatpush1.msra.mxu0 0.0
          %1293 = vmatprep.subr.mxu0 0.0
          %1294 = vmatpush1.msra.mxu0 0.0
          %1295 = vmatprep.subr.mxu0 0.0
          %1296 = vmatpush1.msra.mxu0 0.0
          %1297 = vmatprep.subr.mxu0 0.0
          %1298 = vmatpush1.msra.mxu0 0.0
          %1299 = vmatprep.subr.mxu0 0.0
          %1300 = vmatpush1.msra.mxu0 0.0
          %1301 = vmatprep.subr.mxu0 0.0
          %1302 = vmatpush1.msra.mxu0 0.0
          %1303 = vmatprep.subr.mxu0 0.0
          %1304 = vmatpush1.msra.mxu0 0.0
          %1305 = vmatprep.subr.mxu0 0.0
          %1306 = vmatpush1.msra.mxu0 0.0
          %1307 = vmatprep.subr.mxu0 0.0
          %1308 = vmatpush1.msra.mxu0 0.0
          %1309 = vmatprep.subr.mxu0 0.0
          %1310 = vmatpush1.msra.mxu0 0.0
          %1311 = vmatprep.subr.mxu0 0.0
          %1312 = vmatpush1.msra.mxu0 0.0
          %1313 = vmatprep.subr.mxu0 0.0
          %1314 = vmatpush1.msra.mxu0 0.0
          %1315 = vmatprep.subr.mxu0 0.0
          %1316 = vmatpush1.msra.mxu0 0.0
          %1317 = vmatprep.subr.mxu0 0.0
          %1318 = vmatpush1.msra.mxu0 0.0
          %1319 = vmatprep.subr.mxu0 0.0
          %1320 = vmatpush1.msra.mxu0 0.0
          %1321 = vmatprep.subr.mxu0 0.0
          %1322 = vmatpush1.msra.mxu0 0.0
          %1323 = vmatprep.subr.mxu0 0.0
          %1324 = vmatpush1.msra.mxu0 0.0
          %1325 = vmatprep.subr.mxu0 0.0
          %1326 = vmatpush1.msra.mxu0 0.0
          %1327 = vmatprep.subr.mxu0 0.0
          %1328 = vmatpush1.msra.mxu0 0.0
          %1329 = vmatprep.subr.mxu0 0.0
          %1330 = vmatpush1.msra.mxu0 0.0
          %1331 = vmatprep.subr.mxu0 0.0
          %1332 = vmatpush1.msra.mxu0 0.0
          %1333 = vmatprep.subr.mxu0 0.0
          %1334 = vmatpush1.msra.mxu0 0.0
          %1335 = vmatprep.subr.mxu0 0.0
          %1336 = vmatpush1.msra.mxu0 0.0
          %1337 = vmatprep.subr.mxu0 0.0
          %1338 = vmatpush1.msra.mxu0 0.0
          %1339 = vmatprep.subr.mxu0 0.0
          %1340 = vmatpush1.msra.mxu0 0.0
          %1341 = vmatprep.subr.mxu0 0.0
          %1342 = vmatpush1.msra.mxu0 0.0
          %1343 = vmatprep.subr.mxu0 0.0
          %1344 = vmatpush1.msra.mxu0 0.0
          %1345 = vmatprep.subr.mxu0 0.0
          %1346 = vmatpush1.msra.mxu0 0.0
          %1347 = vmatprep.subr.mxu0 0.0
          %1348 = vmatpush1.msra.mxu0 0.0
          %1349 = vmatprep.subr.mxu0 0.0
          %1350 = vmatpush1.msra.mxu0 0.0
          %1351 = vmatprep.subr.mxu0 0.0
          %1352 = vmatpush1.msra.mxu0 0.0
          %1353 = vmatprep.mubr.f32.mxu0 0.0
          %v1354 = vand.u32 %v839, 4294901760
          %v1355 = vsub.f32 %v839, %v1354
          %v1356 = vand.u32 %v1355, 4294901760
          %v1357 = vsub.f32 %v1355, %v1356
          %v1358 = vand.u32 %v1357, 4294901760
          %1359 = vmatmul.mubr.f32.gmra.mrb[0].mxu0 %v1358
          %v1360 = vpop.f32.mrb[0].mxu0
          %v1361 = vadd.f32 0.0, %v1360
          %v1362 = vpop.f32.mrb[0].mxu0
          %1363 = vdwg.mxu0
          %1364 = vmatprep.subr.mxu0 0.0
          %v1365 = vand.u32 %v1287, 4294901760
          %v1366 = vsub.f32 %v1287, %v1365
          %v1367 = vand.u32 %v1366, 4294901760
          %v1368 = vsub.f32 %v1366, %v1367
          %v1369 = vand.u32 %v1368, 4294901760
          %1370 = vmatpush1.msra.mxu0 %v1369
          %1371 = vmatprep.subr.mxu0 0.0
          %1372 = vmatpush1.msra.mxu0 0.0
          %1373 = vmatprep.subr.mxu0 0.0
          %1374 = vmatpush1.msra.mxu0 0.0
          %1375 = vmatprep.subr.mxu0 0.0
          %1376 = vmatpush1.msra.mxu0 0.0
          %1377 = vmatprep.subr.mxu0 0.0
          %1378 = vmatpush1.msra.mxu0 0.0
          %1379 = vmatprep.subr.mxu0 0.0
          %1380 = vmatpush1.msra.mxu0 0.0
          %1381 = vmatprep.subr.mxu0 0.0
          %1382 = vmatpush1.msra.mxu0 0.0
          %1383 = vmatprep.subr.mxu0 0.0
          %1384 = vmatpush1.msra.mxu0 0.0
          %1385 = vmatprep.subr.mxu0 0.0
          %1386 = vmatpush1.msra.mxu0 0.0
          %1387 = vmatprep.subr.mxu0 0.0
          %1388 = vmatpush1.msra.mxu0 0.0
          %1389 = vmatprep.subr.mxu0 0.0
          %1390 = vmatpush1.msra.mxu0 0.0
          %1391 = vmatprep.subr.mxu0 0.0
          %1392 = vmatpush1.msra.mxu0 0.0
          %1393 = vmatprep.subr.mxu0 0.0
          %1394 = vmatpush1.msra.mxu0 0.0
          %1395 = vmatprep.subr.mxu0 0.0
          %1396 = vmatpush1.msra.mxu0 0.0
          %1397 = vmatprep.subr.mxu0 0.0
          %1398 = vmatpush1.msra.mxu0 0.0
          %1399 = vmatprep.subr.mxu0 0.0
          %1400 = vmatpush1.msra.mxu0 0.0
          %1401 = vmatprep.subr.mxu0 0.0
          %1402 = vmatpush1.msra.mxu0 0.0
          %1403 = vmatprep.subr.mxu0 0.0
          %1404 = vmatpush1.msra.mxu0 0.0
          %1405 = vmatprep.subr.mxu0 0.0
          %1406 = vmatpush1.msra.mxu0 0.0
          %1407 = vmatprep.subr.mxu0 0.0
          %1408 = vmatpush1.msra.mxu0 0.0
          %1409 = vmatprep.subr.mxu0 0.0
          %1410 = vmatpush1.msra.mxu0 0.0
          %1411 = vmatprep.subr.mxu0 0.0
          %1412 = vmatpush1.msra.mxu0 0.0
          %1413 = vmatprep.subr.mxu0 0.0
          %1414 = vmatpush1.msra.mxu0 0.0
          %1415 = vmatprep.subr.mxu0 0.0
          %1416 = vmatpush1.msra.mxu0 0.0
          %1417 = vmatprep.subr.mxu0 0.0
          %1418 = vmatpush1.msra.mxu0 0.0
          %1419 = vmatprep.subr.mxu0 0.0
          %1420 = vmatpush1.msra.mxu0 0.0
          %1421 = vmatprep.subr.mxu0 0.0
          %1422 = vmatpush1.msra.mxu0 0.0
          %1423 = vmatprep.subr.mxu0 0.0
          %1424 = vmatpush1.msra.mxu0 0.0
          %1425 = vmatprep.subr.mxu0 0.0
          %1426 = vmatpush1.msra.mxu0 0.0
          %1427 = vmatprep.subr.mxu0 0.0
          %1428 = vmatpush1.msra.mxu0 0.0
          %1429 = vmatprep.subr.mxu0 0.0
          %1430 = vmatpush1.msra.mxu0 0.0
          %1431 = vmatprep.subr.mxu0 0.0
          %1432 = vmatpush1.msra.mxu0 0.0
          %1433 = vmatprep.mubr.f32.mxu0 0.0
          %v1434 = vand.u32 %v839, 4294901760
          %1435 = vmatmul.mubr.f32.gmra.mrb[0].mxu0 %v1434
          %v1436 = vpop.f32.mrb[0].mxu0
          %v1437 = vadd.f32 %v1361, %v1436
          %v1438 = vpop.f32.mrb[0].mxu0
          %1439 = vdwg.mxu0
          %1440 = vmatprep.subr.mxu0 0.0
          %v1441 = vand.u32 %v1287, 4294901760
          %v1442 = vsub.f32 %v1287, %v1441
          %1443 = vmatpush1.msra.mxu0 %v1442
          %1444 = vmatprep.subr.mxu0 0.0
          %1445 = vmatpush1.msra.mxu0 0.0
          %1446 = vmatprep.subr.mxu0 0.0
          %1447 = vmatpush1.msra.mxu0 0.0
          %1448 = vmatprep.subr.mxu0 0.0
          %1449 = vmatpush1.msra.mxu0 0.0
          %1450 = vmatprep.subr.mxu0 0.0
          %1451 = vmatpush1.msra.mxu0 0.0
          %1452 = vmatprep.subr.mxu0 0.0
          %1453 = vmatpush1.msra.mxu0 0.0
          %1454 = vmatprep.subr.mxu0 0.0
          %1455 = vmatpush1.msra.mxu0 0.0
          %1456 = vmatprep.subr.mxu0 0.0
          %1457 = vmatpush1.msra.mxu0 0.0
          %1458 = vmatprep.subr.mxu0 0.0
          %1459 = vmatpush1.msra.mxu0 0.0
          %1460 = vmatprep.subr.mxu0 0.0
          %1461 = vmatpush1.msra.mxu0 0.0
          %1462 = vmatprep.subr.mxu0 0.0
          %1463 = vmatpush1.msra.mxu0 0.0
          %1464 = vmatprep.subr.mxu0 0.0
          %1465 = vmatpush1.msra.mxu0 0.0
          %1466 = vmatprep.subr.mxu0 0.0
          %1467 = vmatpush1.msra.mxu0 0.0
          %1468 = vmatprep.subr.mxu0 0.0
          %1469 = vmatpush1.msra.mxu0 0.0
          %1470 = vmatprep.subr.mxu0 0.0
          %1471 = vmatpush1.msra.mxu0 0.0
          %1472 = vmatprep.subr.mxu0 0.0
          %1473 = vmatpush1.msra.mxu0 0.0
          %1474 = vmatprep.subr.mxu0 0.0
          %1475 = vmatpush1.msra.mxu0 0.0
          %1476 = vmatprep.subr.mxu0 0.0
          %1477 = vmatpush1.msra.mxu0 0.0
          %1478 = vmatprep.subr.mxu0 0.0
          %1479 = vmatpush1.msra.mxu0 0.0
          %1480 = vmatprep.subr.mxu0 0.0
          %1481 = vmatpush1.msra.mxu0 0.0
          %1482 = vmatprep.subr.mxu0 0.0
          %1483 = vmatpush1.msra.mxu0 0.0
          %1484 = vmatprep.subr.mxu0 0.0
          %1485 = vmatpush1.msra.mxu0 0.0
          %1486 = vmatprep.subr.mxu0 0.0
          %1487 = vmatpush1.msra.mxu0 0.0
          %1488 = vmatprep.subr.mxu0 0.0
          %1489 = vmatpush1.msra.mxu0 0.0
          %1490 = vmatprep.subr.mxu0 0.0
          %1491 = vmatpush1.msra.mxu0 0.0
          %1492 = vmatprep.subr.mxu0 0.0
          %1493 = vmatpush1.msra.mxu0 0.0
          %1494 = vmatprep.subr.mxu0 0.0
          %1495 = vmatpush1.msra.mxu0 0.0
          %1496 = vmatprep.subr.mxu0 0.0
          %1497 = vmatpush1.msra.mxu0 0.0
          %1498 = vmatprep.subr.mxu0 0.0
          %1499 = vmatpush1.msra.mxu0 0.0
          %1500 = vmatprep.subr.mxu0 0.0
          %1501 = vmatpush1.msra.mxu0 0.0
          %1502 = vmatprep.subr.mxu0 0.0
          %1503 = vmatpush1.msra.mxu0 0.0
          %1504 = vmatprep.subr.mxu0 0.0
          %1505 = vmatpush1.msra.mxu0 0.0
          %1506 = vmatprep.mubr.f32.mxu0 0.0
          %v1507 = vand.u32 %v839, 4294901760
          %v1508 = vsub.f32 %v839, %v1507
          %1509 = vmatmul.mubr.f32.gmra.mrb[0].mxu0 %v1508
          %v1510 = vpop.f32.mrb[0].mxu0
          %v1511 = vadd.f32 %v1437, %v1510
          %v1512 = vpop.f32.mrb[0].mxu0
          %1513 = vdwg.mxu0
          %1514 = vmatprep.subr.mxu0 0.0
          %v1515 = vand.u32 %v1287, 4294901760
          %1516 = vmatpush1.msra.mxu0 %v1515
          %1517 = vmatprep.subr.mxu0 0.0
          %1518 = vmatpush1.msra.mxu0 0.0
          %1519 = vmatprep.subr.mxu0 0.0
          %1520 = vmatpush1.msra.mxu0 0.0
          %1521 = vmatprep.subr.mxu0 0.0
          %1522 = vmatpush1.msra.mxu0 0.0
          %1523 = vmatprep.subr.mxu0 0.0
          %1524 = vmatpush1.msra.mxu0 0.0
          %1525 = vmatprep.subr.mxu0 0.0
          %1526 = vmatpush1.msra.mxu0 0.0
          %1527 = vmatprep.subr.mxu0 0.0
          %1528 = vmatpush1.msra.mxu0 0.0
          %1529 = vmatprep.subr.mxu0 0.0
          %1530 = vmatpush1.msra.mxu0 0.0
          %1531 = vmatprep.subr.mxu0 0.0
          %1532 = vmatpush1.msra.mxu0 0.0
          %1533 = vmatprep.subr.mxu0 0.0
          %1534 = vmatpush1.msra.mxu0 0.0
          %1535 = vmatprep.subr.mxu0 0.0
          %1536 = vmatpush1.msra.mxu0 0.0
          %1537 = vmatprep.subr.mxu0 0.0
          %1538 = vmatpush1.msra.mxu0 0.0
          %1539 = vmatprep.subr.mxu0 0.0
          %1540 = vmatpush1.msra.mxu0 0.0
          %1541 = vmatprep.subr.mxu0 0.0
          %1542 = vmatpush1.msra.mxu0 0.0
          %1543 = vmatprep.subr.mxu0 0.0
          %1544 = vmatpush1.msra.mxu0 0.0
          %1545 = vmatprep.subr.mxu0 0.0
          %1546 = vmatpush1.msra.mxu0 0.0
          %1547 = vmatprep.subr.mxu0 0.0
          %1548 = vmatpush1.msra.mxu0 0.0
          %1549 = vmatprep.subr.mxu0 0.0
          %1550 = vmatpush1.msra.mxu0 0.0
          %1551 = vmatprep.subr.mxu0 0.0
          %1552 = vmatpush1.msra.mxu0 0.0
          %1553 = vmatprep.subr.mxu0 0.0
          %1554 = vmatpush1.msra.mxu0 0.0
          %1555 = vmatprep.subr.mxu0 0.0
          %1556 = vmatpush1.msra.mxu0 0.0
          %1557 = vmatprep.subr.mxu0 0.0
          %1558 = vmatpush1.msra.mxu0 0.0
          %1559 = vmatprep.subr.mxu0 0.0
          %1560 = vmatpush1.msra.mxu0 0.0
          %1561 = vmatprep.subr.mxu0 0.0
          %1562 = vmatpush1.msra.mxu0 0.0
          %1563 = vmatprep.subr.mxu0 0.0
          %1564 = vmatpush1.msra.mxu0 0.0
          %1565 = vmatprep.subr.mxu0 0.0
          %1566 = vmatpush1.msra.mxu0 0.0
          %1567 = vmatprep.subr.mxu0 0.0
          %1568 = vmatpush1.msra.mxu0 0.0
          %1569 = vmatprep.subr.mxu0 0.0
          %1570 = vmatpush1.msra.mxu0 0.0
          %1571 = vmatprep.subr.mxu0 0.0
          %1572 = vmatpush1.msra.mxu0 0.0
          %1573 = vmatprep.subr.mxu0 0.0
          %1574 = vmatpush1.msra.mxu0 0.0
          %1575 = vmatprep.subr.mxu0 0.0
          %1576 = vmatpush1.msra.mxu0 0.0
          %1577 = vmatprep.subr.mxu0 0.0
          %1578 = vmatpush1.msra.mxu0 0.0
          %1579 = vmatprep.mubr.f32.mxu0 0.0
          %v1580 = vand.u32 %v839, 4294901760
          %v1581 = vsub.f32 %v839, %v1580
          %v1582 = vand.u32 %v1581, 4294901760
          %1583 = vmatmul.mubr.f32.gmra.mrb[0].mxu0 %v1582
          %v1584 = vpop.f32.mrb[0].mxu0
          %v1585 = vadd.f32 %v1511, %v1584
          %v1586 = vpop.f32.mrb[0].mxu0
          %1587 = vdwg.mxu0
          %1588 = vmatprep.subr.mxu0 0.0
          %v1589 = vand.u32 %v1287, 4294901760
          %v1590 = vsub.f32 %v1287, %v1589
          %v1591 = vand.u32 %v1590, 4294901760
          %1592 = vmatpush1.msra.mxu0 %v1591
          %1593 = vmatprep.subr.mxu0 0.0
          %1594 = vmatpush1.msra.mxu0 0.0
          %1595 = vmatprep.subr.mxu0 0.0
          %1596 = vmatpush1.msra.mxu0 0.0
          %1597 = vmatprep.subr.mxu0 0.0
          %1598 = vmatpush1.msra.mxu0 0.0
          %1599 = vmatprep.subr.mxu0 0.0
          %1600 = vmatpush1.msra.mxu0 0.0
          %1601 = vmatprep.subr.mxu0 0.0
          %1602 = vmatpush1.msra.mxu0 0.0
          %1603 = vmatprep.subr.mxu0 0.0
          %1604 = vmatpush1.msra.mxu0 0.0
          %1605 = vmatprep.subr.mxu0 0.0
          %1606 = vmatpush1.msra.mxu0 0.0
          %1607 = vmatprep.subr.mxu0 0.0
          %1608 = vmatpush1.msra.mxu0 0.0
          %1609 = vmatprep.subr.mxu0 0.0
          %1610 = vmatpush1.msra.mxu0 0.0
          %1611 = vmatprep.subr.mxu0 0.0
          %1612 = vmatpush1.msra.mxu0 0.0
          %1613 = vmatprep.subr.mxu0 0.0
          %1614 = vmatpush1.msra.mxu0 0.0
          %1615 = vmatprep.subr.mxu0 0.0
          %1616 = vmatpush1.msra.mxu0 0.0
          %1617 = vmatprep.subr.mxu0 0.0
          %1618 = vmatpush1.msra.mxu0 0.0
          %1619 = vmatprep.subr.mxu0 0.0
          %1620 = vmatpush1.msra.mxu0 0.0
          %1621 = vmatprep.subr.mxu0 0.0
          %1622 = vmatpush1.msra.mxu0 0.0
          %1623 = vmatprep.subr.mxu0 0.0
          %1624 = vmatpush1.msra.mxu0 0.0
          %1625 = vmatprep.subr.mxu0 0.0
          %1626 = vmatpush1.msra.mxu0 0.0
          %1627 = vmatprep.subr.mxu0 0.0
          %1628 = vmatpush1.msra.mxu0 0.0
          %1629 = vmatprep.subr.mxu0 0.0
          %1630 = vmatpush1.msra.mxu0 0.0
          %1631 = vmatprep.subr.mxu0 0.0
          %1632 = vmatpush1.msra.mxu0 0.0
          %1633 = vmatprep.subr.mxu0 0.0
          %1634 = vmatpush1.msra.mxu0 0.0
          %1635 = vmatprep.subr.mxu0 0.0
          %1636 = vmatpush1.msra.mxu0 0.0
          %1637 = vmatprep.subr.mxu0 0.0
          %1638 = vmatpush1.msra.mxu0 0.0
          %1639 = vmatprep.subr.mxu0 0.0
          %1640 = vmatpush1.msra.mxu0 0.0
          %1641 = vmatprep.subr.mxu0 0.0
          %1642 = vmatpush1.msra.mxu0 0.0
          %1643 = vmatprep.subr.mxu0 0.0
          %1644 = vmatpush1.msra.mxu0 0.0
          %1645 = vmatprep.subr.mxu0 0.0
          %1646 = vmatpush1.msra.mxu0 0.0
          %1647 = vmatprep.subr.mxu0 0.0
          %1648 = vmatpush1.msra.mxu0 0.0
          %1649 = vmatprep.subr.mxu0 0.0
          %1650 = vmatpush1.msra.mxu0 0.0
          %1651 = vmatprep.subr.mxu0 0.0
          %1652 = vmatpush1.msra.mxu0 0.0
          %1653 = vmatprep.subr.mxu0 0.0
          %1654 = vmatpush1.msra.mxu0 0.0
          %1655 = vmatprep.mubr.f32.mxu0 0.0
          %v1656 = vand.u32 %v839, 4294901760
          %1657 = vmatmul.mubr.f32.gmra.mrb[0].mxu0 %v1656
          %v1658 = vpop.f32.mrb[0].mxu0
          %v1659 = vadd.f32 %v1585, %v1658
          %v1660 = vpop.f32.mrb[0].mxu0
          %1661 = vdwg.mxu0
          %1662 = vmatprep.subr.mxu0 0.0
          %v1663 = vand.u32 %v1287, 4294901760
          %1664 = vmatpush1.msra.mxu0 %v1663
          %1665 = vmatprep.subr.mxu0 0.0
          %1666 = vmatpush1.msra.mxu0 0.0
          %1667 = vmatprep.subr.mxu0 0.0
          %1668 = vmatpush1.msra.mxu0 0.0
          %1669 = vmatprep.subr.mxu0 0.0
          %1670 = vmatpush1.msra.mxu0 0.0
          %1671 = vmatprep.subr.mxu0 0.0
          %1672 = vmatpush1.msra.mxu0 0.0
          %1673 = vmatprep.subr.mxu0 0.0
          %1674 = vmatpush1.msra.mxu0 0.0
          %1675 = vmatprep.subr.mxu0 0.0
          %1676 = vmatpush1.msra.mxu0 0.0
          %1677 = vmatprep.subr.mxu0 0.0
          %1678 = vmatpush1.msra.mxu0 0.0
          %1679 = vmatprep.subr.mxu0 0.0
          %1680 = vmatpush1.msra.mxu0 0.0
          %1681 = vmatprep.subr.mxu0 0.0
          %1682 = vmatpush1.msra.mxu0 0.0
          %1683 = vmatprep.subr.mxu0 0.0
          %1684 = vmatpush1.msra.mxu0 0.0
          %1685 = vmatprep.subr.mxu0 0.0
          %1686 = vmatpush1.msra.mxu0 0.0
          %1687 = vmatprep.subr.mxu0 0.0
          %1688 = vmatpush1.msra.mxu0 0.0
          %1689 = vmatprep.subr.mxu0 0.0
          %1690 = vmatpush1.msra.mxu0 0.0
          %1691 = vmatprep.subr.mxu0 0.0
          %1692 = vmatpush1.msra.mxu0 0.0
          %1693 = vmatprep.subr.mxu0 0.0
          %1694 = vmatpush1.msra.mxu0 0.0
          %1695 = vmatprep.subr.mxu0 0.0
          %1696 = vmatpush1.msra.mxu0 0.0
          %1697 = vmatprep.subr.mxu0 0.0
          %1698 = vmatpush1.msra.mxu0 0.0
          %1699 = vmatprep.subr.mxu0 0.0
          %1700 = vmatpush1.msra.mxu0 0.0
          %1701 = vmatprep.subr.mxu0 0.0
          %1702 = vmatpush1.msra.mxu0 0.0
          %1703 = vmatprep.subr.mxu0 0.0
          %1704 = vmatpush1.msra.mxu0 0.0
          %1705 = vmatprep.subr.mxu0 0.0
          %1706 = vmatpush1.msra.mxu0 0.0
          %1707 = vmatprep.subr.mxu0 0.0
          %1708 = vmatpush1.msra.mxu0 0.0
          %1709 = vmatprep.subr.mxu0 0.0
          %1710 = vmatpush1.msra.mxu0 0.0
          %1711 = vmatprep.subr.mxu0 0.0
          %1712 = vmatpush1.msra.mxu0 0.0
          %1713 = vmatprep.subr.mxu0 0.0
          %1714 = vmatpush1.msra.mxu0 0.0
          %1715 = vmatprep.subr.mxu0 0.0
          %1716 = vmatpush1.msra.mxu0 0.0
          %1717 = vmatprep.subr.mxu0 0.0
          %1718 = vmatpush1.msra.mxu0 0.0
          %1719 = vmatprep.subr.mxu0 0.0
          %1720 = vmatpush1.msra.mxu0 0.0
          %1721 = vmatprep.subr.mxu0 0.0
          %1722 = vmatpush1.msra.mxu0 0.0
          %1723 = vmatprep.subr.mxu0 0.0
          %1724 = vmatpush1.msra.mxu0 0.0
          %1725 = vmatprep.subr.mxu0 0.0
          %1726 = vmatpush1.msra.mxu0 0.0
          %1727 = vmatprep.mubr.f32.mxu0 0.0
          %v1728 = vand.u32 %v839, 4294901760
          %1729 = vmatmul.mubr.f32.gmra.mrb[0].mxu0 %v1728
          %v1730 = vpop.f32.mrb[0].mxu0
          %v1731 = vadd.f32 %v1659, %v1730
          %v1732 = vpop.f32.mrb[0].mxu0
          %1733 = vdwg.mxu0
          %v1734 = vld [vmem:[#allocation3] sm:$0x3]
          %v1736 = vrot.slane %v1731, 7
          %vm1738 = vcmask 1040384
          %v1739 = vsel %vm1738, %v1284, %v1736
          %v1740 = vadd.f32 %v1734, %v1739
          %1741 = vst [vmem:[#allocation3] sm:$0x3] %v1740
          %s1742 = smul.u32 %s46, 8
          %s1743 = scalar_lea.vmem [#allocation2], %s1742
          %1744 = vst [vmem:[%s1743] sm:$0xff] %v828
        $region152: #{tpu_custom_call.1} parent=83 // pred_fallthru
          _
        %p1745 = scmp.eq.s32.totalorder %s45, 1
        // Predicated region
        $region161: #{tpu_custom_call.1} parent=83 // pred_check
          %p1746 = pneg %p1745
        $region162: #{tpu_custom_call.1} parent=83 // pred_check_branch
          %1748 = sbr.rel (%p1746) target = $region164
        $region163: #{tpu_custom_call.1} parent=83 // pred_region
          // Predicated region
          $region165: #{tpu_custom_call.1} parent=163 // pred_check
            %p1749 = pneg %p762
          $region166: #{tpu_custom_call.1} parent=163 // pred_check_branch
            %1751 = sbr.rel (%p1749) target = $region168
          $region167: #{tpu_custom_call.1} parent=163 // pred_region
            %v1752 = vld [vmem:[#allocation3] sm:$0x1]
            %v1753 = vmul.f32 %v1752, 0.125
            %v1754 = vld [vmem:[#allocation3 + $0x1] sm:$0x1]
            %v1755 = vmul.f32 %v1754, 0.125
            %v1756 = vmul.f32 %v1753, %v1753
            %v1757 = vsub.f32 %v1755, %v1756
            %v1758 = vmax.f32 %v1757, 0.0
            %v1759 = vld [vmem:[#allocation12] sm:$0x1]
            %v1760 = vadd.f32 %v1758, 1e-05
            %v1761 = vrsqrt.pop %v1760
            %v1762 = vmul.f32 %v1759, %v1761
            %v1763 = vld [vmem:[#allocation13] sm:$0x1]
            %v1764 = vmul.f32 %v1753, %v1762
            %v1765 = vsub.f32 %v1763, %v1764
            %v1767 = vlaneseq
            %v1768 = vshrl.u32 %v1767, 7
            %v1769 = vsub.s32 0, %v1768
            %v1770 = vrot.slane %v1765, %v1769
            %vm1772 = vcmask 1040384
            %v1773 = vsel %vm1772, %v1762, %v1770
            %1774 = vst [vmem:[#allocation3] sm:$0x3] %v1773
          $region168: #{tpu_custom_call.1} parent=163 // pred_fallthru
            _
          %s1775 = smul.u32 %s46, 8
          %s1776 = scalar_lea.vmem [#allocation2], %s1775
          %v1777 = vld [vmem:[%s1776] sm:$0xff]
          %v1778 = vld [vmem:[#allocation3] sm:$0x1]
          %v1779 = vlaneseq
          %v1780 = vshrl.u32 %v1779, 7
          %v1781 = vsub.s32 0, %v1780
          %v1782 = vrot.slane %v1778, %v1781
          %v1783 = vmul.f32 %v1777, %v1782
          %v1784 = vld [vmem:[#allocation3 + $0x1] sm:$0x1]
          %v1785 = vlaneseq
          %v1786 = vshrl.u32 %v1785, 7
          %v1787 = vsub.s32 0, %v1786
          %v1788 = vrot.slane %v1784, %v1787
          %v1789 = vadd.f32 %v1783, %v1788
          %v1790 = vmax.f32 %v1789, 0.0
          %v1791 = vpack.c.bf16 %v1790, %v1790
          %v1792 = vld [vmem:[#allocation15] sm:$0xf]
          %v1793 = vld [vmem:[#allocation15 + $0x4] sm:$0xf]
          %v1794 = vld [vmem:[#allocation15 + $0x8] sm:$0xf]
          %v1795 = vld [vmem:[#allocation15 + $0xc] sm:$0xf]
          %v1796 = vld [vmem:[#allocation15 + $0x10] sm:$0xf]
          %v1797 = vld [vmem:[#allocation15 + $0x14] sm:$0xf]
          %v1798 = vld [vmem:[#allocation15 + $0x18] sm:$0xf]
          %v1799 = vld [vmem:[#allocation15 + $0x1c] sm:$0xf]
          %v1800 = vld [vmem:[#allocation15 + $0x20] sm:$0xf]
          %v1801 = vld [vmem:[#allocation15 + $0x24] sm:$0xf]
          %v1802 = vld [vmem:[#allocation15 + $0x28] sm:$0xf]
          %v1803 = vld [vmem:[#allocation15 + $0x2c] sm:$0xf]
          %v1804 = vld [vmem:[#allocation15 + $0x30] sm:$0xf]
          %v1805 = vld [vmem:[#allocation15 + $0x34] sm:$0xf]
          %v1806 = vld [vmem:[#allocation15 + $0x38] sm:$0xf]
          %v1807 = vld [vmem:[#allocation15 + $0x3c] sm:$0xf]
          %v1824 = vunpack.c.l.b16 %v1792
          %v1825 = vunpack.c.l.b16 %v1793
          %v1826 = vunpack.c.l.b16 %v1794
          %v1827 = vunpack.c.l.b16 %v1795
          %v1828 = vunpack.c.l.b16 %v1796
          %v1829 = vunpack.c.l.b16 %v1797
          %v1830 = vunpack.c.l.b16 %v1798
          %v1831 = vunpack.c.l.b16 %v1799
          %v1832 = vunpack.c.l.b16 %v1800
          %v1833 = vunpack.c.l.b16 %v1801
          %v1834 = vunpack.c.l.b16 %v1802
          %v1835 = vunpack.c.l.b16 %v1803
          %v1836 = vunpack.c.l.b16 %v1804
          %v1837 = vunpack.c.l.b16 %v1805
          %v1838 = vunpack.c.l.b16 %v1806
          %v1839 = vunpack.c.l.b16 %v1807
          %v1840 = vpack.c.b16 %v1825, %v1824
          %v1841 = vpack.c.b16 %v1827, %v1826
          %v1842 = vpack.c.b16 %v1829, %v1828
          %v1843 = vpack.c.b16 %v1831, %v1830
          %v1844 = vpack.c.b16 %v1833, %v1832
          %v1845 = vpack.c.b16 %v1835, %v1834
          %v1846 = vpack.c.b16 %v1837, %v1836
          %v1847 = vpack.c.b16 %v1839, %v1838
          %1856 = vmatprep.subr.bf16.mxu0 0
          %1857 = vmatpush1.bf16.msra.mxu0 %v1840
          %1858 = vmatprep.subr.bf16.mxu0 0
          %1859 = vmatpush1.bf16.msra.mxu0 %v1841
          %1860 = vmatprep.subr.bf16.mxu0 0
          %1861 = vmatpush1.bf16.msra.mxu0 %v1842
          %1862 = vmatprep.subr.bf16.mxu0 0
          %1863 = vmatpush1.bf16.msra.mxu0 %v1843
          %1864 = vmatprep.subr.bf16.mxu0 0
          %1865 = vmatpush1.bf16.msra.mxu0 %v1844
          %1866 = vmatprep.subr.bf16.mxu0 0
          %1867 = vmatpush1.bf16.msra.mxu0 %v1845
          %1868 = vmatprep.subr.bf16.mxu0 0
          %1869 = vmatpush1.bf16.msra.mxu0 %v1846
          %1870 = vmatprep.subr.bf16.mxu0 0
          %1871 = vmatpush1.bf16.msra.mxu0 %v1847
          %1872 = vmatprep.subr.bf16.mxu0 0
          %1873 = vmatpush1.bf16.msra.mxu0 0
          %1874 = vmatprep.subr.bf16.mxu0 0
          %1875 = vmatpush1.bf16.msra.mxu0 0
          %1876 = vmatprep.subr.bf16.mxu0 0
          %1877 = vmatpush1.bf16.msra.mxu0 0
          %1878 = vmatprep.subr.bf16.mxu0 0
          %1879 = vmatpush1.bf16.msra.mxu0 0
          %1880 = vmatprep.subr.bf16.mxu0 0
          %1881 = vmatpush1.bf16.msra.mxu0 0
          %1882 = vmatprep.subr.bf16.mxu0 0
          %1883 = vmatpush1.bf16.msra.mxu0 0
          %1884 = vmatprep.subr.bf16.mxu0 0
          %1885 = vmatpush1.bf16.msra.mxu0 0
          %1886 = vmatprep.subr.bf16.mxu0 0
          %1887 = vmatpush1.bf16.msra.mxu0 0
          %1888 = vmatprep.mubr.bf16.mxu0 0
          %1889 = vmatmul.mubr.bf16.gmra.mrb[0].mxu0 %v1791
          %v1890 = vpop.f32.mrb[0].mxu0
          %v1891 = vadd.f32 0.0, %v1890
          %v1892 = vpop.f32.mrb[0].mxu0
          %v1893 = vpop.f32.mrb[0].mxu0
          %v1894 = vpop.f32.mrb[0].mxu0
          %1895 = vdwg.mxu0
          // Predicated region
          $region169: #{tpu_custom_call.1} parent=163 // pred_check
            %p1896 = pneg %p762
          $region170: #{tpu_custom_call.1} parent=163 // pred_check_branch
            %1898 = sbr.rel (%p1896) target = $region172
          $region171: #{tpu_custom_call.1} parent=163 // pred_region
            %1899 = vst [vmem:[#allocation4] sm:$0x3] 0.0
          $region172: #{tpu_custom_call.1} parent=163 // pred_fallthru
            _
          %vm1900 = vcmask 64512
          %v1902 = vsel %vm1900, 1.0, 0
          %1904 = vmatprep.subr.mxu0 0.0
          %v1905 = vand.u32 %v1891, 4294901760
          %1906 = vmatpush1.msra.mxu0 %v1905
          %1907 = vmatprep.subr.mxu0 0.0
          %1908 = vmatpush1.msra.mxu0 0.0
          %1909 = vmatprep.subr.mxu0 0.0
          %1910 = vmatpush1.msra.mxu0 0.0
          %1911 = vmatprep.subr.mxu0 0.0
          %1912 = vmatpush1.msra.mxu0 0.0
          %1913 = vmatprep.subr.mxu0 0.0
          %1914 = vmatpush1.msra.mxu0 0.0
          %1915 = vmatprep.subr.mxu0 0.0
          %1916 = vmatpush1.msra.mxu0 0.0
          %1917 = vmatprep.subr.mxu0 0.0
          %1918 = vmatpush1.msra.mxu0 0.0
          %1919 = vmatprep.subr.mxu0 0.0
          %1920 = vmatpush1.msra.mxu0 0.0
          %1921 = vmatprep.subr.mxu0 0.0
          %1922 = vmatpush1.msra.mxu0 0.0
          %1923 = vmatprep.subr.mxu0 0.0
          %1924 = vmatpush1.msra.mxu0 0.0
          %1925 = vmatprep.subr.mxu0 0.0
          %1926 = vmatpush1.msra.mxu0 0.0
          %1927 = vmatprep.subr.mxu0 0.0
          %1928 = vmatpush1.msra.mxu0 0.0
          %1929 = vmatprep.subr.mxu0 0.0
          %1930 = vmatpush1.msra.mxu0 0.0
          %1931 = vmatprep.subr.mxu0 0.0
          %1932 = vmatpush1.msra.mxu0 0.0
          %1933 = vmatprep.subr.mxu0 0.0
          %1934 = vmatpush1.msra.mxu0 0.0
          %1935 = vmatprep.subr.mxu0 0.0
          %1936 = vmatpush1.msra.mxu0 0.0
          %1937 = vmatprep.subr.mxu0 0.0
          %1938 = vmatpush1.msra.mxu0 0.0
          %1939 = vmatprep.subr.mxu0 0.0
          %1940 = vmatpush1.msra.mxu0 0.0
          %1941 = vmatprep.subr.mxu0 0.0
          %1942 = vmatpush1.msra.mxu0 0.0
          %1943 = vmatprep.subr.mxu0 0.0
          %1944 = vmatpush1.msra.mxu0 0.0
          %1945 = vmatprep.subr.mxu0 0.0
          %1946 = vmatpush1.msra.mxu0 0.0
          %1947 = vmatprep.subr.mxu0 0.0
          %1948 = vmatpush1.msra.mxu0 0.0
          %1949 = vmatprep.subr.mxu0 0.0
          %1950 = vmatpush1.msra.mxu0 0.0
          %1951 = vmatprep.subr.mxu0 0.0
          %1952 = vmatpush1.msra.mxu0 0.0
          %1953 = vmatprep.subr.mxu0 0.0
          %1954 = vmatpush1.msra.mxu0 0.0
          %1955 = vmatprep.subr.mxu0 0.0
          %1956 = vmatpush1.msra.mxu0 0.0
          %1957 = vmatprep.subr.mxu0 0.0
          %1958 = vmatpush1.msra.mxu0 0.0
          %1959 = vmatprep.subr.mxu0 0.0
          %1960 = vmatpush1.msra.mxu0 0.0
          %1961 = vmatprep.subr.mxu0 0.0
          %1962 = vmatpush1.msra.mxu0 0.0
          %1963 = vmatprep.subr.mxu0 0.0
          %1964 = vmatpush1.msra.mxu0 0.0
          %1965 = vmatprep.subr.mxu0 0.0
          %1966 = vmatpush1.msra.mxu0 0.0
          %1967 = vmatprep.subr.mxu0 0.0
          %1968 = vmatpush1.msra.mxu0 0.0
          %1969 = vmatprep.mubr.f32.mxu0 0.0
          %v1970 = vand.u32 %v1902, 4294901760
          %v1971 = vsub.f32 %v1902, %v1970
          %v1972 = vand.u32 %v1971, 4294901760
          %v1973 = vsub.f32 %v1971, %v1972
          %v1974 = vand.u32 %v1973, 4294901760
          %1975 = vmatmul.mubr.f32.gmra.mrb[0].mxu0 %v1974
          %v1976 = vpop.f32.mrb[0].mxu0
          %v1977 = vadd.f32 0.0, %v1976
          %v1978 = vpop.f32.mrb[0].mxu0
          %1979 = vdwg.mxu0
          %1980 = vmatprep.subr.mxu0 0.0
          %v1981 = vand.u32 %v1891, 4294901760
          %v1982 = vsub.f32 %v1891, %v1981
          %v1983 = vand.u32 %v1982, 4294901760
          %v1984 = vsub.f32 %v1982, %v1983
          %v1985 = vand.u32 %v1984, 4294901760
          %1986 = vmatpush1.msra.mxu0 %v1985
          %1987 = vmatprep.subr.mxu0 0.0
          %1988 = vmatpush1.msra.mxu0 0.0
          %1989 = vmatprep.subr.mxu0 0.0
          %1990 = vmatpush1.msra.mxu0 0.0
          %1991 = vmatprep.subr.mxu0 0.0
          %1992 = vmatpush1.msra.mxu0 0.0
          %1993 = vmatprep.subr.mxu0 0.0
          %1994 = vmatpush1.msra.mxu0 0.0
          %1995 = vmatprep.subr.mxu0 0.0
          %1996 = vmatpush1.msra.mxu0 0.0
          %1997 = vmatprep.subr.mxu0 0.0
          %1998 = vmatpush1.msra.mxu0 0.0
          %1999 = vmatprep.subr.mxu0 0.0
          %2000 = vmatpush1.msra.mxu0 0.0
          %2001 = vmatprep.subr.mxu0 0.0
          %2002 = vmatpush1.msra.mxu0 0.0
          %2003 = vmatprep.subr.mxu0 0.0
          %2004 = vmatpush1.msra.mxu0 0.0
          %2005 = vmatprep.subr.mxu0 0.0
          %2006 = vmatpush1.msra.mxu0 0.0
          %2007 = vmatprep.subr.mxu0 0.0
          %2008 = vmatpush1.msra.mxu0 0.0
          %2009 = vmatprep.subr.mxu0 0.0
          %2010 = vmatpush1.msra.mxu0 0.0
          %2011 = vmatprep.subr.mxu0 0.0
          %2012 = vmatpush1.msra.mxu0 0.0
          %2013 = vmatprep.subr.mxu0 0.0
          %2014 = vmatpush1.msra.mxu0 0.0
          %2015 = vmatprep.subr.mxu0 0.0
          %2016 = vmatpush1.msra.mxu0 0.0
          %2017 = vmatprep.subr.mxu0 0.0
          %2018 = vmatpush1.msra.mxu0 0.0
          %2019 = vmatprep.subr.mxu0 0.0
          %2020 = vmatpush1.msra.mxu0 0.0
          %2021 = vmatprep.subr.mxu0 0.0
          %2022 = vmatpush1.msra.mxu0 0.0
          %2023 = vmatprep.subr.mxu0 0.0
          %2024 = vmatpush1.msra.mxu0 0.0
          %2025 = vmatprep.subr.mxu0 0.0
          %2026 = vmatpush1.msra.mxu0 0.0
          %2027 = vmatprep.subr.mxu0 0.0
          %2028 = vmatpush1.msra.mxu0 0.0
          %2029 = vmatprep.subr.mxu0 0.0
          %2030 = vmatpush1.msra.mxu0 0.0
          %2031 = vmatprep.subr.mxu0 0.0
          %2032 = vmatpush1.msra.mxu0 0.0
          %2033 = vmatprep.subr.mxu0 0.0
          %2034 = vmatpush1.msra.mxu0 0.0
          %2035 = vmatprep.subr.mxu0 0.0
          %2036 = vmatpush1.msra.mxu0 0.0
          %2037 = vmatprep.subr.mxu0 0.0
          %2038 = vmatpush1.msra.mxu0 0.0
          %2039 = vmatprep.subr.mxu0 0.0
          %2040 = vmatpush1.msra.mxu0 0.0
          %2041 = vmatprep.subr.mxu0 0.0
          %2042 = vmatpush1.msra.mxu0 0.0
          %2043 = vmatprep.subr.mxu0 0.0
          %2044 = vmatpush1.msra.mxu0 0.0
          %2045 = vmatprep.subr.mxu0 0.0
          %2046 = vmatpush1.msra.mxu0 0.0
          %2047 = vmatprep.subr.mxu0 0.0
          %2048 = vmatpush1.msra.mxu0 0.0
          %2049 = vmatprep.mubr.f32.mxu0 0.0
          %v2050 = vand.u32 %v1902, 4294901760
          %2051 = vmatmul.mubr.f32.gmra.mrb[0].mxu0 %v2050
          %v2052 = vpop.f32.mrb[0].mxu0
          %v2053 = vadd.f32 %v1977, %v2052
          %v2054 = vpop.f32.mrb[0].mxu0
          %2055 = vdwg.mxu0
          %2056 = vmatprep.subr.mxu0 0.0
          %v2057 = vand.u32 %v1891, 4294901760
          %v2058 = vsub.f32 %v1891, %v2057
          %2059 = vmatpush1.msra.mxu0 %v2058
          %2060 = vmatprep.subr.mxu0 0.0
          %2061 = vmatpush1.msra.mxu0 0.0
          %2062 = vmatprep.subr.mxu0 0.0
          %2063 = vmatpush1.msra.mxu0 0.0
          %2064 = vmatprep.subr.mxu0 0.0
          %2065 = vmatpush1.msra.mxu0 0.0
          %2066 = vmatprep.subr.mxu0 0.0
          %2067 = vmatpush1.msra.mxu0 0.0
          %2068 = vmatprep.subr.mxu0 0.0
          %2069 = vmatpush1.msra.mxu0 0.0
          %2070 = vmatprep.subr.mxu0 0.0
          %2071 = vmatpush1.msra.mxu0 0.0
          %2072 = vmatprep.subr.mxu0 0.0
          %2073 = vmatpush1.msra.mxu0 0.0
          %2074 = vmatprep.subr.mxu0 0.0
          %2075 = vmatpush1.msra.mxu0 0.0
          %2076 = vmatprep.subr.mxu0 0.0
          %2077 = vmatpush1.msra.mxu0 0.0
          %2078 = vmatprep.subr.mxu0 0.0
          %2079 = vmatpush1.msra.mxu0 0.0
          %2080 = vmatprep.subr.mxu0 0.0
          %2081 = vmatpush1.msra.mxu0 0.0
          %2082 = vmatprep.subr.mxu0 0.0
          %2083 = vmatpush1.msra.mxu0 0.0
          %2084 = vmatprep.subr.mxu0 0.0
          %2085 = vmatpush1.msra.mxu0 0.0
          %2086 = vmatprep.subr.mxu0 0.0
          %2087 = vmatpush1.msra.mxu0 0.0
          %2088 = vmatprep.subr.mxu0 0.0
          %2089 = vmatpush1.msra.mxu0 0.0
          %2090 = vmatprep.subr.mxu0 0.0
          %2091 = vmatpush1.msra.mxu0 0.0
          %2092 = vmatprep.subr.mxu0 0.0
          %2093 = vmatpush1.msra.mxu0 0.0
          %2094 = vmatprep.subr.mxu0 0.0
          %2095 = vmatpush1.msra.mxu0 0.0
          %2096 = vmatprep.subr.mxu0 0.0
          %2097 = vmatpush1.msra.mxu0 0.0
          %2098 = vmatprep.subr.mxu0 0.0
          %2099 = vmatpush1.msra.mxu0 0.0
          %2100 = vmatprep.subr.mxu0 0.0
          %2101 = vmatpush1.msra.mxu0 0.0
          %2102 = vmatprep.subr.mxu0 0.0
          %2103 = vmatpush1.msra.mxu0 0.0
          %2104 = vmatprep.subr.mxu0 0.0
          %2105 = vmatpush1.msra.mxu0 0.0
          %2106 = vmatprep.subr.mxu0 0.0
          %2107 = vmatpush1.msra.mxu0 0.0
          %2108 = vmatprep.subr.mxu0 0.0
          %2109 = vmatpush1.msra.mxu0 0.0
          %2110 = vmatprep.subr.mxu0 0.0
          %2111 = vmatpush1.msra.mxu0 0.0
          %2112 = vmatprep.subr.mxu0 0.0
          %2113 = vmatpush1.msra.mxu0 0.0
          %2114 = vmatprep.subr.mxu0 0.0
          %2115 = vmatpush1.msra.mxu0 0.0
          %2116 = vmatprep.subr.mxu0 0.0
          %2117 = vmatpush1.msra.mxu0 0.0
          %2118 = vmatprep.subr.mxu0 0.0
          %2119 = vmatpush1.msra.mxu0 0.0
          %2120 = vmatprep.subr.mxu0 0.0
          %2121 = vmatpush1.msra.mxu0 0.0
          %2122 = vmatprep.mubr.f32.mxu0 0.0
          %v2123 = vand.u32 %v1902, 4294901760
          %v2124 = vsub.f32 %v1902, %v2123
          %2125 = vmatmul.mubr.f32.gmra.mrb[0].mxu0 %v2124
          %v2126 = vpop.f32.mrb[0].mxu0
          %v2127 = vadd.f32 %v2053, %v2126
          %v2128 = vpop.f32.mrb[0].mxu0
          %2129 = vdwg.mxu0
          %2130 = vmatprep.subr.mxu0 0.0
          %v2131 = vand.u32 %v1891, 4294901760
          %2132 = vmatpush1.msra.mxu0 %v2131
          %2133 = vmatprep.subr.mxu0 0.0
          %2134 = vmatpush1.msra.mxu0 0.0
          %2135 = vmatprep.subr.mxu0 0.0
          %2136 = vmatpush1.msra.mxu0 0.0
          %2137 = vmatprep.subr.mxu0 0.0
          %2138 = vmatpush1.msra.mxu0 0.0
          %2139 = vmatprep.subr.mxu0 0.0
          %2140 = vmatpush1.msra.mxu0 0.0
          %2141 = vmatprep.subr.mxu0 0.0
          %2142 = vmatpush1.msra.mxu0 0.0
          %2143 = vmatprep.subr.mxu0 0.0
          %2144 = vmatpush1.msra.mxu0 0.0
          %2145 = vmatprep.subr.mxu0 0.0
          %2146 = vmatpush1.msra.mxu0 0.0
          %2147 = vmatprep.subr.mxu0 0.0
          %2148 = vmatpush1.msra.mxu0 0.0
          %2149 = vmatprep.subr.mxu0 0.0
          %2150 = vmatpush1.msra.mxu0 0.0
          %2151 = vmatprep.subr.mxu0 0.0
          %2152 = vmatpush1.msra.mxu0 0.0
          %2153 = vmatprep.subr.mxu0 0.0
          %2154 = vmatpush1.msra.mxu0 0.0
          %2155 = vmatprep.subr.mxu0 0.0
          %2156 = vmatpush1.msra.mxu0 0.0
          %2157 = vmatprep.subr.mxu0 0.0
          %2158 = vmatpush1.msra.mxu0 0.0
          %2159 = vmatprep.subr.mxu0 0.0
          %2160 = vmatpush1.msra.mxu0 0.0
          %2161 = vmatprep.subr.mxu0 0.0
          %2162 = vmatpush1.msra.mxu0 0.0
          %2163 = vmatprep.subr.mxu0 0.0
          %2164 = vmatpush1.msra.mxu0 0.0
          %2165 = vmatprep.subr.mxu0 0.0
          %2166 = vmatpush1.msra.mxu0 0.0
          %2167 = vmatprep.subr.mxu0 0.0
          %2168 = vmatpush1.msra.mxu0 0.0
          %2169 = vmatprep.subr.mxu0 0.0
          %2170 = vmatpush1.msra.mxu0 0.0
          %2171 = vmatprep.subr.mxu0 0.0
          %2172 = vmatpush1.msra.mxu0 0.0
          %2173 = vmatprep.subr.mxu0 0.0
          %2174 = vmatpush1.msra.mxu0 0.0
          %2175 = vmatprep.subr.mxu0 0.0
          %2176 = vmatpush1.msra.mxu0 0.0
          %2177 = vmatprep.subr.mxu0 0.0
          %2178 = vmatpush1.msra.mxu0 0.0
          %2179 = vmatprep.subr.mxu0 0.0
          %2180 = vmatpush1.msra.mxu0 0.0
          %2181 = vmatprep.subr.mxu0 0.0
          %2182 = vmatpush1.msra.mxu0 0.0
          %2183 = vmatprep.subr.mxu0 0.0
          %2184 = vmatpush1.msra.mxu0 0.0
          %2185 = vmatprep.subr.mxu0 0.0
          %2186 = vmatpush1.msra.mxu0 0.0
          %2187 = vmatprep.subr.mxu0 0.0
          %2188 = vmatpush1.msra.mxu0 0.0
          %2189 = vmatprep.subr.mxu0 0.0
          %2190 = vmatpush1.msra.mxu0 0.0
          %2191 = vmatprep.subr.mxu0 0.0
          %2192 = vmatpush1.msra.mxu0 0.0
          %2193 = vmatprep.subr.mxu0 0.0
          %2194 = vmatpush1.msra.mxu0 0.0
          %2195 = vmatprep.mubr.f32.mxu0 0.0
          %v2196 = vand.u32 %v1902, 4294901760
          %v2197 = vsub.f32 %v1902, %v2196
          %v2198 = vand.u32 %v2197, 4294901760
          %2199 = vmatmul.mubr.f32.gmra.mrb[0].mxu0 %v2198
          %v2200 = vpop.f32.mrb[0].mxu0
          %v2201 = vadd.f32 %v2127, %v2200
          %v2202 = vpop.f32.mrb[0].mxu0
          %2203 = vdwg.mxu0
          %2204 = vmatprep.subr.mxu0 0.0
          %v2205 = vand.u32 %v1891, 4294901760
          %v2206 = vsub.f32 %v1891, %v2205
          %v2207 = vand.u32 %v2206, 4294901760
          %2208 = vmatpush1.msra.mxu0 %v2207
          %2209 = vmatprep.subr.mxu0 0.0
          %2210 = vmatpush1.msra.mxu0 0.0
          %2211 = vmatprep.subr.mxu0 0.0
          %2212 = vmatpush1.msra.mxu0 0.0
          %2213 = vmatprep.subr.mxu0 0.0
          %2214 = vmatpush1.msra.mxu0 0.0
          %2215 = vmatprep.subr.mxu0 0.0
          %2216 = vmatpush1.msra.mxu0 0.0
          %2217 = vmatprep.subr.mxu0 0.0
          %2218 = vmatpush1.msra.mxu0 0.0
          %2219 = vmatprep.subr.mxu0 0.0
          %2220 = vmatpush1.msra.mxu0 0.0
          %2221 = vmatprep.subr.mxu0 0.0
          %2222 = vmatpush1.msra.mxu0 0.0
          %2223 = vmatprep.subr.mxu0 0.0
          %2224 = vmatpush1.msra.mxu0 0.0
          %2225 = vmatprep.subr.mxu0 0.0
          %2226 = vmatpush1.msra.mxu0 0.0
          %2227 = vmatprep.subr.mxu0 0.0
          %2228 = vmatpush1.msra.mxu0 0.0
          %2229 = vmatprep.subr.mxu0 0.0
          %2230 = vmatpush1.msra.mxu0 0.0
          %2231 = vmatprep.subr.mxu0 0.0
          %2232 = vmatpush1.msra.mxu0 0.0
          %2233 = vmatprep.subr.mxu0 0.0
          %2234 = vmatpush1.msra.mxu0 0.0
          %2235 = vmatprep.subr.mxu0 0.0
          %2236 = vmatpush1.msra.mxu0 0.0
          %2237 = vmatprep.subr.mxu0 0.0
          %2238 = vmatpush1.msra.mxu0 0.0
          %2239 = vmatprep.subr.mxu0 0.0
          %2240 = vmatpush1.msra.mxu0 0.0
          %2241 = vmatprep.subr.mxu0 0.0
          %2242 = vmatpush1.msra.mxu0 0.0
          %2243 = vmatprep.subr.mxu0 0.0
          %2244 = vmatpush1.msra.mxu0 0.0
          %2245 = vmatprep.subr.mxu0 0.0
          %2246 = vmatpush1.msra.mxu0 0.0
          %2247 = vmatprep.subr.mxu0 0.0
          %2248 = vmatpush1.msra.mxu0 0.0
          %2249 = vmatprep.subr.mxu0 0.0
          %2250 = vmatpush1.msra.mxu0 0.0
          %2251 = vmatprep.subr.mxu0 0.0
          %2252 = vmatpush1.msra.mxu0 0.0
          %2253 = vmatprep.subr.mxu0 0.0
          %2254 = vmatpush1.msra.mxu0 0.0
          %2255 = vmatprep.subr.mxu0 0.0
          %2256 = vmatpush1.msra.mxu0 0.0
          %2257 = vmatprep.subr.mxu0 0.0
          %2258 = vmatpush1.msra.mxu0 0.0
          %2259 = vmatprep.subr.mxu0 0.0
          %2260 = vmatpush1.msra.mxu0 0.0
          %2261 = vmatprep.subr.mxu0 0.0
          %2262 = vmatpush1.msra.mxu0 0.0
          %2263 = vmatprep.subr.mxu0 0.0
          %2264 = vmatpush1.msra.mxu0 0.0
          %2265 = vmatprep.subr.mxu0 0.0
          %2266 = vmatpush1.msra.mxu0 0.0
          %2267 = vmatprep.subr.mxu0 0.0
          %2268 = vmatpush1.msra.mxu0 0.0
          %2269 = vmatprep.subr.mxu0 0.0
          %2270 = vmatpush1.msra.mxu0 0.0
          %2271 = vmatprep.mubr.f32.mxu0 0.0
          %v2272 = vand.u32 %v1902, 4294901760
          %2273 = vmatmul.mubr.f32.gmra.mrb[0].mxu0 %v2272
          %v2274 = vpop.f32.mrb[0].mxu0
          %v2275 = vadd.f32 %v2201, %v2274
          %v2276 = vpop.f32.mrb[0].mxu0
          %2277 = vdwg.mxu0
          %2278 = vmatprep.subr.mxu0 0.0
          %v2279 = vand.u32 %v1891, 4294901760
          %2280 = vmatpush1.msra.mxu0 %v2279
          %2281 = vmatprep.subr.mxu0 0.0
          %2282 = vmatpush1.msra.mxu0 0.0
          %2283 = vmatprep.subr.mxu0 0.0
          %2284 = vmatpush1.msra.mxu0 0.0
          %2285 = vmatprep.subr.mxu0 0.0
          %2286 = vmatpush1.msra.mxu0 0.0
          %2287 = vmatprep.subr.mxu0 0.0
          %2288 = vmatpush1.msra.mxu0 0.0
          %2289 = vmatprep.subr.mxu0 0.0
          %2290 = vmatpush1.msra.mxu0 0.0
          %2291 = vmatprep.subr.mxu0 0.0
          %2292 = vmatpush1.msra.mxu0 0.0
          %2293 = vmatprep.subr.mxu0 0.0
          %2294 = vmatpush1.msra.mxu0 0.0
          %2295 = vmatprep.subr.mxu0 0.0
          %2296 = vmatpush1.msra.mxu0 0.0
          %2297 = vmatprep.subr.mxu0 0.0
          %2298 = vmatpush1.msra.mxu0 0.0
          %2299 = vmatprep.subr.mxu0 0.0
          %2300 = vmatpush1.msra.mxu0 0.0
          %2301 = vmatprep.subr.mxu0 0.0
          %2302 = vmatpush1.msra.mxu0 0.0
          %2303 = vmatprep.subr.mxu0 0.0
          %2304 = vmatpush1.msra.mxu0 0.0
          %2305 = vmatprep.subr.mxu0 0.0
          %2306 = vmatpush1.msra.mxu0 0.0
          %2307 = vmatprep.subr.mxu0 0.0
          %2308 = vmatpush1.msra.mxu0 0.0
          %2309 = vmatprep.subr.mxu0 0.0
          %2310 = vmatpush1.msra.mxu0 0.0
          %2311 = vmatprep.subr.mxu0 0.0
          %2312 = vmatpush1.msra.mxu0 0.0
          %2313 = vmatprep.subr.mxu0 0.0
          %2314 = vmatpush1.msra.mxu0 0.0
          %2315 = vmatprep.subr.mxu0 0.0
          %2316 = vmatpush1.msra.mxu0 0.0
          %2317 = vmatprep.subr.mxu0 0.0
          %2318 = vmatpush1.msra.mxu0 0.0
          %2319 = vmatprep.subr.mxu0 0.0
          %2320 = vmatpush1.msra.mxu0 0.0
          %2321 = vmatprep.subr.mxu0 0.0
          %2322 = vmatpush1.msra.mxu0 0.0
          %2323 = vmatprep.subr.mxu0 0.0
          %2324 = vmatpush1.msra.mxu0 0.0
          %2325 = vmatprep.subr.mxu0 0.0
          %2326 = vmatpush1.msra.mxu0 0.0
          %2327 = vmatprep.subr.mxu0 0.0
          %2328 = vmatpush1.msra.mxu0 0.0
          %2329 = vmatprep.subr.mxu0 0.0
          %2330 = vmatpush1.msra.mxu0 0.0
          %2331 = vmatprep.subr.mxu0 0.0
          %2332 = vmatpush1.msra.mxu0 0.0
          %2333 = vmatprep.subr.mxu0 0.0
          %2334 = vmatpush1.msra.mxu0 0.0
          %2335 = vmatprep.subr.mxu0 0.0
          %2336 = vmatpush1.msra.mxu0 0.0
          %2337 = vmatprep.subr.mxu0 0.0
          %2338 = vmatpush1.msra.mxu0 0.0
          %2339 = vmatprep.subr.mxu0 0.0
          %2340 = vmatpush1.msra.mxu0 0.0
          %2341 = vmatprep.subr.mxu0 0.0
          %2342 = vmatpush1.msra.mxu0 0.0
          %2343 = vmatprep.mubr.f32.mxu0 0.0
          %v2344 = vand.u32 %v1902, 4294901760
          %2345 = vmatmul.mubr.f32.gmra.mrb[0].mxu0 %v2344
          %v2346 = vpop.f32.mrb[0].mxu0
          %v2347 = vadd.f32 %v2275, %v2346
          %v2348 = vpop.f32.mrb[0].mxu0
          %2349 = vdwg.mxu0
          %v2350 = vmul.f32 %v1891, %v1891
          %2351 = vmatprep.subr.mxu0 0.0
          %v2352 = vand.u32 %v2350, 4294901760
          %2353 = vmatpush1.msra.mxu0 %v2352
          %2354 = vmatprep.subr.mxu0 0.0
          %2355 = vmatpush1.msra.mxu0 0.0
          %2356 = vmatprep.subr.mxu0 0.0
          %2357 = vmatpush1.msra.mxu0 0.0
          %2358 = vmatprep.subr.mxu0 0.0
          %2359 = vmatpush1.msra.mxu0 0.0
          %2360 = vmatprep.subr.mxu0 0.0
          %2361 = vmatpush1.msra.mxu0 0.0
          %2362 = vmatprep.subr.mxu0 0.0
          %2363 = vmatpush1.msra.mxu0 0.0
          %2364 = vmatprep.subr.mxu0 0.0
          %2365 = vmatpush1.msra.mxu0 0.0
          %2366 = vmatprep.subr.mxu0 0.0
          %2367 = vmatpush1.msra.mxu0 0.0
          %2368 = vmatprep.subr.mxu0 0.0
          %2369 = vmatpush1.msra.mxu0 0.0
          %2370 = vmatprep.subr.mxu0 0.0
          %2371 = vmatpush1.msra.mxu0 0.0
          %2372 = vmatprep.subr.mxu0 0.0
          %2373 = vmatpush1.msra.mxu0 0.0
          %2374 = vmatprep.subr.mxu0 0.0
          %2375 = vmatpush1.msra.mxu0 0.0
          %2376 = vmatprep.subr.mxu0 0.0
          %2377 = vmatpush1.msra.mxu0 0.0
          %2378 = vmatprep.subr.mxu0 0.0
          %2379 = vmatpush1.msra.mxu0 0.0
          %2380 = vmatprep.subr.mxu0 0.0
          %2381 = vmatpush1.msra.mxu0 0.0
          %2382 = vmatprep.subr.mxu0 0.0
          %2383 = vmatpush1.msra.mxu0 0.0
          %2384 = vmatprep.subr.mxu0 0.0
          %2385 = vmatpush1.msra.mxu0 0.0
          %2386 = vmatprep.subr.mxu0 0.0
          %2387 = vmatpush1.msra.mxu0 0.0
          %2388 = vmatprep.subr.mxu0 0.0
          %2389 = vmatpush1.msra.mxu0 0.0
          %2390 = vmatprep.subr.mxu0 0.0
          %2391 = vmatpush1.msra.mxu0 0.0
          %2392 = vmatprep.subr.mxu0 0.0
          %2393 = vmatpush1.msra.mxu0 0.0
          %2394 = vmatprep.subr.mxu0 0.0
          %2395 = vmatpush1.msra.mxu0 0.0
          %2396 = vmatprep.subr.mxu0 0.0
          %2397 = vmatpush1.msra.mxu0 0.0
          %2398 = vmatprep.subr.mxu0 0.0
          %2399 = vmatpush1.msra.mxu0 0.0
          %2400 = vmatprep.subr.mxu0 0.0
          %2401 = vmatpush1.msra.mxu0 0.0
          %2402 = vmatprep.subr.mxu0 0.0
          %2403 = vmatpush1.msra.mxu0 0.0
          %2404 = vmatprep.subr.mxu0 0.0
          %2405 = vmatpush1.msra.mxu0 0.0
          %2406 = vmatprep.subr.mxu0 0.0
          %2407 = vmatpush1.msra.mxu0 0.0
          %2408 = vmatprep.subr.mxu0 0.0
          %2409 = vmatpush1.msra.mxu0 0.0
          %2410 = vmatprep.subr.mxu0 0.0
          %2411 = vmatpush1.msra.mxu0 0.0
          %2412 = vmatprep.subr.mxu0 0.0
          %2413 = vmatpush1.msra.mxu0 0.0
          %2414 = vmatprep.subr.mxu0 0.0
          %2415 = vmatpush1.msra.mxu0 0.0
          %2416 = vmatprep.mubr.f32.mxu0 0.0
          %v2417 = vand.u32 %v1902, 4294901760
          %v2418 = vsub.f32 %v1902, %v2417
          %v2419 = vand.u32 %v2418, 4294901760
          %v2420 = vsub.f32 %v2418, %v2419
          %v2421 = vand.u32 %v2420, 4294901760
          %2422 = vmatmul.mubr.f32.gmra.mrb[0].mxu0 %v2421
          %v2423 = vpop.f32.mrb[0].mxu0
          %v2424 = vadd.f32 0.0, %v2423
          %v2425 = vpop.f32.mrb[0].mxu0
          %2426 = vdwg.mxu0
          %2427 = vmatprep.subr.mxu0 0.0
          %v2428 = vand.u32 %v2350, 4294901760
          %v2429 = vsub.f32 %v2350, %v2428
          %v2430 = vand.u32 %v2429, 4294901760
          %v2431 = vsub.f32 %v2429, %v2430
          %v2432 = vand.u32 %v2431, 4294901760
          %2433 = vmatpush1.msra.mxu0 %v2432
          %2434 = vmatprep.subr.mxu0 0.0
          %2435 = vmatpush1.msra.mxu0 0.0
          %2436 = vmatprep.subr.mxu0 0.0
          %2437 = vmatpush1.msra.mxu0 0.0
          %2438 = vmatprep.subr.mxu0 0.0
          %2439 = vmatpush1.msra.mxu0 0.0
          %2440 = vmatprep.subr.mxu0 0.0
          %2441 = vmatpush1.msra.mxu0 0.0
          %2442 = vmatprep.subr.mxu0 0.0
          %2443 = vmatpush1.msra.mxu0 0.0
          %2444 = vmatprep.subr.mxu0 0.0
          %2445 = vmatpush1.msra.mxu0 0.0
          %2446 = vmatprep.subr.mxu0 0.0
          %2447 = vmatpush1.msra.mxu0 0.0
          %2448 = vmatprep.subr.mxu0 0.0
          %2449 = vmatpush1.msra.mxu0 0.0
          %2450 = vmatprep.subr.mxu0 0.0
          %2451 = vmatpush1.msra.mxu0 0.0
          %2452 = vmatprep.subr.mxu0 0.0
          %2453 = vmatpush1.msra.mxu0 0.0
          %2454 = vmatprep.subr.mxu0 0.0
          %2455 = vmatpush1.msra.mxu0 0.0
          %2456 = vmatprep.subr.mxu0 0.0
          %2457 = vmatpush1.msra.mxu0 0.0
          %2458 = vmatprep.subr.mxu0 0.0
          %2459 = vmatpush1.msra.mxu0 0.0
          %2460 = vmatprep.subr.mxu0 0.0
          %2461 = vmatpush1.msra.mxu0 0.0
          %2462 = vmatprep.subr.mxu0 0.0
          %2463 = vmatpush1.msra.mxu0 0.0
          %2464 = vmatprep.subr.mxu0 0.0
          %2465 = vmatpush1.msra.mxu0 0.0
          %2466 = vmatprep.subr.mxu0 0.0
          %2467 = vmatpush1.msra.mxu0 0.0
          %2468 = vmatprep.subr.mxu0 0.0
          %2469 = vmatpush1.msra.mxu0 0.0
          %2470 = vmatprep.subr.mxu0 0.0
          %2471 = vmatpush1.msra.mxu0 0.0
          %2472 = vmatprep.subr.mxu0 0.0
          %2473 = vmatpush1.msra.mxu0 0.0
          %2474 = vmatprep.subr.mxu0 0.0
          %2475 = vmatpush1.msra.mxu0 0.0
          %2476 = vmatprep.subr.mxu0 0.0
          %2477 = vmatpush1.msra.mxu0 0.0
          %2478 = vmatprep.subr.mxu0 0.0
          %2479 = vmatpush1.msra.mxu0 0.0
          %2480 = vmatprep.subr.mxu0 0.0
          %2481 = vmatpush1.msra.mxu0 0.0
          %2482 = vmatprep.subr.mxu0 0.0
          %2483 = vmatpush1.msra.mxu0 0.0
          %2484 = vmatprep.subr.mxu0 0.0
          %2485 = vmatpush1.msra.mxu0 0.0
          %2486 = vmatprep.subr.mxu0 0.0
          %2487 = vmatpush1.msra.mxu0 0.0
          %2488 = vmatprep.subr.mxu0 0.0
          %2489 = vmatpush1.msra.mxu0 0.0
          %2490 = vmatprep.subr.mxu0 0.0
          %2491 = vmatpush1.msra.mxu0 0.0
          %2492 = vmatprep.subr.mxu0 0.0
          %2493 = vmatpush1.msra.mxu0 0.0
          %2494 = vmatprep.subr.mxu0 0.0
          %2495 = vmatpush1.msra.mxu0 0.0
          %2496 = vmatprep.mubr.f32.mxu0 0.0
          %v2497 = vand.u32 %v1902, 4294901760
          %2498 = vmatmul.mubr.f32.gmra.mrb[0].mxu0 %v2497
          %v2499 = vpop.f32.mrb[0].mxu0
          %v2500 = vadd.f32 %v2424, %v2499
          %v2501 = vpop.f32.mrb[0].mxu0
          %2502 = vdwg.mxu0
          %2503 = vmatprep.subr.mxu0 0.0
          %v2504 = vand.u32 %v2350, 4294901760
          %v2505 = vsub.f32 %v2350, %v2504
          %2506 = vmatpush1.msra.mxu0 %v2505
          %2507 = vmatprep.subr.mxu0 0.0
          %2508 = vmatpush1.msra.mxu0 0.0
          %2509 = vmatprep.subr.mxu0 0.0
          %2510 = vmatpush1.msra.mxu0 0.0
          %2511 = vmatprep.subr.mxu0 0.0
          %2512 = vmatpush1.msra.mxu0 0.0
          %2513 = vmatprep.subr.mxu0 0.0
          %2514 = vmatpush1.msra.mxu0 0.0
          %2515 = vmatprep.subr.mxu0 0.0
          %2516 = vmatpush1.msra.mxu0 0.0
          %2517 = vmatprep.subr.mxu0 0.0
          %2518 = vmatpush1.msra.mxu0 0.0
          %2519 = vmatprep.subr.mxu0 0.0
          %2520 = vmatpush1.msra.mxu0 0.0
          %2521 = vmatprep.subr.mxu0 0.0
          %2522 = vmatpush1.msra.mxu0 0.0
          %2523 = vmatprep.subr.mxu0 0.0
          %2524 = vmatpush1.msra.mxu0 0.0
          %2525 = vmatprep.subr.mxu0 0.0
          %2526 = vmatpush1.msra.mxu0 0.0
          %2527 = vmatprep.subr.mxu0 0.0
          %2528 = vmatpush1.msra.mxu0 0.0
          %2529 = vmatprep.subr.mxu0 0.0
          %2530 = vmatpush1.msra.mxu0 0.0
          %2531 = vmatprep.subr.mxu0 0.0
          %2532 = vmatpush1.msra.mxu0 0.0
          %2533 = vmatprep.subr.mxu0 0.0
          %2534 = vmatpush1.msra.mxu0 0.0
          %2535 = vmatprep.subr.mxu0 0.0
          %2536 = vmatpush1.msra.mxu0 0.0
          %2537 = vmatprep.subr.mxu0 0.0
          %2538 = vmatpush1.msra.mxu0 0.0
          %2539 = vmatprep.subr.mxu0 0.0
          %2540 = vmatpush1.msra.mxu0 0.0
          %2541 = vmatprep.subr.mxu0 0.0
          %2542 = vmatpush1.msra.mxu0 0.0
          %2543 = vmatprep.subr.mxu0 0.0
          %2544 = vmatpush1.msra.mxu0 0.0
          %2545 = vmatprep.subr.mxu0 0.0
          %2546 = vmatpush1.msra.mxu0 0.0
          %2547 = vmatprep.subr.mxu0 0.0
          %2548 = vmatpush1.msra.mxu0 0.0
          %2549 = vmatprep.subr.mxu0 0.0
          %2550 = vmatpush1.msra.mxu0 0.0
          %2551 = vmatprep.subr.mxu0 0.0
          %2552 = vmatpush1.msra.mxu0 0.0
          %2553 = vmatprep.subr.mxu0 0.0
          %2554 = vmatpush1.msra.mxu0 0.0
          %2555 = vmatprep.subr.mxu0 0.0
          %2556 = vmatpush1.msra.mxu0 0.0
          %2557 = vmatprep.subr.mxu0 0.0
          %2558 = vmatpush1.msra.mxu0 0.0
          %2559 = vmatprep.subr.mxu0 0.0
          %2560 = vmatpush1.msra.mxu0 0.0
          %2561 = vmatprep.subr.mxu0 0.0
          %2562 = vmatpush1.msra.mxu0 0.0
          %2563 = vmatprep.subr.mxu0 0.0
          %2564 = vmatpush1.msra.mxu0 0.0
          %2565 = vmatprep.subr.mxu0 0.0
          %2566 = vmatpush1.msra.mxu0 0.0
          %2567 = vmatprep.subr.mxu0 0.0
          %2568 = vmatpush1.msra.mxu0 0.0
          %2569 = vmatprep.mubr.f32.mxu0 0.0
          %v2570 = vand.u32 %v1902, 4294901760
          %v2571 = vsub.f32 %v1902, %v2570
          %2572 = vmatmul.mubr.f32.gmra.mrb[0].mxu0 %v2571
          %v2573 = vpop.f32.mrb[0].mxu0
          %v2574 = vadd.f32 %v2500, %v2573
          %v2575 = vpop.f32.mrb[0].mxu0
          %2576 = vdwg.mxu0
          %2577 = vmatprep.subr.mxu0 0.0
          %v2578 = vand.u32 %v2350, 4294901760
          %2579 = vmatpush1.msra.mxu0 %v2578
          %2580 = vmatprep.subr.mxu0 0.0
          %2581 = vmatpush1.msra.mxu0 0.0
          %2582 = vmatprep.subr.mxu0 0.0
          %2583 = vmatpush1.msra.mxu0 0.0
          %2584 = vmatprep.subr.mxu0 0.0
          %2585 = vmatpush1.msra.mxu0 0.0
          %2586 = vmatprep.subr.mxu0 0.0
          %2587 = vmatpush1.msra.mxu0 0.0
          %2588 = vmatprep.subr.mxu0 0.0
          %2589 = vmatpush1.msra.mxu0 0.0
          %2590 = vmatprep.subr.mxu0 0.0
          %2591 = vmatpush1.msra.mxu0 0.0
          %2592 = vmatprep.subr.mxu0 0.0
          %2593 = vmatpush1.msra.mxu0 0.0
          %2594 = vmatprep.subr.mxu0 0.0
          %2595 = vmatpush1.msra.mxu0 0.0
          %2596 = vmatprep.subr.mxu0 0.0
          %2597 = vmatpush1.msra.mxu0 0.0
          %2598 = vmatprep.subr.mxu0 0.0
          %2599 = vmatpush1.msra.mxu0 0.0
          %2600 = vmatprep.subr.mxu0 0.0
          %2601 = vmatpush1.msra.mxu0 0.0
          %2602 = vmatprep.subr.mxu0 0.0
          %2603 = vmatpush1.msra.mxu0 0.0
          %2604 = vmatprep.subr.mxu0 0.0
          %2605 = vmatpush1.msra.mxu0 0.0
          %2606 = vmatprep.subr.mxu0 0.0
          %2607 = vmatpush1.msra.mxu0 0.0
          %2608 = vmatprep.subr.mxu0 0.0
          %2609 = vmatpush1.msra.mxu0 0.0
          %2610 = vmatprep.subr.mxu0 0.0
          %2611 = vmatpush1.msra.mxu0 0.0
          %2612 = vmatprep.subr.mxu0 0.0
          %2613 = vmatpush1.msra.mxu0 0.0
          %2614 = vmatprep.subr.mxu0 0.0
          %2615 = vmatpush1.msra.mxu0 0.0
          %2616 = vmatprep.subr.mxu0 0.0
          %2617 = vmatpush1.msra.mxu0 0.0
          %2618 = vmatprep.subr.mxu0 0.0
          %2619 = vmatpush1.msra.mxu0 0.0
          %2620 = vmatprep.subr.mxu0 0.0
          %2621 = vmatpush1.msra.mxu0 0.0
          %2622 = vmatprep.subr.mxu0 0.0
          %2623 = vmatpush1.msra.mxu0 0.0
          %2624 = vmatprep.subr.mxu0 0.0
          %2625 = vmatpush1.msra.mxu0 0.0
          %2626 = vmatprep.subr.mxu0 0.0
          %2627 = vmatpush1.msra.mxu0 0.0
          %2628 = vmatprep.subr.mxu0 0.0
          %2629 = vmatpush1.msra.mxu0 0.0
          %2630 = vmatprep.subr.mxu0 0.0
          %2631 = vmatpush1.msra.mxu0 0.0
          %2632 = vmatprep.subr.mxu0 0.0
          %2633 = vmatpush1.msra.mxu0 0.0
          %2634 = vmatprep.subr.mxu0 0.0
          %2635 = vmatpush1.msra.mxu0 0.0
          %2636 = vmatprep.subr.mxu0 0.0
          %2637 = vmatpush1.msra.mxu0 0.0
          %2638 = vmatprep.subr.mxu0 0.0
          %2639 = vmatpush1.msra.mxu0 0.0
          %2640 = vmatprep.subr.mxu0 0.0
          %2641 = vmatpush1.msra.mxu0 0.0
          %2642 = vmatprep.mubr.f32.mxu0 0.0
          %v2643 = vand.u32 %v1902, 4294901760
          %v2644 = vsub.f32 %v1902, %v2643
          %v2645 = vand.u32 %v2644, 4294901760
          %2646 = vmatmul.mubr.f32.gmra.mrb[0].mxu0 %v2645
          %v2647 = vpop.f32.mrb[0].mxu0
          %v2648 = vadd.f32 %v2574, %v2647
          %v2649 = vpop.f32.mrb[0].mxu0
          %2650 = vdwg.mxu0
          %2651 = vmatprep.subr.mxu0 0.0
          %v2652 = vand.u32 %v2350, 4294901760
          %v2653 = vsub.f32 %v2350, %v2652
          %v2654 = vand.u32 %v2653, 4294901760
          %2655 = vmatpush1.msra.mxu0 %v2654
          %2656 = vmatprep.subr.mxu0 0.0
          %2657 = vmatpush1.msra.mxu0 0.0
          %2658 = vmatprep.subr.mxu0 0.0
          %2659 = vmatpush1.msra.mxu0 0.0
          %2660 = vmatprep.subr.mxu0 0.0
          %2661 = vmatpush1.msra.mxu0 0.0
          %2662 = vmatprep.subr.mxu0 0.0
          %2663 = vmatpush1.msra.mxu0 0.0
          %2664 = vmatprep.subr.mxu0 0.0
          %2665 = vmatpush1.msra.mxu0 0.0
          %2666 = vmatprep.subr.mxu0 0.0
          %2667 = vmatpush1.msra.mxu0 0.0
          %2668 = vmatprep.subr.mxu0 0.0
          %2669 = vmatpush1.msra.mxu0 0.0
          %2670 = vmatprep.subr.mxu0 0.0
          %2671 = vmatpush1.msra.mxu0 0.0
          %2672 = vmatprep.subr.mxu0 0.0
          %2673 = vmatpush1.msra.mxu0 0.0
          %2674 = vmatprep.subr.mxu0 0.0
          %2675 = vmatpush1.msra.mxu0 0.0
          %2676 = vmatprep.subr.mxu0 0.0
          %2677 = vmatpush1.msra.mxu0 0.0
          %2678 = vmatprep.subr.mxu0 0.0
          %2679 = vmatpush1.msra.mxu0 0.0
          %2680 = vmatprep.subr.mxu0 0.0
          %2681 = vmatpush1.msra.mxu0 0.0
          %2682 = vmatprep.subr.mxu0 0.0
          %2683 = vmatpush1.msra.mxu0 0.0
          %2684 = vmatprep.subr.mxu0 0.0
          %2685 = vmatpush1.msra.mxu0 0.0
          %2686 = vmatprep.subr.mxu0 0.0
          %2687 = vmatpush1.msra.mxu0 0.0
          %2688 = vmatprep.subr.mxu0 0.0
          %2689 = vmatpush1.msra.mxu0 0.0
          %2690 = vmatprep.subr.mxu0 0.0
          %2691 = vmatpush1.msra.mxu0 0.0
          %2692 = vmatprep.subr.mxu0 0.0
          %2693 = vmatpush1.msra.mxu0 0.0
          %2694 = vmatprep.subr.mxu0 0.0
          %2695 = vmatpush1.msra.mxu0 0.0
          %2696 = vmatprep.subr.mxu0 0.0
          %2697 = vmatpush1.msra.mxu0 0.0
          %2698 = vmatprep.subr.mxu0 0.0
          %2699 = vmatpush1.msra.mxu0 0.0
          %2700 = vmatprep.subr.mxu0 0.0
          %2701 = vmatpush1.msra.mxu0 0.0
          %2702 = vmatprep.subr.mxu0 0.0
          %2703 = vmatpush1.msra.mxu0 0.0
          %2704 = vmatprep.subr.mxu0 0.0
          %2705 = vmatpush1.msra.mxu0 0.0
          %2706 = vmatprep.subr.mxu0 0.0
          %2707 = vmatpush1.msra.mxu0 0.0
          %2708 = vmatprep.subr.mxu0 0.0
          %2709 = vmatpush1.msra.mxu0 0.0
          %2710 = vmatprep.subr.mxu0 0.0
          %2711 = vmatpush1.msra.mxu0 0.0
          %2712 = vmatprep.subr.mxu0 0.0
          %2713 = vmatpush1.msra.mxu0 0.0
          %2714 = vmatprep.subr.mxu0 0.0
          %2715 = vmatpush1.msra.mxu0 0.0
          %2716 = vmatprep.subr.mxu0 0.0
          %2717 = vmatpush1.msra.mxu0 0.0
          %2718 = vmatprep.mubr.f32.mxu0 0.0
          %v2719 = vand.u32 %v1902, 4294901760
          %2720 = vmatmul.mubr.f32.gmra.mrb[0].mxu0 %v2719
          %v2721 = vpop.f32.mrb[0].mxu0
          %v2722 = vadd.f32 %v2648, %v2721
          %v2723 = vpop.f32.mrb[0].mxu0
          %2724 = vdwg.mxu0
          %2725 = vmatprep.subr.mxu0 0.0
          %v2726 = vand.u32 %v2350, 4294901760
          %2727 = vmatpush1.msra.mxu0 %v2726
          %2728 = vmatprep.subr.mxu0 0.0
          %2729 = vmatpush1.msra.mxu0 0.0
          %2730 = vmatprep.subr.mxu0 0.0
          %2731 = vmatpush1.msra.mxu0 0.0
          %2732 = vmatprep.subr.mxu0 0.0
          %2733 = vmatpush1.msra.mxu0 0.0
          %2734 = vmatprep.subr.mxu0 0.0
          %2735 = vmatpush1.msra.mxu0 0.0
          %2736 = vmatprep.subr.mxu0 0.0
          %2737 = vmatpush1.msra.mxu0 0.0
          %2738 = vmatprep.subr.mxu0 0.0
          %2739 = vmatpush1.msra.mxu0 0.0
          %2740 = vmatprep.subr.mxu0 0.0
          %2741 = vmatpush1.msra.mxu0 0.0
          %2742 = vmatprep.subr.mxu0 0.0
          %2743 = vmatpush1.msra.mxu0 0.0
          %2744 = vmatprep.subr.mxu0 0.0
          %2745 = vmatpush1.msra.mxu0 0.0
          %2746 = vmatprep.subr.mxu0 0.0
          %2747 = vmatpush1.msra.mxu0 0.0
          %2748 = vmatprep.subr.mxu0 0.0
          %2749 = vmatpush1.msra.mxu0 0.0
          %2750 = vmatprep.subr.mxu0 0.0
          %2751 = vmatpush1.msra.mxu0 0.0
          %2752 = vmatprep.subr.mxu0 0.0
          %2753 = vmatpush1.msra.mxu0 0.0
          %2754 = vmatprep.subr.mxu0 0.0
          %2755 = vmatpush1.msra.mxu0 0.0
          %2756 = vmatprep.subr.mxu0 0.0
          %2757 = vmatpush1.msra.mxu0 0.0
          %2758 = vmatprep.subr.mxu0 0.0
          %2759 = vmatpush1.msra.mxu0 0.0
          %2760 = vmatprep.subr.mxu0 0.0
          %2761 = vmatpush1.msra.mxu0 0.0
          %2762 = vmatprep.subr.mxu0 0.0
          %2763 = vmatpush1.msra.mxu0 0.0
          %2764 = vmatprep.subr.mxu0 0.0
          %2765 = vmatpush1.msra.mxu0 0.0
          %2766 = vmatprep.subr.mxu0 0.0
          %2767 = vmatpush1.msra.mxu0 0.0
          %2768 = vmatprep.subr.mxu0 0.0
          %2769 = vmatpush1.msra.mxu0 0.0
          %2770 = vmatprep.subr.mxu0 0.0
          %2771 = vmatpush1.msra.mxu0 0.0
          %2772 = vmatprep.subr.mxu0 0.0
          %2773 = vmatpush1.msra.mxu0 0.0
          %2774 = vmatprep.subr.mxu0 0.0
          %2775 = vmatpush1.msra.mxu0 0.0
          %2776 = vmatprep.subr.mxu0 0.0
          %2777 = vmatpush1.msra.mxu0 0.0
          %2778 = vmatprep.subr.mxu0 0.0
          %2779 = vmatpush1.msra.mxu0 0.0
          %2780 = vmatprep.subr.mxu0 0.0
          %2781 = vmatpush1.msra.mxu0 0.0
          %2782 = vmatprep.subr.mxu0 0.0
          %2783 = vmatpush1.msra.mxu0 0.0
          %2784 = vmatprep.subr.mxu0 0.0
          %2785 = vmatpush1.msra.mxu0 0.0
          %2786 = vmatprep.subr.mxu0 0.0
          %2787 = vmatpush1.msra.mxu0 0.0
          %2788 = vmatprep.subr.mxu0 0.0
          %2789 = vmatpush1.msra.mxu0 0.0
          %2790 = vmatprep.mubr.f32.mxu0 0.0
          %v2791 = vand.u32 %v1902, 4294901760
          %2792 = vmatmul.mubr.f32.gmra.mrb[0].mxu0 %v2791
          %v2793 = vpop.f32.mrb[0].mxu0
          %v2794 = vadd.f32 %v2722, %v2793
          %v2795 = vpop.f32.mrb[0].mxu0
          %2796 = vdwg.mxu0
          %v2797 = vld [vmem:[#allocation4] sm:$0x3]
          %v2799 = vrot.slane %v2794, 7
          %vm2801 = vcmask 1040384
          %v2802 = vsel %vm2801, %v2347, %v2799
          %v2803 = vadd.f32 %v2797, %v2802
          %2804 = vst [vmem:[#allocation4] sm:$0x3] %v2803
          %2805 = vst [vmem:[%s1776] sm:$0xff] %v1891
        $region164: #{tpu_custom_call.1} parent=83 // pred_fallthru
          _
        %p2806 = scmp.eq.s32.totalorder %s45, 2
        // Predicated region
        $region173: #{tpu_custom_call.1} parent=83 // pred_check
          %p2807 = pneg %p2806
        $region174: #{tpu_custom_call.1} parent=83 // pred_check_branch
          %2809 = sbr.rel (%p2807) target = $region176
        $region175: #{tpu_custom_call.1} parent=83 // pred_region
          // Predicated region
          $region177: #{tpu_custom_call.1} parent=175 // pred_check
            %p2810 = pneg %p762
          $region178: #{tpu_custom_call.1} parent=175 // pred_check_branch
            %2812 = sbr.rel (%p2810) target = $region180
          $region179: #{tpu_custom_call.1} parent=175 // pred_region
            %v2813 = vld [vmem:[#allocation4] sm:$0x1]
            %v2814 = vmul.f32 %v2813, 0.125
            %v2815 = vld [vmem:[#allocation4 + $0x1] sm:$0x1]
            %v2816 = vmul.f32 %v2815, 0.125
            %v2817 = vmul.f32 %v2814, %v2814
            %v2818 = vsub.f32 %v2816, %v2817
            %v2819 = vmax.f32 %v2818, 0.0
            %v2820 = vld [vmem:[#allocation16] sm:$0x1]
            %v2821 = vadd.f32 %v2819, 1e-05
            %v2822 = vrsqrt.pop %v2821
            %v2823 = vmul.f32 %v2820, %v2822
            %v2824 = vld [vmem:[#allocation18] sm:$0x1]
            %v2825 = vmul.f32 %v2814, %v2823
            %v2826 = vsub.f32 %v2824, %v2825
            %v2828 = vlaneseq
            %v2829 = vshrl.u32 %v2828, 7
            %v2830 = vsub.s32 0, %v2829
            %v2831 = vrot.slane %v2826, %v2830
            %vm2833 = vcmask 1040384
            %v2834 = vsel %vm2833, %v2823, %v2831
            %2835 = vst [vmem:[#allocation4] sm:$0x3] %v2834
          $region180: #{tpu_custom_call.1} parent=175 // pred_fallthru
            _
          %s2836 = smul.u32 %s46, 8
          %s2837 = scalar_lea.vmem [#allocation2], %s2836
          %v2838 = vld [vmem:[%s2837] sm:$0xff]
          %v2839 = vld [vmem:[#allocation4] sm:$0x1]
          %v2840 = vlaneseq
          %v2841 = vshrl.u32 %v2840, 7
          %v2842 = vsub.s32 0, %v2841
          %v2843 = vrot.slane %v2839, %v2842
          %v2844 = vmul.f32 %v2838, %v2843
          %v2845 = vld [vmem:[#allocation4 + $0x1] sm:$0x1]
          %v2846 = vlaneseq
          %v2847 = vshrl.u32 %v2846, 7
          %v2848 = vsub.s32 0, %v2847
          %v2849 = vrot.slane %v2845, %v2848
          %v2850 = vadd.f32 %v2844, %v2849
          %v2851 = vmax.f32 %v2850, 0.0
          %v2852 = vpack.c.bf16 %v2851, %v2851
          %v2853 = vld [vmem:[#allocation19] sm:$0xf]
          %v2854 = vld [vmem:[#allocation19 + $0x4] sm:$0xf]
          %v2855 = vld [vmem:[#allocation19 + $0x8] sm:$0xf]
          %v2856 = vld [vmem:[#allocation19 + $0xc] sm:$0xf]
          %v2857 = vld [vmem:[#allocation19 + $0x10] sm:$0xf]
          %v2858 = vld [vmem:[#allocation19 + $0x14] sm:$0xf]
          %v2859 = vld [vmem:[#allocation19 + $0x18] sm:$0xf]
          %v2860 = vld [vmem:[#allocation19 + $0x1c] sm:$0xf]
          %v2861 = vld [vmem:[#allocation19 + $0x20] sm:$0xf]
          %v2862 = vld [vmem:[#allocation19 + $0x24] sm:$0xf]
          %v2863 = vld [vmem:[#allocation19 + $0x28] sm:$0xf]
          %v2864 = vld [vmem:[#allocation19 + $0x2c] sm:$0xf]
          %v2865 = vld [vmem:[#allocation19 + $0x30] sm:$0xf]
          %v2866 = vld [vmem:[#allocation19 + $0x34] sm:$0xf]
          %v2867 = vld [vmem:[#allocation19 + $0x38] sm:$0xf]
          %v2868 = vld [vmem:[#allocation19 + $0x3c] sm:$0xf]
          %v2869 = vld [vmem:[#allocation21] sm:$0x1]
          %v2871 = vlaneseq
          %v2872 = vshrl.u32 %v2871, 7
          %v2873 = vsub.s32 0, %v2872
          %v2874 = vrot.slane %v2869, %v2873
          %v2892 = vunpack.c.l.b16 %v2853
          %v2893 = vunpack.c.l.b16 %v2854
          %v2894 = vunpack.c.l.b16 %v2855
          %v2895 = vunpack.c.l.b16 %v2856
          %v2896 = vunpack.c.l.b16 %v2857
          %v2897 = vunpack.c.l.b16 %v2858
          %v2898 = vunpack.c.l.b16 %v2859
          %v2899 = vunpack.c.l.b16 %v2860
          %v2900 = vunpack.c.l.b16 %v2861
          %v2901 = vunpack.c.l.b16 %v2862
          %v2902 = vunpack.c.l.b16 %v2863
          %v2903 = vunpack.c.l.b16 %v2864
          %v2904 = vunpack.c.l.b16 %v2865
          %v2905 = vunpack.c.l.b16 %v2866
          %v2906 = vunpack.c.l.b16 %v2867
          %v2907 = vunpack.c.l.b16 %v2868
          %v2908 = vpack.c.b16 %v2893, %v2892
          %v2909 = vpack.c.b16 %v2895, %v2894
          %v2910 = vpack.c.b16 %v2897, %v2896
          %v2911 = vpack.c.b16 %v2899, %v2898
          %v2912 = vpack.c.b16 %v2901, %v2900
          %v2913 = vpack.c.b16 %v2903, %v2902
          %v2914 = vpack.c.b16 %v2905, %v2904
          %v2915 = vpack.c.b16 %v2907, %v2906
          %2924 = vmatprep.subr.bf16.mxu0 0
          %2925 = vmatpush1.bf16.msra.mxu0 %v2908
          %2926 = vmatprep.subr.bf16.mxu0 0
          %2927 = vmatpush1.bf16.msra.mxu0 %v2909
          %2928 = vmatprep.subr.bf16.mxu0 0
          %2929 = vmatpush1.bf16.msra.mxu0 %v2910
          %2930 = vmatprep.subr.bf16.mxu0 0
          %2931 = vmatpush1.bf16.msra.mxu0 %v2911
          %2932 = vmatprep.subr.bf16.mxu0 0
          %2933 = vmatpush1.bf16.msra.mxu0 %v2912
          %2934 = vmatprep.subr.bf16.mxu0 0
          %2935 = vmatpush1.bf16.msra.mxu0 %v2913
          %2936 = vmatprep.subr.bf16.mxu0 0
          %2937 = vmatpush1.bf16.msra.mxu0 %v2914
          %2938 = vmatprep.subr.bf16.mxu0 0
          %2939 = vmatpush1.bf16.msra.mxu0 %v2915
          %2940 = vmatprep.subr.bf16.mxu0 0
          %2941 = vmatpush1.bf16.msra.mxu0 0
          %2942 = vmatprep.subr.bf16.mxu0 0
          %2943 = vmatpush1.bf16.msra.mxu0 0
          %2944 = vmatprep.subr.bf16.mxu0 0
          %2945 = vmatpush1.bf16.msra.mxu0 0
          %2946 = vmatprep.subr.bf16.mxu0 0
          %2947 = vmatpush1.bf16.msra.mxu0 0
          %2948 = vmatprep.subr.bf16.mxu0 0
          %2949 = vmatpush1.bf16.msra.mxu0 0
          %2950 = vmatprep.subr.bf16.mxu0 0
          %2951 = vmatpush1.bf16.msra.mxu0 0
          %2952 = vmatprep.subr.bf16.mxu0 0
          %2953 = vmatpush1.bf16.msra.mxu0 0
          %2954 = vmatprep.subr.bf16.mxu0 0
          %2955 = vmatpush1.bf16.msra.mxu0 0
          %2956 = vmatprep.mubr.bf16.mxu0 0
          %2957 = vmatmul.mubr.bf16.gmra.mrb[0].mxu0 %v2852
          %v2958 = vpop.f32.mrb[0].mxu0
          %v2959 = vadd.f32 %v2874, %v2958
          %v2960 = vpop.f32.mrb[0].mxu0
          %v2961 = vpop.f32.mrb[0].mxu0
          %v2962 = vpop.f32.mrb[0].mxu0
          %2963 = vdwg.mxu0
          // Predicated region
          $region181: #{tpu_custom_call.1} parent=175 // pred_check
            %p2964 = pneg %p762
          $region182: #{tpu_custom_call.1} parent=175 // pred_check_branch
            %2966 = sbr.rel (%p2964) target = $region184
          $region183: #{tpu_custom_call.1} parent=175 // pred_region
            %2967 = vst [vmem:[#allocation5] sm:$0x3] 0.0
          $region184: #{tpu_custom_call.1} parent=175 // pred_fallthru
            _
          %vm2968 = vcmask 64512
          %v2970 = vsel %vm2968, 1.0, 0
          %2972 = vmatprep.subr.mxu0 0.0
          %v2973 = vand.u32 %v2959, 4294901760
          %2974 = vmatpush1.msra.mxu0 %v2973
          %2975 = vmatprep.subr.mxu0 0.0
          %2976 = vmatpush1.msra.mxu0 0.0
          %2977 = vmatprep.subr.mxu0 0.0
          %2978 = vmatpush1.msra.mxu0 0.0
          %2979 = vmatprep.subr.mxu0 0.0
          %2980 = vmatpush1.msra.mxu0 0.0
          %2981 = vmatprep.subr.mxu0 0.0
          %2982 = vmatpush1.msra.mxu0 0.0
          %2983 = vmatprep.subr.mxu0 0.0
          %2984 = vmatpush1.msra.mxu0 0.0
          %2985 = vmatprep.subr.mxu0 0.0
          %2986 = vmatpush1.msra.mxu0 0.0
          %2987 = vmatprep.subr.mxu0 0.0
          %2988 = vmatpush1.msra.mxu0 0.0
          %2989 = vmatprep.subr.mxu0 0.0
          %2990 = vmatpush1.msra.mxu0 0.0
          %2991 = vmatprep.subr.mxu0 0.0
          %2992 = vmatpush1.msra.mxu0 0.0
          %2993 = vmatprep.subr.mxu0 0.0
          %2994 = vmatpush1.msra.mxu0 0.0
          %2995 = vmatprep.subr.mxu0 0.0
          %2996 = vmatpush1.msra.mxu0 0.0
          %2997 = vmatprep.subr.mxu0 0.0
          %2998 = vmatpush1.msra.mxu0 0.0
          %2999 = vmatprep.subr.mxu0 0.0
          %3000 = vmatpush1.msra.mxu0 0.0
          %3001 = vmatprep.subr.mxu0 0.0
          %3002 = vmatpush1.msra.mxu0 0.0
          %3003 = vmatprep.subr.mxu0 0.0
          %3004 = vmatpush1.msra.mxu0 0.0
          %3005 = vmatprep.subr.mxu0 0.0
          %3006 = vmatpush1.msra.mxu0 0.0
          %3007 = vmatprep.subr.mxu0 0.0
          %3008 = vmatpush1.msra.mxu0 0.0
          %3009 = vmatprep.subr.mxu0 0.0
          %3010 = vmatpush1.msra.mxu0 0.0
          %3011 = vmatprep.subr.mxu0 0.0
          %3012 = vmatpush1.msra.mxu0 0.0
          %3013 = vmatprep.subr.mxu0 0.0
          %3014 = vmatpush1.msra.mxu0 0.0
          %3015 = vmatprep.subr.mxu0 0.0
          %3016 = vmatpush1.msra.mxu0 0.0
          %3017 = vmatprep.subr.mxu0 0.0
          %3018 = vmatpush1.msra.mxu0 0.0
          %3019 = vmatprep.subr.mxu0 0.0
          %3020 = vmatpush1.msra.mxu0 0.0
          %3021 = vmatprep.subr.mxu0 0.0
          %3022 = vmatpush1.msra.mxu0 0.0
          %3023 = vmatprep.subr.mxu0 0.0
          %3024 = vmatpush1.msra.mxu0 0.0
          %3025 = vmatprep.subr.mxu0 0.0
          %3026 = vmatpush1.msra.mxu0 0.0
          %3027 = vmatprep.subr.mxu0 0.0
          %3028 = vmatpush1.msra.mxu0 0.0
          %3029 = vmatprep.subr.mxu0 0.0
          %3030 = vmatpush1.msra.mxu0 0.0
          %3031 = vmatprep.subr.mxu0 0.0
          %3032 = vmatpush1.msra.mxu0 0.0
          %3033 = vmatprep.subr.mxu0 0.0
          %3034 = vmatpush1.msra.mxu0 0.0
          %3035 = vmatprep.subr.mxu0 0.0
          %3036 = vmatpush1.msra.mxu0 0.0
          %3037 = vmatprep.mubr.f32.mxu0 0.0
          %v3038 = vand.u32 %v2970, 4294901760
          %v3039 = vsub.f32 %v2970, %v3038
          %v3040 = vand.u32 %v3039, 4294901760
          %v3041 = vsub.f32 %v3039, %v3040
          %v3042 = vand.u32 %v3041, 4294901760
          %3043 = vmatmul.mubr.f32.gmra.mrb[0].mxu0 %v3042
          %v3044 = vpop.f32.mrb[0].mxu0
          %v3045 = vadd.f32 0.0, %v3044
          %v3046 = vpop.f32.mrb[0].mxu0
          %3047 = vdwg.mxu0
          %3048 = vmatprep.subr.mxu0 0.0
          %v3049 = vand.u32 %v2959, 4294901760
          %v3050 = vsub.f32 %v2959, %v3049
          %v3051 = vand.u32 %v3050, 4294901760
          %v3052 = vsub.f32 %v3050, %v3051
          %v3053 = vand.u32 %v3052, 4294901760
          %3054 = vmatpush1.msra.mxu0 %v3053
          %3055 = vmatprep.subr.mxu0 0.0
          %3056 = vmatpush1.msra.mxu0 0.0
          %3057 = vmatprep.subr.mxu0 0.0
          %3058 = vmatpush1.msra.mxu0 0.0
          %3059 = vmatprep.subr.mxu0 0.0
          %3060 = vmatpush1.msra.mxu0 0.0
          %3061 = vmatprep.subr.mxu0 0.0
          %3062 = vmatpush1.msra.mxu0 0.0
          %3063 = vmatprep.subr.mxu0 0.0
          %3064 = vmatpush1.msra.mxu0 0.0
          %3065 = vmatprep.subr.mxu0 0.0
          %3066 = vmatpush1.msra.mxu0 0.0
          %3067 = vmatprep.subr.mxu0 0.0
          %3068 = vmatpush1.msra.mxu0 0.0
          %3069 = vmatprep.subr.mxu0 0.0
          %3070 = vmatpush1.msra.mxu0 0.0
          %3071 = vmatprep.subr.mxu0 0.0
          %3072 = vmatpush1.msra.mxu0 0.0
          %3073 = vmatprep.subr.mxu0 0.0
          %3074 = vmatpush1.msra.mxu0 0.0
          %3075 = vmatprep.subr.mxu0 0.0
          %3076 = vmatpush1.msra.mxu0 0.0
          %3077 = vmatprep.subr.mxu0 0.0
          %3078 = vmatpush1.msra.mxu0 0.0
          %3079 = vmatprep.subr.mxu0 0.0
          %3080 = vmatpush1.msra.mxu0 0.0
          %3081 = vmatprep.subr.mxu0 0.0
          %3082 = vmatpush1.msra.mxu0 0.0
          %3083 = vmatprep.subr.mxu0 0.0
          %3084 = vmatpush1.msra.mxu0 0.0
          %3085 = vmatprep.subr.mxu0 0.0
          %3086 = vmatpush1.msra.mxu0 0.0
          %3087 = vmatprep.subr.mxu0 0.0
          %3088 = vmatpush1.msra.mxu0 0.0
          %3089 = vmatprep.subr.mxu0 0.0
          %3090 = vmatpush1.msra.mxu0 0.0
          %3091 = vmatprep.subr.mxu0 0.0
          %3092 = vmatpush1.msra.mxu0 0.0
          %3093 = vmatprep.subr.mxu0 0.0
          %3094 = vmatpush1.msra.mxu0 0.0
          %3095 = vmatprep.subr.mxu0 0.0
          %3096 = vmatpush1.msra.mxu0 0.0
          %3097 = vmatprep.subr.mxu0 0.0
          %3098 = vmatpush1.msra.mxu0 0.0
          %3099 = vmatprep.subr.mxu0 0.0
          %3100 = vmatpush1.msra.mxu0 0.0
          %3101 = vmatprep.subr.mxu0 0.0
          %3102 = vmatpush1.msra.mxu0 0.0
          %3103 = vmatprep.subr.mxu0 0.0
          %3104 = vmatpush1.msra.mxu0 0.0
          %3105 = vmatprep.subr.mxu0 0.0
          %3106 = vmatpush1.msra.mxu0 0.0
          %3107 = vmatprep.subr.mxu0 0.0
          %3108 = vmatpush1.msra.mxu0 0.0
          %3109 = vmatprep.subr.mxu0 0.0
          %3110 = vmatpush1.msra.mxu0 0.0
          %3111 = vmatprep.subr.mxu0 0.0
          %3112 = vmatpush1.msra.mxu0 0.0
          %3113 = vmatprep.subr.mxu0 0.0
          %3114 = vmatpush1.msra.mxu0 0.0
          %3115 = vmatprep.subr.mxu0 0.0
          %3116 = vmatpush1.msra.mxu0 0.0
          %3117 = vmatprep.mubr.f32.mxu0 0.0
          %v3118 = vand.u32 %v2970, 4294901760
          %3119 = vmatmul.mubr.f32.gmra.mrb[0].mxu0 %v3118
          %v3120 = vpop.f32.mrb[0].mxu0
          %v3121 = vadd.f32 %v3045, %v3120
          %v3122 = vpop.f32.mrb[0].mxu0
          %3123 = vdwg.mxu0
          %3124 = vmatprep.subr.mxu0 0.0
          %v3125 = vand.u32 %v2959, 4294901760
          %v3126 = vsub.f32 %v2959, %v3125
          %3127 = vmatpush1.msra.mxu0 %v3126
          %3128 = vmatprep.subr.mxu0 0.0
          %3129 = vmatpush1.msra.mxu0 0.0
          %3130 = vmatprep.subr.mxu0 0.0
          %3131 = vmatpush1.msra.mxu0 0.0
          %3132 = vmatprep.subr.mxu0 0.0
          %3133 = vmatpush1.msra.mxu0 0.0
          %3134 = vmatprep.subr.mxu0 0.0
          %3135 = vmatpush1.msra.mxu0 0.0
          %3136 = vmatprep.subr.mxu0 0.0
          %3137 = vmatpush1.msra.mxu0 0.0
          %3138 = vmatprep.subr.mxu0 0.0
          %3139 = vmatpush1.msra.mxu0 0.0
          %3140 = vmatprep.subr.mxu0 0.0
          %3141 = vmatpush1.msra.mxu0 0.0
          %3142 = vmatprep.subr.mxu0 0.0
          %3143 = vmatpush1.msra.mxu0 0.0
          %3144 = vmatprep.subr.mxu0 0.0
          %3145 = vmatpush1.msra.mxu0 0.0
          %3146 = vmatprep.subr.mxu0 0.0
          %3147 = vmatpush1.msra.mxu0 0.0
          %3148 = vmatprep.subr.mxu0 0.0
          %3149 = vmatpush1.msra.mxu0 0.0
          %3150 = vmatprep.subr.mxu0 0.0
          %3151 = vmatpush1.msra.mxu0 0.0
          %3152 = vmatprep.subr.mxu0 0.0
          %3153 = vmatpush1.msra.mxu0 0.0
          %3154 = vmatprep.subr.mxu0 0.0
          %3155 = vmatpush1.msra.mxu0 0.0
          %3156 = vmatprep.subr.mxu0 0.0
          %3157 = vmatpush1.msra.mxu0 0.0
          %3158 = vmatprep.subr.mxu0 0.0
          %3159 = vmatpush1.msra.mxu0 0.0
          %3160 = vmatprep.subr.mxu0 0.0
          %3161 = vmatpush1.msra.mxu0 0.0
          %3162 = vmatprep.subr.mxu0 0.0
          %3163 = vmatpush1.msra.mxu0 0.0
          %3164 = vmatprep.subr.mxu0 0.0
          %3165 = vmatpush1.msra.mxu0 0.0
          %3166 = vmatprep.subr.mxu0 0.0
          %3167 = vmatpush1.msra.mxu0 0.0
          %3168 = vmatprep.subr.mxu0 0.0
          %3169 = vmatpush1.msra.mxu0 0.0
          %3170 = vmatprep.subr.mxu0 0.0
          %3171 = vmatpush1.msra.mxu0 0.0
          %3172 = vmatprep.subr.mxu0 0.0
          %3173 = vmatpush1.msra.mxu0 0.0
          %3174 = vmatprep.subr.mxu0 0.0
          %3175 = vmatpush1.msra.mxu0 0.0
          %3176 = vmatprep.subr.mxu0 0.0
          %3177 = vmatpush1.msra.mxu0 0.0
          %3178 = vmatprep.subr.mxu0 0.0
          %3179 = vmatpush1.msra.mxu0 0.0
          %3180 = vmatprep.subr.mxu0 0.0
          %3181 = vmatpush1.msra.mxu0 0.0
          %3182 = vmatprep.subr.mxu0 0.0
          %3183 = vmatpush1.msra.mxu0 0.0
          %3184 = vmatprep.subr.mxu0 0.0
          %3185 = vmatpush1.msra.mxu0 0.0
          %3186 = vmatprep.subr.mxu0 0.0
          %3187 = vmatpush1.msra.mxu0 0.0
          %3188 = vmatprep.subr.mxu0 0.0
          %3189 = vmatpush1.msra.mxu0 0.0
          %3190 = vmatprep.mubr.f32.mxu0 0.0
          %v3191 = vand.u32 %v2970, 4294901760
          %v3192 = vsub.f32 %v2970, %v3191
          %3193 = vmatmul.mubr.f32.gmra.mrb[0].mxu0 %v3192
          %v3194 = vpop.f32.mrb[0].mxu0
          %v3195 = vadd.f32 %v3121, %v3194
          %v3196 = vpop.f32.mrb[0].mxu0
          %3197 = vdwg.mxu0
          %3198 = vmatprep.subr.mxu0 0.0
          %v3199 = vand.u32 %v2959, 4294901760
          %3200 = vmatpush1.msra.mxu0 %v3199
          %3201 = vmatprep.subr.mxu0 0.0
          %3202 = vmatpush1.msra.mxu0 0.0
          %3203 = vmatprep.subr.mxu0 0.0
          %3204 = vmatpush1.msra.mxu0 0.0
          %3205 = vmatprep.subr.mxu0 0.0
          %3206 = vmatpush1.msra.mxu0 0.0
          %3207 = vmatprep.subr.mxu0 0.0
          %3208 = vmatpush1.msra.mxu0 0.0
          %3209 = vmatprep.subr.mxu0 0.0
          %3210 = vmatpush1.msra.mxu0 0.0
          %3211 = vmatprep.subr.mxu0 0.0
          %3212 = vmatpush1.msra.mxu0 0.0
          %3213 = vmatprep.subr.mxu0 0.0
          %3214 = vmatpush1.msra.mxu0 0.0
          %3215 = vmatprep.subr.mxu0 0.0
          %3216 = vmatpush1.msra.mxu0 0.0
          %3217 = vmatprep.subr.mxu0 0.0
          %3218 = vmatpush1.msra.mxu0 0.0
          %3219 = vmatprep.subr.mxu0 0.0
          %3220 = vmatpush1.msra.mxu0 0.0
          %3221 = vmatprep.subr.mxu0 0.0
          %3222 = vmatpush1.msra.mxu0 0.0
          %3223 = vmatprep.subr.mxu0 0.0
          %3224 = vmatpush1.msra.mxu0 0.0
          %3225 = vmatprep.subr.mxu0 0.0
          %3226 = vmatpush1.msra.mxu0 0.0
          %3227 = vmatprep.subr.mxu0 0.0
          %3228 = vmatpush1.msra.mxu0 0.0
          %3229 = vmatprep.subr.mxu0 0.0
          %3230 = vmatpush1.msra.mxu0 0.0
          %3231 = vmatprep.subr.mxu0 0.0
          %3232 = vmatpush1.msra.mxu0 0.0
          %3233 = vmatprep.subr.mxu0 0.0
          %3234 = vmatpush1.msra.mxu0 0.0
          %3235 = vmatprep.subr.mxu0 0.0
          %3236 = vmatpush1.msra.mxu0 0.0
          %3237 = vmatprep.subr.mxu0 0.0
          %3238 = vmatpush1.msra.mxu0 0.0
          %3239 = vmatprep.subr.mxu0 0.0
          %3240 = vmatpush1.msra.mxu0 0.0
          %3241 = vmatprep.subr.mxu0 0.0
          %3242 = vmatpush1.msra.mxu0 0.0
          %3243 = vmatprep.subr.mxu0 0.0
          %3244 = vmatpush1.msra.mxu0 0.0
          %3245 = vmatprep.subr.mxu0 0.0
          %3246 = vmatpush1.msra.mxu0 0.0
          %3247 = vmatprep.subr.mxu0 0.0
          %3248 = vmatpush1.msra.mxu0 0.0
          %3249 = vmatprep.subr.mxu0 0.0
          %3250 = vmatpush1.msra.mxu0 0.0
          %3251 = vmatprep.subr.mxu0 0.0
          %3252 = vmatpush1.msra.mxu0 0.0
          %3253 = vmatprep.subr.mxu0 0.0
          %3254 = vmatpush1.msra.mxu0 0.0
          %3255 = vmatprep.subr.mxu0 0.0
          %3256 = vmatpush1.msra.mxu0 0.0
          %3257 = vmatprep.subr.mxu0 0.0
          %3258 = vmatpush1.msra.mxu0 0.0
          %3259 = vmatprep.subr.mxu0 0.0
          %3260 = vmatpush1.msra.mxu0 0.0
          %3261 = vmatprep.subr.mxu0 0.0
          %3262 = vmatpush1.msra.mxu0 0.0
          %3263 = vmatprep.mubr.f32.mxu0 0.0
          %v3264 = vand.u32 %v2970, 4294901760
          %v3265 = vsub.f32 %v2970, %v3264
          %v3266 = vand.u32 %v3265, 4294901760
          %3267 = vmatmul.mubr.f32.gmra.mrb[0].mxu0 %v3266
          %v3268 = vpop.f32.mrb[0].mxu0
          %v3269 = vadd.f32 %v3195, %v3268
          %v3270 = vpop.f32.mrb[0].mxu0
          %3271 = vdwg.mxu0
          %3272 = vmatprep.subr.mxu0 0.0
          %v3273 = vand.u32 %v2959, 4294901760
          %v3274 = vsub.f32 %v2959, %v3273
          %v3275 = vand.u32 %v3274, 4294901760
          %3276 = vmatpush1.msra.mxu0 %v3275
          %3277 = vmatprep.subr.mxu0 0.0
          %3278 = vmatpush1.msra.mxu0 0.0
          %3279 = vmatprep.subr.mxu0 0.0
          %3280 = vmatpush1.msra.mxu0 0.0
          %3281 = vmatprep.subr.mxu0 0.0
          %3282 = vmatpush1.msra.mxu0 0.0
          %3283 = vmatprep.subr.mxu0 0.0
          %3284 = vmatpush1.msra.mxu0 0.0
          %3285 = vmatprep.subr.mxu0 0.0
          %3286 = vmatpush1.msra.mxu0 0.0
          %3287 = vmatprep.subr.mxu0 0.0
          %3288 = vmatpush1.msra.mxu0 0.0
          %3289 = vmatprep.subr.mxu0 0.0
          %3290 = vmatpush1.msra.mxu0 0.0
          %3291 = vmatprep.subr.mxu0 0.0
          %3292 = vmatpush1.msra.mxu0 0.0
          %3293 = vmatprep.subr.mxu0 0.0
          %3294 = vmatpush1.msra.mxu0 0.0
          %3295 = vmatprep.subr.mxu0 0.0
          %3296 = vmatpush1.msra.mxu0 0.0
          %3297 = vmatprep.subr.mxu0 0.0
          %3298 = vmatpush1.msra.mxu0 0.0
          %3299 = vmatprep.subr.mxu0 0.0
          %3300 = vmatpush1.msra.mxu0 0.0
          %3301 = vmatprep.subr.mxu0 0.0
          %3302 = vmatpush1.msra.mxu0 0.0
          %3303 = vmatprep.subr.mxu0 0.0
          %3304 = vmatpush1.msra.mxu0 0.0
          %3305 = vmatprep.subr.mxu0 0.0
          %3306 = vmatpush1.msra.mxu0 0.0
          %3307 = vmatprep.subr.mxu0 0.0
          %3308 = vmatpush1.msra.mxu0 0.0
          %3309 = vmatprep.subr.mxu0 0.0
          %3310 = vmatpush1.msra.mxu0 0.0
          %3311 = vmatprep.subr.mxu0 0.0
          %3312 = vmatpush1.msra.mxu0 0.0
          %3313 = vmatprep.subr.mxu0 0.0
          %3314 = vmatpush1.msra.mxu0 0.0
          %3315 = vmatprep.subr.mxu0 0.0
          %3316 = vmatpush1.msra.mxu0 0.0
          %3317 = vmatprep.subr.mxu0 0.0
          %3318 = vmatpush1.msra.mxu0 0.0
          %3319 = vmatprep.subr.mxu0 0.0
          %3320 = vmatpush1.msra.mxu0 0.0
          %3321 = vmatprep.subr.mxu0 0.0
          %3322 = vmatpush1.msra.mxu0 0.0
          %3323 = vmatprep.subr.mxu0 0.0
          %3324 = vmatpush1.msra.mxu0 0.0
          %3325 = vmatprep.subr.mxu0 0.0
          %3326 = vmatpush1.msra.mxu0 0.0
          %3327 = vmatprep.subr.mxu0 0.0
          %3328 = vmatpush1.msra.mxu0 0.0
          %3329 = vmatprep.subr.mxu0 0.0
          %3330 = vmatpush1.msra.mxu0 0.0
          %3331 = vmatprep.subr.mxu0 0.0
          %3332 = vmatpush1.msra.mxu0 0.0
          %3333 = vmatprep.subr.mxu0 0.0
          %3334 = vmatpush1.msra.mxu0 0.0
          %3335 = vmatprep.subr.mxu0 0.0
          %3336 = vmatpush1.msra.mxu0 0.0
          %3337 = vmatprep.subr.mxu0 0.0
          %3338 = vmatpush1.msra.mxu0 0.0
          %3339 = vmatprep.mubr.f32.mxu0 0.0
          %v3340 = vand.u32 %v2970, 4294901760
          %3341 = vmatmul.mubr.f32.gmra.mrb[0].mxu0 %v3340
          %v3342 = vpop.f32.mrb[0].mxu0
          %v3343 = vadd.f32 %v3269, %v3342
          %v3344 = vpop.f32.mrb[0].mxu0
          %3345 = vdwg.mxu0
          %3346 = vmatprep.subr.mxu0 0.0
          %v3347 = vand.u32 %v2959, 4294901760
          %3348 = vmatpush1.msra.mxu0 %v3347
          %3349 = vmatprep.subr.mxu0 0.0
          %3350 = vmatpush1.msra.mxu0 0.0
          %3351 = vmatprep.subr.mxu0 0.0
          %3352 = vmatpush1.msra.mxu0 0.0
          %3353 = vmatprep.subr.mxu0 0.0
          %3354 = vmatpush1.msra.mxu0 0.0
          %3355 = vmatprep.subr.mxu0 0.0
          %3356 = vmatpush1.msra.mxu0 0.0
          %3357 = vmatprep.subr.mxu0 0.0
          %3358 = vmatpush1.msra.mxu0 0.0
          %3359 = vmatprep.subr.mxu0 0.0
          %3360 = vmatpush1.msra.mxu0 0.0
          %3361 = vmatprep.subr.mxu0 0.0
          %3362 = vmatpush1.msra.mxu0 0.0
          %3363 = vmatprep.subr.mxu0 0.0
          %3364 = vmatpush1.msra.mxu0 0.0
          %3365 = vmatprep.subr.mxu0 0.0
          %3366 = vmatpush1.msra.mxu0 0.0
          %3367 = vmatprep.subr.mxu0 0.0
          %3368 = vmatpush1.msra.mxu0 0.0
          %3369 = vmatprep.subr.mxu0 0.0
          %3370 = vmatpush1.msra.mxu0 0.0
          %3371 = vmatprep.subr.mxu0 0.0
          %3372 = vmatpush1.msra.mxu0 0.0
          %3373 = vmatprep.subr.mxu0 0.0
          %3374 = vmatpush1.msra.mxu0 0.0
          %3375 = vmatprep.subr.mxu0 0.0
          %3376 = vmatpush1.msra.mxu0 0.0
          %3377 = vmatprep.subr.mxu0 0.0
          %3378 = vmatpush1.msra.mxu0 0.0
          %3379 = vmatprep.subr.mxu0 0.0
          %3380 = vmatpush1.msra.mxu0 0.0
          %3381 = vmatprep.subr.mxu0 0.0
          %3382 = vmatpush1.msra.mxu0 0.0
          %3383 = vmatprep.subr.mxu0 0.0
          %3384 = vmatpush1.msra.mxu0 0.0
          %3385 = vmatprep.subr.mxu0 0.0
          %3386 = vmatpush1.msra.mxu0 0.0
          %3387 = vmatprep.subr.mxu0 0.0
          %3388 = vmatpush1.msra.mxu0 0.0
          %3389 = vmatprep.subr.mxu0 0.0
          %3390 = vmatpush1.msra.mxu0 0.0
          %3391 = vmatprep.subr.mxu0 0.0
          %3392 = vmatpush1.msra.mxu0 0.0
          %3393 = vmatprep.subr.mxu0 0.0
          %3394 = vmatpush1.msra.mxu0 0.0
          %3395 = vmatprep.subr.mxu0 0.0
          %3396 = vmatpush1.msra.mxu0 0.0
          %3397 = vmatprep.subr.mxu0 0.0
          %3398 = vmatpush1.msra.mxu0 0.0
          %3399 = vmatprep.subr.mxu0 0.0
          %3400 = vmatpush1.msra.mxu0 0.0
          %3401 = vmatprep.subr.mxu0 0.0
          %3402 = vmatpush1.msra.mxu0 0.0
          %3403 = vmatprep.subr.mxu0 0.0
          %3404 = vmatpush1.msra.mxu0 0.0
          %3405 = vmatprep.subr.mxu0 0.0
          %3406 = vmatpush1.msra.mxu0 0.0
          %3407 = vmatprep.subr.mxu0 0.0
          %3408 = vmatpush1.msra.mxu0 0.0
          %3409 = vmatprep.subr.mxu0 0.0
          %3410 = vmatpush1.msra.mxu0 0.0
          %3411 = vmatprep.mubr.f32.mxu0 0.0
          %v3412 = vand.u32 %v2970, 4294901760
          %3413 = vmatmul.mubr.f32.gmra.mrb[0].mxu0 %v3412
          %v3414 = vpop.f32.mrb[0].mxu0
          %v3415 = vadd.f32 %v3343, %v3414
          %v3416 = vpop.f32.mrb[0].mxu0
          %3417 = vdwg.mxu0
          %v3418 = vmul.f32 %v2959, %v2959
          %3419 = vmatprep.subr.mxu0 0.0
          %v3420 = vand.u32 %v3418, 4294901760
          %3421 = vmatpush1.msra.mxu0 %v3420
          %3422 = vmatprep.subr.mxu0 0.0
          %3423 = vmatpush1.msra.mxu0 0.0
          %3424 = vmatprep.subr.mxu0 0.0
          %3425 = vmatpush1.msra.mxu0 0.0
          %3426 = vmatprep.subr.mxu0 0.0
          %3427 = vmatpush1.msra.mxu0 0.0
          %3428 = vmatprep.subr.mxu0 0.0
          %3429 = vmatpush1.msra.mxu0 0.0
          %3430 = vmatprep.subr.mxu0 0.0
          %3431 = vmatpush1.msra.mxu0 0.0
          %3432 = vmatprep.subr.mxu0 0.0
          %3433 = vmatpush1.msra.mxu0 0.0
          %3434 = vmatprep.subr.mxu0 0.0
          %3435 = vmatpush1.msra.mxu0 0.0
          %3436 = vmatprep.subr.mxu0 0.0
          %3437 = vmatpush1.msra.mxu0 0.0
          %3438 = vmatprep.subr.mxu0 0.0
          %3439 = vmatpush1.msra.mxu0 0.0
          %3440 = vmatprep.subr.mxu0 0.0
          %3441 = vmatpush1.msra.mxu0 0.0
          %3442 = vmatprep.subr.mxu0 0.0
          %3443 = vmatpush1.msra.mxu0 0.0
          %3444 = vmatprep.subr.mxu0 0.0
          %3445 = vmatpush1.msra.mxu0 0.0
          %3446 = vmatprep.subr.mxu0 0.0
          %3447 = vmatpush1.msra.mxu0 0.0
          %3448 = vmatprep.subr.mxu0 0.0
          %3449 = vmatpush1.msra.mxu0 0.0
          %3450 = vmatprep.subr.mxu0 0.0
          %3451 = vmatpush1.msra.mxu0 0.0
          %3452 = vmatprep.subr.mxu0 0.0
          %3453 = vmatpush1.msra.mxu0 0.0
          %3454 = vmatprep.subr.mxu0 0.0
          %3455 = vmatpush1.msra.mxu0 0.0
          %3456 = vmatprep.subr.mxu0 0.0
          %3457 = vmatpush1.msra.mxu0 0.0
          %3458 = vmatprep.subr.mxu0 0.0
          %3459 = vmatpush1.msra.mxu0 0.0
          %3460 = vmatprep.subr.mxu0 0.0
          %3461 = vmatpush1.msra.mxu0 0.0
          %3462 = vmatprep.subr.mxu0 0.0
          %3463 = vmatpush1.msra.mxu0 0.0
          %3464 = vmatprep.subr.mxu0 0.0
          %3465 = vmatpush1.msra.mxu0 0.0
          %3466 = vmatprep.subr.mxu0 0.0
          %3467 = vmatpush1.msra.mxu0 0.0
          %3468 = vmatprep.subr.mxu0 0.0
          %3469 = vmatpush1.msra.mxu0 0.0
          %3470 = vmatprep.subr.mxu0 0.0
          %3471 = vmatpush1.msra.mxu0 0.0
          %3472 = vmatprep.subr.mxu0 0.0
          %3473 = vmatpush1.msra.mxu0 0.0
          %3474 = vmatprep.subr.mxu0 0.0
          %3475 = vmatpush1.msra.mxu0 0.0
          %3476 = vmatprep.subr.mxu0 0.0
          %3477 = vmatpush1.msra.mxu0 0.0
          %3478 = vmatprep.subr.mxu0 0.0
          %3479 = vmatpush1.msra.mxu0 0.0
          %3480 = vmatprep.subr.mxu0 0.0
          %3481 = vmatpush1.msra.mxu0 0.0
          %3482 = vmatprep.subr.mxu0 0.0
          %3483 = vmatpush1.msra.mxu0 0.0
          %3484 = vmatprep.mubr.f32.mxu0 0.0
          %v3485 = vand.u32 %v2970, 4294901760
          %v3486 = vsub.f32 %v2970, %v3485
          %v3487 = vand.u32 %v3486, 4294901760
          %v3488 = vsub.f32 %v3486, %v3487
          %v3489 = vand.u32 %v3488, 4294901760
          %3490 = vmatmul.mubr.f32.gmra.mrb[0].mxu0 %v3489
          %v3491 = vpop.f32.mrb[0].mxu0
          %v3492 = vadd.f32 0.0, %v3491
          %v3493 = vpop.f32.mrb[0].mxu0
          %3494 = vdwg.mxu0
          %3495 = vmatprep.subr.mxu0 0.0
          %v3496 = vand.u32 %v3418, 4294901760
          %v3497 = vsub.f32 %v3418, %v3496
          %v3498 = vand.u32 %v3497, 4294901760
          %v3499 = vsub.f32 %v3497, %v3498
          %v3500 = vand.u32 %v3499, 4294901760
          %3501 = vmatpush1.msra.mxu0 %v3500
          %3502 = vmatprep.subr.mxu0 0.0
          %3503 = vmatpush1.msra.mxu0 0.0
          %3504 = vmatprep.subr.mxu0 0.0
          %3505 = vmatpush1.msra.mxu0 0.0
          %3506 = vmatprep.subr.mxu0 0.0
          %3507 = vmatpush1.msra.mxu0 0.0
          %3508 = vmatprep.subr.mxu0 0.0
          %3509 = vmatpush1.msra.mxu0 0.0
          %3510 = vmatprep.subr.mxu0 0.0
          %3511 = vmatpush1.msra.mxu0 0.0
          %3512 = vmatprep.subr.mxu0 0.0
          %3513 = vmatpush1.msra.mxu0 0.0
          %3514 = vmatprep.subr.mxu0 0.0
          %3515 = vmatpush1.msra.mxu0 0.0
          %3516 = vmatprep.subr.mxu0 0.0
          %3517 = vmatpush1.msra.mxu0 0.0
          %3518 = vmatprep.subr.mxu0 0.0
          %3519 = vmatpush1.msra.mxu0 0.0
          %3520 = vmatprep.subr.mxu0 0.0
          %3521 = vmatpush1.msra.mxu0 0.0
          %3522 = vmatprep.subr.mxu0 0.0
          %3523 = vmatpush1.msra.mxu0 0.0
          %3524 = vmatprep.subr.mxu0 0.0
          %3525 = vmatpush1.msra.mxu0 0.0
          %3526 = vmatprep.subr.mxu0 0.0
          %3527 = vmatpush1.msra.mxu0 0.0
          %3528 = vmatprep.subr.mxu0 0.0
          %3529 = vmatpush1.msra.mxu0 0.0
          %3530 = vmatprep.subr.mxu0 0.0
          %3531 = vmatpush1.msra.mxu0 0.0
          %3532 = vmatprep.subr.mxu0 0.0
          %3533 = vmatpush1.msra.mxu0 0.0
          %3534 = vmatprep.subr.mxu0 0.0
          %3535 = vmatpush1.msra.mxu0 0.0
          %3536 = vmatprep.subr.mxu0 0.0
          %3537 = vmatpush1.msra.mxu0 0.0
          %3538 = vmatprep.subr.mxu0 0.0
          %3539 = vmatpush1.msra.mxu0 0.0
          %3540 = vmatprep.subr.mxu0 0.0
          %3541 = vmatpush1.msra.mxu0 0.0
          %3542 = vmatprep.subr.mxu0 0.0
          %3543 = vmatpush1.msra.mxu0 0.0
          %3544 = vmatprep.subr.mxu0 0.0
          %3545 = vmatpush1.msra.mxu0 0.0
          %3546 = vmatprep.subr.mxu0 0.0
          %3547 = vmatpush1.msra.mxu0 0.0
          %3548 = vmatprep.subr.mxu0 0.0
          %3549 = vmatpush1.msra.mxu0 0.0
          %3550 = vmatprep.subr.mxu0 0.0
          %3551 = vmatpush1.msra.mxu0 0.0
          %3552 = vmatprep.subr.mxu0 0.0
          %3553 = vmatpush1.msra.mxu0 0.0
          %3554 = vmatprep.subr.mxu0 0.0
          %3555 = vmatpush1.msra.mxu0 0.0
          %3556 = vmatprep.subr.mxu0 0.0
          %3557 = vmatpush1.msra.mxu0 0.0
          %3558 = vmatprep.subr.mxu0 0.0
          %3559 = vmatpush1.msra.mxu0 0.0
          %3560 = vmatprep.subr.mxu0 0.0
          %3561 = vmatpush1.msra.mxu0 0.0
          %3562 = vmatprep.subr.mxu0 0.0
          %3563 = vmatpush1.msra.mxu0 0.0
          %3564 = vmatprep.mubr.f32.mxu0 0.0
          %v3565 = vand.u32 %v2970, 4294901760
          %3566 = vmatmul.mubr.f32.gmra.mrb[0].mxu0 %v3565
          %v3567 = vpop.f32.mrb[0].mxu0
          %v3568 = vadd.f32 %v3492, %v3567
          %v3569 = vpop.f32.mrb[0].mxu0
          %3570 = vdwg.mxu0
          %3571 = vmatprep.subr.mxu0 0.0
          %v3572 = vand.u32 %v3418, 4294901760
          %v3573 = vsub.f32 %v3418, %v3572
          %3574 = vmatpush1.msra.mxu0 %v3573
          %3575 = vmatprep.subr.mxu0 0.0
          %3576 = vmatpush1.msra.mxu0 0.0
          %3577 = vmatprep.subr.mxu0 0.0
          %3578 = vmatpush1.msra.mxu0 0.0
          %3579 = vmatprep.subr.mxu0 0.0
          %3580 = vmatpush1.msra.mxu0 0.0
          %3581 = vmatprep.subr.mxu0 0.0
          %3582 = vmatpush1.msra.mxu0 0.0
          %3583 = vmatprep.subr.mxu0 0.0
          %3584 = vmatpush1.msra.mxu0 0.0
          %3585 = vmatprep.subr.mxu0 0.0
          %3586 = vmatpush1.msra.mxu0 0.0
          %3587 = vmatprep.subr.mxu0 0.0
          %3588 = vmatpush1.msra.mxu0 0.0
          %3589 = vmatprep.subr.mxu0 0.0
          %3590 = vmatpush1.msra.mxu0 0.0
          %3591 = vmatprep.subr.mxu0 0.0
          %3592 = vmatpush1.msra.mxu0 0.0
          %3593 = vmatprep.subr.mxu0 0.0
          %3594 = vmatpush1.msra.mxu0 0.0
          %3595 = vmatprep.subr.mxu0 0.0
          %3596 = vmatpush1.msra.mxu0 0.0
          %3597 = vmatprep.subr.mxu0 0.0
          %3598 = vmatpush1.msra.mxu0 0.0
          %3599 = vmatprep.subr.mxu0 0.0
          %3600 = vmatpush1.msra.mxu0 0.0
          %3601 = vmatprep.subr.mxu0 0.0
          %3602 = vmatpush1.msra.mxu0 0.0
          %3603 = vmatprep.subr.mxu0 0.0
          %3604 = vmatpush1.msra.mxu0 0.0
          %3605 = vmatprep.subr.mxu0 0.0
          %3606 = vmatpush1.msra.mxu0 0.0
          %3607 = vmatprep.subr.mxu0 0.0
          %3608 = vmatpush1.msra.mxu0 0.0
          %3609 = vmatprep.subr.mxu0 0.0
          %3610 = vmatpush1.msra.mxu0 0.0
          %3611 = vmatprep.subr.mxu0 0.0
          %3612 = vmatpush1.msra.mxu0 0.0
          %3613 = vmatprep.subr.mxu0 0.0
          %3614 = vmatpush1.msra.mxu0 0.0
          %3615 = vmatprep.subr.mxu0 0.0
          %3616 = vmatpush1.msra.mxu0 0.0
          %3617 = vmatprep.subr.mxu0 0.0
          %3618 = vmatpush1.msra.mxu0 0.0
          %3619 = vmatprep.subr.mxu0 0.0
          %3620 = vmatpush1.msra.mxu0 0.0
          %3621 = vmatprep.subr.mxu0 0.0
          %3622 = vmatpush1.msra.mxu0 0.0
          %3623 = vmatprep.subr.mxu0 0.0
          %3624 = vmatpush1.msra.mxu0 0.0
          %3625 = vmatprep.subr.mxu0 0.0
          %3626 = vmatpush1.msra.mxu0 0.0
          %3627 = vmatprep.subr.mxu0 0.0
          %3628 = vmatpush1.msra.mxu0 0.0
          %3629 = vmatprep.subr.mxu0 0.0
          %3630 = vmatpush1.msra.mxu0 0.0
          %3631 = vmatprep.subr.mxu0 0.0
          %3632 = vmatpush1.msra.mxu0 0.0
          %3633 = vmatprep.subr.mxu0 0.0
          %3634 = vmatpush1.msra.mxu0 0.0
          %3635 = vmatprep.subr.mxu0 0.0
          %3636 = vmatpush1.msra.mxu0 0.0
          %3637 = vmatprep.mubr.f32.mxu0 0.0
          %v3638 = vand.u32 %v2970, 4294901760
          %v3639 = vsub.f32 %v2970, %v3638
          %3640 = vmatmul.mubr.f32.gmra.mrb[0].mxu0 %v3639
          %v3641 = vpop.f32.mrb[0].mxu0
          %v3642 = vadd.f32 %v3568, %v3641
          %v3643 = vpop.f32.mrb[0].mxu0
          %3644 = vdwg.mxu0
          %3645 = vmatprep.subr.mxu0 0.0
          %v3646 = vand.u32 %v3418, 4294901760
          %3647 = vmatpush1.msra.mxu0 %v3646
          %3648 = vmatprep.subr.mxu0 0.0
          %3649 = vmatpush1.msra.mxu0 0.0
          %3650 = vmatprep.subr.mxu0 0.0
          %3651 = vmatpush1.msra.mxu0 0.0
          %3652 = vmatprep.subr.mxu0 0.0
          %3653 = vmatpush1.msra.mxu0 0.0
          %3654 = vmatprep.subr.mxu0 0.0
          %3655 = vmatpush1.msra.mxu0 0.0
          %3656 = vmatprep.subr.mxu0 0.0
          %3657 = vmatpush1.msra.mxu0 0.0
          %3658 = vmatprep.subr.mxu0 0.0
          %3659 = vmatpush1.msra.mxu0 0.0
          %3660 = vmatprep.subr.mxu0 0.0
          %3661 = vmatpush1.msra.mxu0 0.0
          %3662 = vmatprep.subr.mxu0 0.0
          %3663 = vmatpush1.msra.mxu0 0.0
          %3664 = vmatprep.subr.mxu0 0.0
          %3665 = vmatpush1.msra.mxu0 0.0
          %3666 = vmatprep.subr.mxu0 0.0
          %3667 = vmatpush1.msra.mxu0 0.0
          %3668 = vmatprep.subr.mxu0 0.0
          %3669 = vmatpush1.msra.mxu0 0.0
          %3670 = vmatprep.subr.mxu0 0.0
          %3671 = vmatpush1.msra.mxu0 0.0
          %3672 = vmatprep.subr.mxu0 0.0
          %3673 = vmatpush1.msra.mxu0 0.0
          %3674 = vmatprep.subr.mxu0 0.0
          %3675 = vmatpush1.msra.mxu0 0.0
          %3676 = vmatprep.subr.mxu0 0.0
          %3677 = vmatpush1.msra.mxu0 0.0
          %3678 = vmatprep.subr.mxu0 0.0
          %3679 = vmatpush1.msra.mxu0 0.0
          %3680 = vmatprep.subr.mxu0 0.0
          %3681 = vmatpush1.msra.mxu0 0.0
          %3682 = vmatprep.subr.mxu0 0.0
          %3683 = vmatpush1.msra.mxu0 0.0
          %3684 = vmatprep.subr.mxu0 0.0
          %3685 = vmatpush1.msra.mxu0 0.0
          %3686 = vmatprep.subr.mxu0 0.0
          %3687 = vmatpush1.msra.mxu0 0.0
          %3688 = vmatprep.subr.mxu0 0.0
          %3689 = vmatpush1.msra.mxu0 0.0
          %3690 = vmatprep.subr.mxu0 0.0
          %3691 = vmatpush1.msra.mxu0 0.0
          %3692 = vmatprep.subr.mxu0 0.0
          %3693 = vmatpush1.msra.mxu0 0.0
          %3694 = vmatprep.subr.mxu0 0.0
          %3695 = vmatpush1.msra.mxu0 0.0
          %3696 = vmatprep.subr.mxu0 0.0
          %3697 = vmatpush1.msra.mxu0 0.0
          %3698 = vmatprep.subr.mxu0 0.0
          %3699 = vmatpush1.msra.mxu0 0.0
          %3700 = vmatprep.subr.mxu0 0.0
          %3701 = vmatpush1.msra.mxu0 0.0
          %3702 = vmatprep.subr.mxu0 0.0
          %3703 = vmatpush1.msra.mxu0 0.0
          %3704 = vmatprep.subr.mxu0 0.0
          %3705 = vmatpush1.msra.mxu0 0.0
          %3706 = vmatprep.subr.mxu0 0.0
          %3707 = vmatpush1.msra.mxu0 0.0
          %3708 = vmatprep.subr.mxu0 0.0
          %3709 = vmatpush1.msra.mxu0 0.0
          %3710 = vmatprep.mubr.f32.mxu0 0.0
          %v3711 = vand.u32 %v2970, 4294901760
          %v3712 = vsub.f32 %v2970, %v3711
          %v3713 = vand.u32 %v3712, 4294901760
          %3714 = vmatmul.mubr.f32.gmra.mrb[0].mxu0 %v3713
          %v3715 = vpop.f32.mrb[0].mxu0
          %v3716 = vadd.f32 %v3642, %v3715
          %v3717 = vpop.f32.mrb[0].mxu0
          %3718 = vdwg.mxu0
          %3719 = vmatprep.subr.mxu0 0.0
          %v3720 = vand.u32 %v3418, 4294901760
          %v3721 = vsub.f32 %v3418, %v3720
          %v3722 = vand.u32 %v3721, 4294901760
          %3723 = vmatpush1.msra.mxu0 %v3722
          %3724 = vmatprep.subr.mxu0 0.0
          %3725 = vmatpush1.msra.mxu0 0.0
          %3726 = vmatprep.subr.mxu0 0.0
          %3727 = vmatpush1.msra.mxu0 0.0
          %3728 = vmatprep.subr.mxu0 0.0
          %3729 = vmatpush1.msra.mxu0 0.0
          %3730 = vmatprep.subr.mxu0 0.0
          %3731 = vmatpush1.msra.mxu0 0.0
          %3732 = vmatprep.subr.mxu0 0.0
          %3733 = vmatpush1.msra.mxu0 0.0
          %3734 = vmatprep.subr.mxu0 0.0
          %3735 = vmatpush1.msra.mxu0 0.0
          %3736 = vmatprep.subr.mxu0 0.0
          %3737 = vmatpush1.msra.mxu0 0.0
          %3738 = vmatprep.subr.mxu0 0.0
          %3739 = vmatpush1.msra.mxu0 0.0
          %3740 = vmatprep.subr.mxu0 0.0
          %3741 = vmatpush1.msra.mxu0 0.0
          %3742 = vmatprep.subr.mxu0 0.0
          %3743 = vmatpush1.msra.mxu0 0.0
          %3744 = vmatprep.subr.mxu0 0.0
          %3745 = vmatpush1.msra.mxu0 0.0
          %3746 = vmatprep.subr.mxu0 0.0
          %3747 = vmatpush1.msra.mxu0 0.0
          %3748 = vmatprep.subr.mxu0 0.0
          %3749 = vmatpush1.msra.mxu0 0.0
          %3750 = vmatprep.subr.mxu0 0.0
          %3751 = vmatpush1.msra.mxu0 0.0
          %3752 = vmatprep.subr.mxu0 0.0
          %3753 = vmatpush1.msra.mxu0 0.0
          %3754 = vmatprep.subr.mxu0 0.0
          %3755 = vmatpush1.msra.mxu0 0.0
          %3756 = vmatprep.subr.mxu0 0.0
          %3757 = vmatpush1.msra.mxu0 0.0
          %3758 = vmatprep.subr.mxu0 0.0
          %3759 = vmatpush1.msra.mxu0 0.0
          %3760 = vmatprep.subr.mxu0 0.0
          %3761 = vmatpush1.msra.mxu0 0.0
          %3762 = vmatprep.subr.mxu0 0.0
          %3763 = vmatpush1.msra.mxu0 0.0
          %3764 = vmatprep.subr.mxu0 0.0
          %3765 = vmatpush1.msra.mxu0 0.0
          %3766 = vmatprep.subr.mxu0 0.0
          %3767 = vmatpush1.msra.mxu0 0.0
          %3768 = vmatprep.subr.mxu0 0.0
          %3769 = vmatpush1.msra.mxu0 0.0
          %3770 = vmatprep.subr.mxu0 0.0
          %3771 = vmatpush1.msra.mxu0 0.0
          %3772 = vmatprep.subr.mxu0 0.0
          %3773 = vmatpush1.msra.mxu0 0.0
          %3774 = vmatprep.subr.mxu0 0.0
          %3775 = vmatpush1.msra.mxu0 0.0
          %3776 = vmatprep.subr.mxu0 0.0
          %3777 = vmatpush1.msra.mxu0 0.0
          %3778 = vmatprep.subr.mxu0 0.0
          %3779 = vmatpush1.msra.mxu0 0.0
          %3780 = vmatprep.subr.mxu0 0.0
          %3781 = vmatpush1.msra.mxu0 0.0
          %3782 = vmatprep.subr.mxu0 0.0
          %3783 = vmatpush1.msra.mxu0 0.0
          %3784 = vmatprep.subr.mxu0 0.0
          %3785 = vmatpush1.msra.mxu0 0.0
          %3786 = vmatprep.mubr.f32.mxu0 0.0
          %v3787 = vand.u32 %v2970, 4294901760
          %3788 = vmatmul.mubr.f32.gmra.mrb[0].mxu0 %v3787
          %v3789 = vpop.f32.mrb[0].mxu0
          %v3790 = vadd.f32 %v3716, %v3789
          %v3791 = vpop.f32.mrb[0].mxu0
          %3792 = vdwg.mxu0
          %3793 = vmatprep.subr.mxu0 0.0
          %v3794 = vand.u32 %v3418, 4294901760
          %3795 = vmatpush1.msra.mxu0 %v3794
          %3796 = vmatprep.subr.mxu0 0.0
          %3797 = vmatpush1.msra.mxu0 0.0
          %3798 = vmatprep.subr.mxu0 0.0
          %3799 = vmatpush1.msra.mxu0 0.0
          %3800 = vmatprep.subr.mxu0 0.0
          %3801 = vmatpush1.msra.mxu0 0.0
          %3802 = vmatprep.subr.mxu0 0.0
          %3803 = vmatpush1.msra.mxu0 0.0
          %3804 = vmatprep.subr.mxu0 0.0
          %3805 = vmatpush1.msra.mxu0 0.0
          %3806 = vmatprep.subr.mxu0 0.0
          %3807 = vmatpush1.msra.mxu0 0.0
          %3808 = vmatprep.subr.mxu0 0.0
          %3809 = vmatpush1.msra.mxu0 0.0
          %3810 = vmatprep.subr.mxu0 0.0
          %3811 = vmatpush1.msra.mxu0 0.0
          %3812 = vmatprep.subr.mxu0 0.0
          %3813 = vmatpush1.msra.mxu0 0.0
          %3814 = vmatprep.subr.mxu0 0.0
          %3815 = vmatpush1.msra.mxu0 0.0
          %3816 = vmatprep.subr.mxu0 0.0
          %3817 = vmatpush1.msra.mxu0 0.0
          %3818 = vmatprep.subr.mxu0 0.0
          %3819 = vmatpush1.msra.mxu0 0.0
          %3820 = vmatprep.subr.mxu0 0.0
          %3821 = vmatpush1.msra.mxu0 0.0
          %3822 = vmatprep.subr.mxu0 0.0
          %3823 = vmatpush1.msra.mxu0 0.0
          %3824 = vmatprep.subr.mxu0 0.0
          %3825 = vmatpush1.msra.mxu0 0.0
          %3826 = vmatprep.subr.mxu0 0.0
          %3827 = vmatpush1.msra.mxu0 0.0
          %3828 = vmatprep.subr.mxu0 0.0
          %3829 = vmatpush1.msra.mxu0 0.0
          %3830 = vmatprep.subr.mxu0 0.0
          %3831 = vmatpush1.msra.mxu0 0.0
          %3832 = vmatprep.subr.mxu0 0.0
          %3833 = vmatpush1.msra.mxu0 0.0
          %3834 = vmatprep.subr.mxu0 0.0
          %3835 = vmatpush1.msra.mxu0 0.0
          %3836 = vmatprep.subr.mxu0 0.0
          %3837 = vmatpush1.msra.mxu0 0.0
          %3838 = vmatprep.subr.mxu0 0.0
          %3839 = vmatpush1.msra.mxu0 0.0
          %3840 = vmatprep.subr.mxu0 0.0
          %3841 = vmatpush1.msra.mxu0 0.0
          %3842 = vmatprep.subr.mxu0 0.0
          %3843 = vmatpush1.msra.mxu0 0.0
          %3844 = vmatprep.subr.mxu0 0.0
          %3845 = vmatpush1.msra.mxu0 0.0
          %3846 = vmatprep.subr.mxu0 0.0
          %3847 = vmatpush1.msra.mxu0 0.0
          %3848 = vmatprep.subr.mxu0 0.0
          %3849 = vmatpush1.msra.mxu0 0.0
          %3850 = vmatprep.subr.mxu0 0.0
          %3851 = vmatpush1.msra.mxu0 0.0
          %3852 = vmatprep.subr.mxu0 0.0
          %3853 = vmatpush1.msra.mxu0 0.0
          %3854 = vmatprep.subr.mxu0 0.0
          %3855 = vmatpush1.msra.mxu0 0.0
          %3856 = vmatprep.subr.mxu0 0.0
          %3857 = vmatpush1.msra.mxu0 0.0
          %3858 = vmatprep.mubr.f32.mxu0 0.0
          %v3859 = vand.u32 %v2970, 4294901760
          %3860 = vmatmul.mubr.f32.gmra.mrb[0].mxu0 %v3859
          %v3861 = vpop.f32.mrb[0].mxu0
          %v3862 = vadd.f32 %v3790, %v3861
          %v3863 = vpop.f32.mrb[0].mxu0
          %3864 = vdwg.mxu0
          %v3865 = vld [vmem:[#allocation5] sm:$0x3]
          %v3867 = vrot.slane %v3862, 7
          %vm3869 = vcmask 1040384
          %v3870 = vsel %vm3869, %v3415, %v3867
          %v3871 = vadd.f32 %v3865, %v3870
          %3872 = vst [vmem:[#allocation5] sm:$0x3] %v3871
          %3873 = vst [vmem:[%s2837] sm:$0xff] %v2959
        $region176: #{tpu_custom_call.1} parent=83 // pred_fallthru
          _
        %p3874 = scmp.eq.s32.totalorder %s45, 3
        // Predicated region
        $region185: #{tpu_custom_call.1} parent=83 // pred_check
          %p3875 = pneg %p3874
        $region186: #{tpu_custom_call.1} parent=83 // pred_check_branch
          %3877 = sbr.rel (%p3875) target = $region188
        $region187: #{tpu_custom_call.1} parent=83 // pred_region
          // Predicated region
          $region189: #{tpu_custom_call.1} parent=187 // pred_check
            %p3878 = pneg %p762
          $region190: #{tpu_custom_call.1} parent=187 // pred_check_branch
            %3880 = sbr.rel (%p3878) target = $region192
          $region191: #{tpu_custom_call.1} parent=187 // pred_region
            %v3881 = vld [vmem:[#allocation5] sm:$0x1]
            %v3882 = vmul.f32 %v3881, 0.125
            %v3883 = vld [vmem:[#allocation5 + $0x1] sm:$0x1]
            %v3884 = vmul.f32 %v3883, 0.125
            %v3885 = vmul.f32 %v3882, %v3882
            %v3886 = vsub.f32 %v3884, %v3885
            %v3887 = vmax.f32 %v3886, 0.0
            %v3888 = vld [vmem:[#allocation22] sm:$0x1]
            %v3889 = vadd.f32 %v3887, 1e-05
            %v3890 = vrsqrt.pop %v3889
            %v3891 = vmul.f32 %v3888, %v3890
            %v3892 = vld [vmem:[#allocation24] sm:$0x1]
            %v3893 = vmul.f32 %v3882, %v3891
            %v3894 = vsub.f32 %v3892, %v3893
            %v3896 = vlaneseq
            %v3897 = vshrl.u32 %v3896, 7
            %v3898 = vsub.s32 0, %v3897
            %v3899 = vrot.slane %v3894, %v3898
            %vm3901 = vcmask 1040384
            %v3902 = vsel %vm3901, %v3891, %v3899
            %3903 = vst [vmem:[#allocation5] sm:$0x3] %v3902
          $region192: #{tpu_custom_call.1} parent=187 // pred_fallthru
            _
          %s3904 = smul.u32 %s46, 8
          %s3905 = scalar_lea.vmem [#allocation2], %s3904
          %v3906 = vld [vmem:[%s3905] sm:$0xff]
          %v3907 = vld [vmem:[#allocation5] sm:$0x1]
          %v3908 = vlaneseq
          %v3909 = vshrl.u32 %v3908, 7
          %v3910 = vsub.s32 0, %v3909
          %v3911 = vrot.slane %v3907, %v3910
          %v3912 = vmul.f32 %v3906, %v3911
          %v3913 = vld [vmem:[#allocation5 + $0x1] sm:$0x1]
          %v3914 = vlaneseq
          %v3915 = vshrl.u32 %v3914, 7
          %v3916 = vsub.s32 0, %v3915
          %v3917 = vrot.slane %v3913, %v3916
          %v3918 = vadd.f32 %v3912, %v3917
          %v3919 = vmax.f32 %v3918, 0.0
          %v3920 = vpack.c.bf16 %v3919, %v3919
          %v3921 = vld [vmem:[#allocation25] sm:$0xf]
          %v3922 = vld [vmem:[#allocation25 + $0x4] sm:$0xf]
          %v3923 = vld [vmem:[#allocation25 + $0x8] sm:$0xf]
          %v3924 = vld [vmem:[#allocation25 + $0xc] sm:$0xf]
          %v3925 = vld [vmem:[#allocation25 + $0x10] sm:$0xf]
          %v3926 = vld [vmem:[#allocation25 + $0x14] sm:$0xf]
          %v3927 = vld [vmem:[#allocation25 + $0x18] sm:$0xf]
          %v3928 = vld [vmem:[#allocation25 + $0x1c] sm:$0xf]
          %v3929 = vld [vmem:[#allocation25 + $0x20] sm:$0xf]
          %v3930 = vld [vmem:[#allocation25 + $0x24] sm:$0xf]
          %v3931 = vld [vmem:[#allocation25 + $0x28] sm:$0xf]
          %v3932 = vld [vmem:[#allocation25 + $0x2c] sm:$0xf]
          %v3933 = vld [vmem:[#allocation25 + $0x30] sm:$0xf]
          %v3934 = vld [vmem:[#allocation25 + $0x34] sm:$0xf]
          %v3935 = vld [vmem:[#allocation25 + $0x38] sm:$0xf]
          %v3936 = vld [vmem:[#allocation25 + $0x3c] sm:$0xf]
          %v3953 = vunpack.c.l.b16 %v3921
          %v3954 = vunpack.c.l.b16 %v3922
          %v3955 = vunpack.c.l.b16 %v3923
          %v3956 = vunpack.c.l.b16 %v3924
          %v3957 = vunpack.c.l.b16 %v3925
          %v3958 = vunpack.c.l.b16 %v3926
          %v3959 = vunpack.c.l.b16 %v3927
          %v3960 = vunpack.c.l.b16 %v3928
          %v3961 = vunpack.c.l.b16 %v3929
          %v3962 = vunpack.c.l.b16 %v3930
          %v3963 = vunpack.c.l.b16 %v3931
          %v3964 = vunpack.c.l.b16 %v3932
          %v3965 = vunpack.c.l.b16 %v3933
          %v3966 = vunpack.c.l.b16 %v3934
          %v3967 = vunpack.c.l.b16 %v3935
          %v3968 = vunpack.c.l.b16 %v3936
          %v3969 = vpack.c.b16 %v3954, %v3953
          %v3970 = vpack.c.b16 %v3956, %v3955
          %v3971 = vpack.c.b16 %v3958, %v3957
          %v3972 = vpack.c.b16 %v3960, %v3959
          %v3973 = vpack.c.b16 %v3962, %v3961
          %v3974 = vpack.c.b16 %v3964, %v3963
          %v3975 = vpack.c.b16 %v3966, %v3965
          %v3976 = vpack.c.b16 %v3968, %v3967
          %3985 = vmatprep.subr.bf16.mxu0 0
          %3986 = vmatpush1.bf16.msra.mxu0 %v3969
          %3987 = vmatprep.subr.bf16.mxu0 0
          %3988 = vmatpush1.bf16.msra.mxu0 %v3970
          %3989 = vmatprep.subr.bf16.mxu0 0
          %3990 = vmatpush1.bf16.msra.mxu0 %v3971
          %3991 = vmatprep.subr.bf16.mxu0 0
          %3992 = vmatpush1.bf16.msra.mxu0 %v3972
          %3993 = vmatprep.subr.bf16.mxu0 0
          %3994 = vmatpush1.bf16.msra.mxu0 %v3973
          %3995 = vmatprep.subr.bf16.mxu0 0
          %3996 = vmatpush1.bf16.msra.mxu0 %v3974
          %3997 = vmatprep.subr.bf16.mxu0 0
          %3998 = vmatpush1.bf16.msra.mxu0 %v3975
          %3999 = vmatprep.subr.bf16.mxu0 0
          %4000 = vmatpush1.bf16.msra.mxu0 %v3976
          %4001 = vmatprep.subr.bf16.mxu0 0
          %4002 = vmatpush1.bf16.msra.mxu0 0
          %4003 = vmatprep.subr.bf16.mxu0 0
          %4004 = vmatpush1.bf16.msra.mxu0 0
          %4005 = vmatprep.subr.bf16.mxu0 0
          %4006 = vmatpush1.bf16.msra.mxu0 0
          %4007 = vmatprep.subr.bf16.mxu0 0
          %4008 = vmatpush1.bf16.msra.mxu0 0
          %4009 = vmatprep.subr.bf16.mxu0 0
          %4010 = vmatpush1.bf16.msra.mxu0 0
          %4011 = vmatprep.subr.bf16.mxu0 0
          %4012 = vmatpush1.bf16.msra.mxu0 0
          %4013 = vmatprep.subr.bf16.mxu0 0
          %4014 = vmatpush1.bf16.msra.mxu0 0
          %4015 = vmatprep.subr.bf16.mxu0 0
          %4016 = vmatpush1.bf16.msra.mxu0 0
          %4017 = vmatprep.mubr.bf16.mxu0 0
          %4018 = vmatmul.mubr.bf16.gmra.mrb[0].mxu0 %v3920
          %v4019 = vpop.f32.mrb[0].mxu0
          %v4020 = vadd.f32 0.0, %v4019
          %v4021 = vpop.f32.mrb[0].mxu0
          %v4022 = vpop.f32.mrb[0].mxu0
          %v4023 = vpop.f32.mrb[0].mxu0
          %4024 = vdwg.mxu0
          // Predicated region
          $region193: #{tpu_custom_call.1} parent=187 // pred_check
            %p4025 = pneg %p762
          $region194: #{tpu_custom_call.1} parent=187 // pred_check_branch
            %4027 = sbr.rel (%p4025) target = $region196
          $region195: #{tpu_custom_call.1} parent=187 // pred_region
            %4028 = vst [vmem:[#allocation6] sm:$0x3] 0.0
          $region196: #{tpu_custom_call.1} parent=187 // pred_fallthru
            _
          %vm4029 = vcmask 64512
          %v4031 = vsel %vm4029, 1.0, 0
          %4033 = vmatprep.subr.mxu0 0.0
          %v4034 = vand.u32 %v4020, 4294901760
          %4035 = vmatpush1.msra.mxu0 %v4034
          %4036 = vmatprep.subr.mxu0 0.0
          %4037 = vmatpush1.msra.mxu0 0.0
          %4038 = vmatprep.subr.mxu0 0.0
          %4039 = vmatpush1.msra.mxu0 0.0
          %4040 = vmatprep.subr.mxu0 0.0
          %4041 = vmatpush1.msra.mxu0 0.0
          %4042 = vmatprep.subr.mxu0 0.0
          %4043 = vmatpush1.msra.mxu0 0.0
          %4044 = vmatprep.subr.mxu0 0.0
          %4045 = vmatpush1.msra.mxu0 0.0
          %4046 = vmatprep.subr.mxu0 0.0
          %4047 = vmatpush1.msra.mxu0 0.0
          %4048 = vmatprep.subr.mxu0 0.0
          %4049 = vmatpush1.msra.mxu0 0.0
          %4050 = vmatprep.subr.mxu0 0.0
          %4051 = vmatpush1.msra.mxu0 0.0
          %4052 = vmatprep.subr.mxu0 0.0
          %4053 = vmatpush1.msra.mxu0 0.0
          %4054 = vmatprep.subr.mxu0 0.0
          %4055 = vmatpush1.msra.mxu0 0.0
          %4056 = vmatprep.subr.mxu0 0.0
          %4057 = vmatpush1.msra.mxu0 0.0
          %4058 = vmatprep.subr.mxu0 0.0
          %4059 = vmatpush1.msra.mxu0 0.0
          %4060 = vmatprep.subr.mxu0 0.0
          %4061 = vmatpush1.msra.mxu0 0.0
          %4062 = vmatprep.subr.mxu0 0.0
          %4063 = vmatpush1.msra.mxu0 0.0
          %4064 = vmatprep.subr.mxu0 0.0
          %4065 = vmatpush1.msra.mxu0 0.0
          %4066 = vmatprep.subr.mxu0 0.0
          %4067 = vmatpush1.msra.mxu0 0.0
          %4068 = vmatprep.subr.mxu0 0.0
          %4069 = vmatpush1.msra.mxu0 0.0
          %4070 = vmatprep.subr.mxu0 0.0
          %4071 = vmatpush1.msra.mxu0 0.0
          %4072 = vmatprep.subr.mxu0 0.0
          %4073 = vmatpush1.msra.mxu0 0.0
          %4074 = vmatprep.subr.mxu0 0.0
          %4075 = vmatpush1.msra.mxu0 0.0
          %4076 = vmatprep.subr.mxu0 0.0
          %4077 = vmatpush1.msra.mxu0 0.0
          %4078 = vmatprep.subr.mxu0 0.0
          %4079 = vmatpush1.msra.mxu0 0.0
          %4080 = vmatprep.subr.mxu0 0.0
          %4081 = vmatpush1.msra.mxu0 0.0
          %4082 = vmatprep.subr.mxu0 0.0
          %4083 = vmatpush1.msra.mxu0 0.0
          %4084 = vmatprep.subr.mxu0 0.0
          %4085 = vmatpush1.msra.mxu0 0.0
          %4086 = vmatprep.subr.mxu0 0.0
          %4087 = vmatpush1.msra.mxu0 0.0
          %4088 = vmatprep.subr.mxu0 0.0
          %4089 = vmatpush1.msra.mxu0 0.0
          %4090 = vmatprep.subr.mxu0 0.0
          %4091 = vmatpush1.msra.mxu0 0.0
          %4092 = vmatprep.subr.mxu0 0.0
          %4093 = vmatpush1.msra.mxu0 0.0
          %4094 = vmatprep.subr.mxu0 0.0
          %4095 = vmatpush1.msra.mxu0 0.0
          %4096 = vmatprep.subr.mxu0 0.0
          %4097 = vmatpush1.msra.mxu0 0.0
          %4098 = vmatprep.mubr.f32.mxu0 0.0
          %v4099 = vand.u32 %v4031, 4294901760
          %v4100 = vsub.f32 %v4031, %v4099
          %v4101 = vand.u32 %v4100, 4294901760
          %v4102 = vsub.f32 %v4100, %v4101
          %v4103 = vand.u32 %v4102, 4294901760
          %4104 = vmatmul.mubr.f32.gmra.mrb[0].mxu0 %v4103
          %v4105 = vpop.f32.mrb[0].mxu0
          %v4106 = vadd.f32 0.0, %v4105
          %v4107 = vpop.f32.mrb[0].mxu0
          %4108 = vdwg.mxu0
          %4109 = vmatprep.subr.mxu0 0.0
          %v4110 = vand.u32 %v4020, 4294901760
          %v4111 = vsub.f32 %v4020, %v4110
          %v4112 = vand.u32 %v4111, 4294901760
          %v4113 = vsub.f32 %v4111, %v4112
          %v4114 = vand.u32 %v4113, 4294901760
          %4115 = vmatpush1.msra.mxu0 %v4114
          %4116 = vmatprep.subr.mxu0 0.0
          %4117 = vmatpush1.msra.mxu0 0.0
          %4118 = vmatprep.subr.mxu0 0.0
          %4119 = vmatpush1.msra.mxu0 0.0
          %4120 = vmatprep.subr.mxu0 0.0
          %4121 = vmatpush1.msra.mxu0 0.0
          %4122 = vmatprep.subr.mxu0 0.0
          %4123 = vmatpush1.msra.mxu0 0.0
          %4124 = vmatprep.subr.mxu0 0.0
          %4125 = vmatpush1.msra.mxu0 0.0
          %4126 = vmatprep.subr.mxu0 0.0
          %4127 = vmatpush1.msra.mxu0 0.0
          %4128 = vmatprep.subr.mxu0 0.0
          %4129 = vmatpush1.msra.mxu0 0.0
          %4130 = vmatprep.subr.mxu0 0.0
          %4131 = vmatpush1.msra.mxu0 0.0
          %4132 = vmatprep.subr.mxu0 0.0
          %4133 = vmatpush1.msra.mxu0 0.0
          %4134 = vmatprep.subr.mxu0 0.0
          %4135 = vmatpush1.msra.mxu0 0.0
          %4136 = vmatprep.subr.mxu0 0.0
          %4137 = vmatpush1.msra.mxu0 0.0
          %4138 = vmatprep.subr.mxu0 0.0
          %4139 = vmatpush1.msra.mxu0 0.0
          %4140 = vmatprep.subr.mxu0 0.0
          %4141 = vmatpush1.msra.mxu0 0.0
          %4142 = vmatprep.subr.mxu0 0.0
          %4143 = vmatpush1.msra.mxu0 0.0
          %4144 = vmatprep.subr.mxu0 0.0
          %4145 = vmatpush1.msra.mxu0 0.0
          %4146 = vmatprep.subr.mxu0 0.0
          %4147 = vmatpush1.msra.mxu0 0.0
          %4148 = vmatprep.subr.mxu0 0.0
          %4149 = vmatpush1.msra.mxu0 0.0
          %4150 = vmatprep.subr.mxu0 0.0
          %4151 = vmatpush1.msra.mxu0 0.0
          %4152 = vmatprep.subr.mxu0 0.0
          %4153 = vmatpush1.msra.mxu0 0.0
          %4154 = vmatprep.subr.mxu0 0.0
          %4155 = vmatpush1.msra.mxu0 0.0
          %4156 = vmatprep.subr.mxu0 0.0
          %4157 = vmatpush1.msra.mxu0 0.0
          %4158 = vmatprep.subr.mxu0 0.0
          %4159 = vmatpush1.msra.mxu0 0.0
          %4160 = vmatprep.subr.mxu0 0.0
          %4161 = vmatpush1.msra.mxu0 0.0
          %4162 = vmatprep.subr.mxu0 0.0
          %4163 = vmatpush1.msra.mxu0 0.0
          %4164 = vmatprep.subr.mxu0 0.0
          %4165 = vmatpush1.msra.mxu0 0.0
          %4166 = vmatprep.subr.mxu0 0.0
          %4167 = vmatpush1.msra.mxu0 0.0
          %4168 = vmatprep.subr.mxu0 0.0
          %4169 = vmatpush1.msra.mxu0 0.0
          %4170 = vmatprep.subr.mxu0 0.0
          %4171 = vmatpush1.msra.mxu0 0.0
          %4172 = vmatprep.subr.mxu0 0.0
          %4173 = vmatpush1.msra.mxu0 0.0
          %4174 = vmatprep.subr.mxu0 0.0
          %4175 = vmatpush1.msra.mxu0 0.0
          %4176 = vmatprep.subr.mxu0 0.0
          %4177 = vmatpush1.msra.mxu0 0.0
          %4178 = vmatprep.mubr.f32.mxu0 0.0
          %v4179 = vand.u32 %v4031, 4294901760
          %4180 = vmatmul.mubr.f32.gmra.mrb[0].mxu0 %v4179
          %v4181 = vpop.f32.mrb[0].mxu0
          %v4182 = vadd.f32 %v4106, %v4181
          %v4183 = vpop.f32.mrb[0].mxu0
          %4184 = vdwg.mxu0
          %4185 = vmatprep.subr.mxu0 0.0
          %v4186 = vand.u32 %v4020, 4294901760
          %v4187 = vsub.f32 %v4020, %v4186
          %4188 = vmatpush1.msra.mxu0 %v4187
          %4189 = vmatprep.subr.mxu0 0.0
          %4190 = vmatpush1.msra.mxu0 0.0
          %4191 = vmatprep.subr.mxu0 0.0
          %4192 = vmatpush1.msra.mxu0 0.0
          %4193 = vmatprep.subr.mxu0 0.0
          %4194 = vmatpush1.msra.mxu0 0.0
          %4195 = vmatprep.subr.mxu0 0.0
          %4196 = vmatpush1.msra.mxu0 0.0
          %4197 = vmatprep.subr.mxu0 0.0
          %4198 = vmatpush1.msra.mxu0 0.0
          %4199 = vmatprep.subr.mxu0 0.0
          %4200 = vmatpush1.msra.mxu0 0.0
          %4201 = vmatprep.subr.mxu0 0.0
          %4202 = vmatpush1.msra.mxu0 0.0
          %4203 = vmatprep.subr.mxu0 0.0
          %4204 = vmatpush1.msra.mxu0 0.0
          %4205 = vmatprep.subr.mxu0 0.0
          %4206 = vmatpush1.msra.mxu0 0.0
          %4207 = vmatprep.subr.mxu0 0.0
          %4208 = vmatpush1.msra.mxu0 0.0
          %4209 = vmatprep.subr.mxu0 0.0
          %4210 = vmatpush1.msra.mxu0 0.0
          %4211 = vmatprep.subr.mxu0 0.0
          %4212 = vmatpush1.msra.mxu0 0.0
          %4213 = vmatprep.subr.mxu0 0.0
          %4214 = vmatpush1.msra.mxu0 0.0
          %4215 = vmatprep.subr.mxu0 0.0
          %4216 = vmatpush1.msra.mxu0 0.0
          %4217 = vmatprep.subr.mxu0 0.0
          %4218 = vmatpush1.msra.mxu0 0.0
          %4219 = vmatprep.subr.mxu0 0.0
          %4220 = vmatpush1.msra.mxu0 0.0
          %4221 = vmatprep.subr.mxu0 0.0
          %4222 = vmatpush1.msra.mxu0 0.0
          %4223 = vmatprep.subr.mxu0 0.0
          %4224 = vmatpush1.msra.mxu0 0.0
          %4225 = vmatprep.subr.mxu0 0.0
          %4226 = vmatpush1.msra.mxu0 0.0
          %4227 = vmatprep.subr.mxu0 0.0
          %4228 = vmatpush1.msra.mxu0 0.0
          %4229 = vmatprep.subr.mxu0 0.0
          %4230 = vmatpush1.msra.mxu0 0.0
          %4231 = vmatprep.subr.mxu0 0.0
          %4232 = vmatpush1.msra.mxu0 0.0
          %4233 = vmatprep.subr.mxu0 0.0
          %4234 = vmatpush1.msra.mxu0 0.0
          %4235 = vmatprep.subr.mxu0 0.0
          %4236 = vmatpush1.msra.mxu0 0.0
          %4237 = vmatprep.subr.mxu0 0.0
          %4238 = vmatpush1.msra.mxu0 0.0
          %4239 = vmatprep.subr.mxu0 0.0
          %4240 = vmatpush1.msra.mxu0 0.0
          %4241 = vmatprep.subr.mxu0 0.0
          %4242 = vmatpush1.msra.mxu0 0.0
          %4243 = vmatprep.subr.mxu0 0.0
          %4244 = vmatpush1.msra.mxu0 0.0
          %4245 = vmatprep.subr.mxu0 0.0
          %4246 = vmatpush1.msra.mxu0 0.0
          %4247 = vmatprep.subr.mxu0 0.0
          %4248 = vmatpush1.msra.mxu0 0.0
          %4249 = vmatprep.subr.mxu0 0.0
          %4250 = vmatpush1.msra.mxu0 0.0
          %4251 = vmatprep.mubr.f32.mxu0 0.0
          %v4252 = vand.u32 %v4031, 4294901760
          %v4253 = vsub.f32 %v4031, %v4252
          %4254 = vmatmul.mubr.f32.gmra.mrb[0].mxu0 %v4253
          %v4255 = vpop.f32.mrb[0].mxu0
          %v4256 = vadd.f32 %v4182, %v4255
          %v4257 = vpop.f32.mrb[0].mxu0
          %4258 = vdwg.mxu0
          %4259 = vmatprep.subr.mxu0 0.0
          %v4260 = vand.u32 %v4020, 4294901760
          %4261 = vmatpush1.msra.mxu0 %v4260
          %4262 = vmatprep.subr.mxu0 0.0
          %4263 = vmatpush1.msra.mxu0 0.0
          %4264 = vmatprep.subr.mxu0 0.0
          %4265 = vmatpush1.msra.mxu0 0.0
          %4266 = vmatprep.subr.mxu0 0.0
          %4267 = vmatpush1.msra.mxu0 0.0
          %4268 = vmatprep.subr.mxu0 0.0
          %4269 = vmatpush1.msra.mxu0 0.0
          %4270 = vmatprep.subr.mxu0 0.0
          %4271 = vmatpush1.msra.mxu0 0.0
          %4272 = vmatprep.subr.mxu0 0.0
          %4273 = vmatpush1.msra.mxu0 0.0
          %4274 = vmatprep.subr.mxu0 0.0
          %4275 = vmatpush1.msra.mxu0 0.0
          %4276 = vmatprep.subr.mxu0 0.0
          %4277 = vmatpush1.msra.mxu0 0.0
          %4278 = vmatprep.subr.mxu0 0.0
          %4279 = vmatpush1.msra.mxu0 0.0
          %4280 = vmatprep.subr.mxu0 0.0
          %4281 = vmatpush1.msra.mxu0 0.0
          %4282 = vmatprep.subr.mxu0 0.0
          %4283 = vmatpush1.msra.mxu0 0.0
          %4284 = vmatprep.subr.mxu0 0.0
          %4285 = vmatpush1.msra.mxu0 0.0
          %4286 = vmatprep.subr.mxu0 0.0
          %4287 = vmatpush1.msra.mxu0 0.0
          %4288 = vmatprep.subr.mxu0 0.0
          %4289 = vmatpush1.msra.mxu0 0.0
          %4290 = vmatprep.subr.mxu0 0.0
          %4291 = vmatpush1.msra.mxu0 0.0
          %4292 = vmatprep.subr.mxu0 0.0
          %4293 = vmatpush1.msra.mxu0 0.0
          %4294 = vmatprep.subr.mxu0 0.0
          %4295 = vmatpush1.msra.mxu0 0.0
          %4296 = vmatprep.subr.mxu0 0.0
          %4297 = vmatpush1.msra.mxu0 0.0
          %4298 = vmatprep.subr.mxu0 0.0
          %4299 = vmatpush1.msra.mxu0 0.0
          %4300 = vmatprep.subr.mxu0 0.0
          %4301 = vmatpush1.msra.mxu0 0.0
          %4302 = vmatprep.subr.mxu0 0.0
          %4303 = vmatpush1.msra.mxu0 0.0
          %4304 = vmatprep.subr.mxu0 0.0
          %4305 = vmatpush1.msra.mxu0 0.0
          %4306 = vmatprep.subr.mxu0 0.0
          %4307 = vmatpush1.msra.mxu0 0.0
          %4308 = vmatprep.subr.mxu0 0.0
          %4309 = vmatpush1.msra.mxu0 0.0
          %4310 = vmatprep.subr.mxu0 0.0
          %4311 = vmatpush1.msra.mxu0 0.0
          %4312 = vmatprep.subr.mxu0 0.0
          %4313 = vmatpush1.msra.mxu0 0.0
          %4314 = vmatprep.subr.mxu0 0.0
          %4315 = vmatpush1.msra.mxu0 0.0
          %4316 = vmatprep.subr.mxu0 0.0
          %4317 = vmatpush1.msra.mxu0 0.0
          %4318 = vmatprep.subr.mxu0 0.0
          %4319 = vmatpush1.msra.mxu0 0.0
          %4320 = vmatprep.subr.mxu0 0.0
          %4321 = vmatpush1.msra.mxu0 0.0
          %4322 = vmatprep.subr.mxu0 0.0
          %4323 = vmatpush1.msra.mxu0 0.0
          %4324 = vmatprep.mubr.f32.mxu0 0.0
          %v4325 = vand.u32 %v4031, 4294901760
          %v4326 = vsub.f32 %v4031, %v4325
          %v4327 = vand.u32 %v4326, 4294901760
          %4328 = vmatmul.mubr.f32.gmra.mrb[0].mxu0 %v4327
          %v4329 = vpop.f32.mrb[0].mxu0
          %v4330 = vadd.f32 %v4256, %v4329
          %v4331 = vpop.f32.mrb[0].mxu0
          %4332 = vdwg.mxu0
          %4333 = vmatprep.subr.mxu0 0.0
          %v4334 = vand.u32 %v4020, 4294901760
          %v4335 = vsub.f32 %v4020, %v4334
          %v4336 = vand.u32 %v4335, 4294901760
          %4337 = vmatpush1.msra.mxu0 %v4336
          %4338 = vmatprep.subr.mxu0 0.0
          %4339 = vmatpush1.msra.mxu0 0.0
          %4340 = vmatprep.subr.mxu0 0.0
          %4341 = vmatpush1.msra.mxu0 0.0
          %4342 = vmatprep.subr.mxu0 0.0
          %4343 = vmatpush1.msra.mxu0 0.0
          %4344 = vmatprep.subr.mxu0 0.0
          %4345 = vmatpush1.msra.mxu0 0.0
          %4346 = vmatprep.subr.mxu0 0.0
          %4347 = vmatpush1.msra.mxu0 0.0
          %4348 = vmatprep.subr.mxu0 0.0
          %4349 = vmatpush1.msra.mxu0 0.0
          %4350 = vmatprep.subr.mxu0 0.0
          %4351 = vmatpush1.msra.mxu0 0.0
          %4352 = vmatprep.subr.mxu0 0.0
          %4353 = vmatpush1.msra.mxu0 0.0
          %4354 = vmatprep.subr.mxu0 0.0
          %4355 = vmatpush1.msra.mxu0 0.0
          %4356 = vmatprep.subr.mxu0 0.0
          %4357 = vmatpush1.msra.mxu0 0.0
          %4358 = vmatprep.subr.mxu0 0.0
          %4359 = vmatpush1.msra.mxu0 0.0
          %4360 = vmatprep.subr.mxu0 0.0
          %4361 = vmatpush1.msra.mxu0 0.0
          %4362 = vmatprep.subr.mxu0 0.0
          %4363 = vmatpush1.msra.mxu0 0.0
          %4364 = vmatprep.subr.mxu0 0.0
          %4365 = vmatpush1.msra.mxu0 0.0
          %4366 = vmatprep.subr.mxu0 0.0
          %4367 = vmatpush1.msra.mxu0 0.0
          %4368 = vmatprep.subr.mxu0 0.0
          %4369 = vmatpush1.msra.mxu0 0.0
          %4370 = vmatprep.subr.mxu0 0.0
          %4371 = vmatpush1.msra.mxu0 0.0
          %4372 = vmatprep.subr.mxu0 0.0
          %4373 = vmatpush1.msra.mxu0 0.0
          %4374 = vmatprep.subr.mxu0 0.0
          %4375 = vmatpush1.msra.mxu0 0.0
          %4376 = vmatprep.subr.mxu0 0.0
          %4377 = vmatpush1.msra.mxu0 0.0
          %4378 = vmatprep.subr.mxu0 0.0
          %4379 = vmatpush1.msra.mxu0 0.0
          %4380 = vmatprep.subr.mxu0 0.0
          %4381 = vmatpush1.msra.mxu0 0.0
          %4382 = vmatprep.subr.mxu0 0.0
          %4383 = vmatpush1.msra.mxu0 0.0
          %4384 = vmatprep.subr.mxu0 0.0
          %4385 = vmatpush1.msra.mxu0 0.0
          %4386 = vmatprep.subr.mxu0 0.0
          %4387 = vmatpush1.msra.mxu0 0.0
          %4388 = vmatprep.subr.mxu0 0.0
          %4389 = vmatpush1.msra.mxu0 0.0
          %4390 = vmatprep.subr.mxu0 0.0
          %4391 = vmatpush1.msra.mxu0 0.0
          %4392 = vmatprep.subr.mxu0 0.0
          %4393 = vmatpush1.msra.mxu0 0.0
          %4394 = vmatprep.subr.mxu0 0.0
          %4395 = vmatpush1.msra.mxu0 0.0
          %4396 = vmatprep.subr.mxu0 0.0
          %4397 = vmatpush1.msra.mxu0 0.0
          %4398 = vmatprep.subr.mxu0 0.0
          %4399 = vmatpush1.msra.mxu0 0.0
          %4400 = vmatprep.mubr.f32.mxu0 0.0
          %v4401 = vand.u32 %v4031, 4294901760
          %4402 = vmatmul.mubr.f32.gmra.mrb[0].mxu0 %v4401
          %v4403 = vpop.f32.mrb[0].mxu0
          %v4404 = vadd.f32 %v4330, %v4403
          %v4405 = vpop.f32.mrb[0].mxu0
          %4406 = vdwg.mxu0
          %4407 = vmatprep.subr.mxu0 0.0
          %v4408 = vand.u32 %v4020, 4294901760
          %4409 = vmatpush1.msra.mxu0 %v4408
          %4410 = vmatprep.subr.mxu0 0.0
          %4411 = vmatpush1.msra.mxu0 0.0
          %4412 = vmatprep.subr.mxu0 0.0
          %4413 = vmatpush1.msra.mxu0 0.0
          %4414 = vmatprep.subr.mxu0 0.0
          %4415 = vmatpush1.msra.mxu0 0.0
          %4416 = vmatprep.subr.mxu0 0.0
          %4417 = vmatpush1.msra.mxu0 0.0
          %4418 = vmatprep.subr.mxu0 0.0
          %4419 = vmatpush1.msra.mxu0 0.0
          %4420 = vmatprep.subr.mxu0 0.0
          %4421 = vmatpush1.msra.mxu0 0.0
          %4422 = vmatprep.subr.mxu0 0.0
          %4423 = vmatpush1.msra.mxu0 0.0
          %4424 = vmatprep.subr.mxu0 0.0
          %4425 = vmatpush1.msra.mxu0 0.0
          %4426 = vmatprep.subr.mxu0 0.0
          %4427 = vmatpush1.msra.mxu0 0.0
          %4428 = vmatprep.subr.mxu0 0.0
          %4429 = vmatpush1.msra.mxu0 0.0
          %4430 = vmatprep.subr.mxu0 0.0
          %4431 = vmatpush1.msra.mxu0 0.0
          %4432 = vmatprep.subr.mxu0 0.0
          %4433 = vmatpush1.msra.mxu0 0.0
          %4434 = vmatprep.subr.mxu0 0.0
          %4435 = vmatpush1.msra.mxu0 0.0
          %4436 = vmatprep.subr.mxu0 0.0
          %4437 = vmatpush1.msra.mxu0 0.0
          %4438 = vmatprep.subr.mxu0 0.0
          %4439 = vmatpush1.msra.mxu0 0.0
          %4440 = vmatprep.subr.mxu0 0.0
          %4441 = vmatpush1.msra.mxu0 0.0
          %4442 = vmatprep.subr.mxu0 0.0
          %4443 = vmatpush1.msra.mxu0 0.0
          %4444 = vmatprep.subr.mxu0 0.0
          %4445 = vmatpush1.msra.mxu0 0.0
          %4446 = vmatprep.subr.mxu0 0.0
          %4447 = vmatpush1.msra.mxu0 0.0
          %4448 = vmatprep.subr.mxu0 0.0
          %4449 = vmatpush1.msra.mxu0 0.0
          %4450 = vmatprep.subr.mxu0 0.0
          %4451 = vmatpush1.msra.mxu0 0.0
          %4452 = vmatprep.subr.mxu0 0.0
          %4453 = vmatpush1.msra.mxu0 0.0
          %4454 = vmatprep.subr.mxu0 0.0
          %4455 = vmatpush1.msra.mxu0 0.0
          %4456 = vmatprep.subr.mxu0 0.0
          %4457 = vmatpush1.msra.mxu0 0.0
          %4458 = vmatprep.subr.mxu0 0.0
          %4459 = vmatpush1.msra.mxu0 0.0
          %4460 = vmatprep.subr.mxu0 0.0
          %4461 = vmatpush1.msra.mxu0 0.0
          %4462 = vmatprep.subr.mxu0 0.0
          %4463 = vmatpush1.msra.mxu0 0.0
          %4464 = vmatprep.subr.mxu0 0.0
          %4465 = vmatpush1.msra.mxu0 0.0
          %4466 = vmatprep.subr.mxu0 0.0
          %4467 = vmatpush1.msra.mxu0 0.0
          %4468 = vmatprep.subr.mxu0 0.0
          %4469 = vmatpush1.msra.mxu0 0.0
          %4470 = vmatprep.subr.mxu0 0.0
          %4471 = vmatpush1.msra.mxu0 0.0
          %4472 = vmatprep.mubr.f32.mxu0 0.0
          %v4473 = vand.u32 %v4031, 4294901760
          %4474 = vmatmul.mubr.f32.gmra.mrb[0].mxu0 %v4473
          %v4475 = vpop.f32.mrb[0].mxu0
          %v4476 = vadd.f32 %v4404, %v4475
          %v4477 = vpop.f32.mrb[0].mxu0
          %4478 = vdwg.mxu0
          %v4479 = vmul.f32 %v4020, %v4020
          %4480 = vmatprep.subr.mxu0 0.0
          %v4481 = vand.u32 %v4479, 4294901760
          %4482 = vmatpush1.msra.mxu0 %v4481
          %4483 = vmatprep.subr.mxu0 0.0
          %4484 = vmatpush1.msra.mxu0 0.0
          %4485 = vmatprep.subr.mxu0 0.0
          %4486 = vmatpush1.msra.mxu0 0.0
          %4487 = vmatprep.subr.mxu0 0.0
          %4488 = vmatpush1.msra.mxu0 0.0
          %4489 = vmatprep.subr.mxu0 0.0
          %4490 = vmatpush1.msra.mxu0 0.0
          %4491 = vmatprep.subr.mxu0 0.0
          %4492 = vmatpush1.msra.mxu0 0.0
          %4493 = vmatprep.subr.mxu0 0.0
          %4494 = vmatpush1.msra.mxu0 0.0
          %4495 = vmatprep.subr.mxu0 0.0
          %4496 = vmatpush1.msra.mxu0 0.0
          %4497 = vmatprep.subr.mxu0 0.0
          %4498 = vmatpush1.msra.mxu0 0.0
          %4499 = vmatprep.subr.mxu0 0.0
          %4500 = vmatpush1.msra.mxu0 0.0
          %4501 = vmatprep.subr.mxu0 0.0
          %4502 = vmatpush1.msra.mxu0 0.0
          %4503 = vmatprep.subr.mxu0 0.0
          %4504 = vmatpush1.msra.mxu0 0.0
          %4505 = vmatprep.subr.mxu0 0.0
          %4506 = vmatpush1.msra.mxu0 0.0
          %4507 = vmatprep.subr.mxu0 0.0
          %4508 = vmatpush1.msra.mxu0 0.0
          %4509 = vmatprep.subr.mxu0 0.0
          %4510 = vmatpush1.msra.mxu0 0.0
          %4511 = vmatprep.subr.mxu0 0.0
          %4512 = vmatpush1.msra.mxu0 0.0
          %4513 = vmatprep.subr.mxu0 0.0
          %4514 = vmatpush1.msra.mxu0 0.0
          %4515 = vmatprep.subr.mxu0 0.0
          %4516 = vmatpush1.msra.mxu0 0.0
          %4517 = vmatprep.subr.mxu0 0.0
          %4518 = vmatpush1.msra.mxu0 0.0
          %4519 = vmatprep.subr.mxu0 0.0
          %4520 = vmatpush1.msra.mxu0 0.0
          %4521 = vmatprep.subr.mxu0 0.0
          %4522 = vmatpush1.msra.mxu0 0.0
          %4523 = vmatprep.subr.mxu0 0.0
          %4524 = vmatpush1.msra.mxu0 0.0
          %4525 = vmatprep.subr.mxu0 0.0
          %4526 = vmatpush1.msra.mxu0 0.0
          %4527 = vmatprep.subr.mxu0 0.0
          %4528 = vmatpush1.msra.mxu0 0.0
          %4529 = vmatprep.subr.mxu0 0.0
          %4530 = vmatpush1.msra.mxu0 0.0
          %4531 = vmatprep.subr.mxu0 0.0
          %4532 = vmatpush1.msra.mxu0 0.0
          %4533 = vmatprep.subr.mxu0 0.0
          %4534 = vmatpush1.msra.mxu0 0.0
          %4535 = vmatprep.subr.mxu0 0.0
          %4536 = vmatpush1.msra.mxu0 0.0
          %4537 = vmatprep.subr.mxu0 0.0
          %4538 = vmatpush1.msra.mxu0 0.0
          %4539 = vmatprep.subr.mxu0 0.0
          %4540 = vmatpush1.msra.mxu0 0.0
          %4541 = vmatprep.subr.mxu0 0.0
          %4542 = vmatpush1.msra.mxu0 0.0
          %4543 = vmatprep.subr.mxu0 0.0
          %4544 = vmatpush1.msra.mxu0 0.0
          %4545 = vmatprep.mubr.f32.mxu0 0.0
          %v4546 = vand.u32 %v4031, 4294901760
          %v4547 = vsub.f32 %v4031, %v4546
          %v4548 = vand.u32 %v4547, 4294901760
          %v4549 = vsub.f32 %v4547, %v4548
          %v4550 = vand.u32 %v4549, 4294901760
          %4551 = vmatmul.mubr.f32.gmra.mrb[0].mxu0 %v4550
          %v4552 = vpop.f32.mrb[0].mxu0
          %v4553 = vadd.f32 0.0, %v4552
          %v4554 = vpop.f32.mrb[0].mxu0
          %4555 = vdwg.mxu0
          %4556 = vmatprep.subr.mxu0 0.0
          %v4557 = vand.u32 %v4479, 4294901760
          %v4558 = vsub.f32 %v4479, %v4557
          %v4559 = vand.u32 %v4558, 4294901760
          %v4560 = vsub.f32 %v4558, %v4559
          %v4561 = vand.u32 %v4560, 4294901760
          %4562 = vmatpush1.msra.mxu0 %v4561
          %4563 = vmatprep.subr.mxu0 0.0
          %4564 = vmatpush1.msra.mxu0 0.0
          %4565 = vmatprep.subr.mxu0 0.0
          %4566 = vmatpush1.msra.mxu0 0.0
          %4567 = vmatprep.subr.mxu0 0.0
          %4568 = vmatpush1.msra.mxu0 0.0
          %4569 = vmatprep.subr.mxu0 0.0
          %4570 = vmatpush1.msra.mxu0 0.0
          %4571 = vmatprep.subr.mxu0 0.0
          %4572 = vmatpush1.msra.mxu0 0.0
          %4573 = vmatprep.subr.mxu0 0.0
          %4574 = vmatpush1.msra.mxu0 0.0
          %4575 = vmatprep.subr.mxu0 0.0
          %4576 = vmatpush1.msra.mxu0 0.0
          %4577 = vmatprep.subr.mxu0 0.0
          %4578 = vmatpush1.msra.mxu0 0.0
          %4579 = vmatprep.subr.mxu0 0.0
          %4580 = vmatpush1.msra.mxu0 0.0
          %4581 = vmatprep.subr.mxu0 0.0
          %4582 = vmatpush1.msra.mxu0 0.0
          %4583 = vmatprep.subr.mxu0 0.0
          %4584 = vmatpush1.msra.mxu0 0.0
          %4585 = vmatprep.subr.mxu0 0.0
          %4586 = vmatpush1.msra.mxu0 0.0
          %4587 = vmatprep.subr.mxu0 0.0
          %4588 = vmatpush1.msra.mxu0 0.0
          %4589 = vmatprep.subr.mxu0 0.0
          %4590 = vmatpush1.msra.mxu0 0.0
          %4591 = vmatprep.subr.mxu0 0.0
          %4592 = vmatpush1.msra.mxu0 0.0
          %4593 = vmatprep.subr.mxu0 0.0
          %4594 = vmatpush1.msra.mxu0 0.0
          %4595 = vmatprep.subr.mxu0 0.0
          %4596 = vmatpush1.msra.mxu0 0.0
          %4597 = vmatprep.subr.mxu0 0.0
          %4598 = vmatpush1.msra.mxu0 0.0
          %4599 = vmatprep.subr.mxu0 0.0
          %4600 = vmatpush1.msra.mxu0 0.0
          %4601 = vmatprep.subr.mxu0 0.0
          %4602 = vmatpush1.msra.mxu0 0.0
          %4603 = vmatprep.subr.mxu0 0.0
          %4604 = vmatpush1.msra.mxu0 0.0
          %4605 = vmatprep.subr.mxu0 0.0
          %4606 = vmatpush1.msra.mxu0 0.0
          %4607 = vmatprep.subr.mxu0 0.0
          %4608 = vmatpush1.msra.mxu0 0.0
          %4609 = vmatprep.subr.mxu0 0.0
          %4610 = vmatpush1.msra.mxu0 0.0
          %4611 = vmatprep.subr.mxu0 0.0
          %4612 = vmatpush1.msra.mxu0 0.0
          %4613 = vmatprep.subr.mxu0 0.0
          %4614 = vmatpush1.msra.mxu0 0.0
          %4615 = vmatprep.subr.mxu0 0.0
          %4616 = vmatpush1.msra.mxu0 0.0
          %4617 = vmatprep.subr.mxu0 0.0
          %4618 = vmatpush1.msra.mxu0 0.0
          %4619 = vmatprep.subr.mxu0 0.0
          %4620 = vmatpush1.msra.mxu0 0.0
          %4621 = vmatprep.subr.mxu0 0.0
          %4622 = vmatpush1.msra.mxu0 0.0
          %4623 = vmatprep.subr.mxu0 0.0
          %4624 = vmatpush1.msra.mxu0 0.0
          %4625 = vmatprep.mubr.f32.mxu0 0.0
          %v4626 = vand.u32 %v4031, 4294901760
          %4627 = vmatmul.mubr.f32.gmra.mrb[0].mxu0 %v4626
          %v4628 = vpop.f32.mrb[0].mxu0
          %v4629 = vadd.f32 %v4553, %v4628
          %v4630 = vpop.f32.mrb[0].mxu0
          %4631 = vdwg.mxu0
          %4632 = vmatprep.subr.mxu0 0.0
          %v4633 = vand.u32 %v4479, 4294901760
          %v4634 = vsub.f32 %v4479, %v4633
          %4635 = vmatpush1.msra.mxu0 %v4634
          %4636 = vmatprep.subr.mxu0 0.0
          %4637 = vmatpush1.msra.mxu0 0.0
          %4638 = vmatprep.subr.mxu0 0.0
          %4639 = vmatpush1.msra.mxu0 0.0
          %4640 = vmatprep.subr.mxu0 0.0
          %4641 = vmatpush1.msra.mxu0 0.0
          %4642 = vmatprep.subr.mxu0 0.0
          %4643 = vmatpush1.msra.mxu0 0.0
          %4644 = vmatprep.subr.mxu0 0.0
          %4645 = vmatpush1.msra.mxu0 0.0
          %4646 = vmatprep.subr.mxu0 0.0
          %4647 = vmatpush1.msra.mxu0 0.0
          %4648 = vmatprep.subr.mxu0 0.0
          %4649 = vmatpush1.msra.mxu0 0.0
          %4650 = vmatprep.subr.mxu0 0.0
          %4651 = vmatpush1.msra.mxu0 0.0
          %4652 = vmatprep.subr.mxu0 0.0
          %4653 = vmatpush1.msra.mxu0 0.0
          %4654 = vmatprep.subr.mxu0 0.0
          %4655 = vmatpush1.msra.mxu0 0.0
          %4656 = vmatprep.subr.mxu0 0.0
          %4657 = vmatpush1.msra.mxu0 0.0
          %4658 = vmatprep.subr.mxu0 0.0
          %4659 = vmatpush1.msra.mxu0 0.0
          %4660 = vmatprep.subr.mxu0 0.0
          %4661 = vmatpush1.msra.mxu0 0.0
          %4662 = vmatprep.subr.mxu0 0.0
          %4663 = vmatpush1.msra.mxu0 0.0
          %4664 = vmatprep.subr.mxu0 0.0
          %4665 = vmatpush1.msra.mxu0 0.0
          %4666 = vmatprep.subr.mxu0 0.0
          %4667 = vmatpush1.msra.mxu0 0.0
          %4668 = vmatprep.subr.mxu0 0.0
          %4669 = vmatpush1.msra.mxu0 0.0
          %4670 = vmatprep.subr.mxu0 0.0
          %4671 = vmatpush1.msra.mxu0 0.0
          %4672 = vmatprep.subr.mxu0 0.0
          %4673 = vmatpush1.msra.mxu0 0.0
          %4674 = vmatprep.subr.mxu0 0.0
          %4675 = vmatpush1.msra.mxu0 0.0
          %4676 = vmatprep.subr.mxu0 0.0
          %4677 = vmatpush1.msra.mxu0 0.0
          %4678 = vmatprep.subr.mxu0 0.0
          %4679 = vmatpush1.msra.mxu0 0.0
          %4680 = vmatprep.subr.mxu0 0.0
          %4681 = vmatpush1.msra.mxu0 0.0
          %4682 = vmatprep.subr.mxu0 0.0
          %4683 = vmatpush1.msra.mxu0 0.0
          %4684 = vmatprep.subr.mxu0 0.0
          %4685 = vmatpush1.msra.mxu0 0.0
          %4686 = vmatprep.subr.mxu0 0.0
          %4687 = vmatpush1.msra.mxu0 0.0
          %4688 = vmatprep.subr.mxu0 0.0
          %4689 = vmatpush1.msra.mxu0 0.0
          %4690 = vmatprep.subr.mxu0 0.0
          %4691 = vmatpush1.msra.mxu0 0.0
          %4692 = vmatprep.subr.mxu0 0.0
          %4693 = vmatpush1.msra.mxu0 0.0
          %4694 = vmatprep.subr.mxu0 0.0
          %4695 = vmatpush1.msra.mxu0 0.0
          %4696 = vmatprep.subr.mxu0 0.0
          %4697 = vmatpush1.msra.mxu0 0.0
          %4698 = vmatprep.mubr.f32.mxu0 0.0
          %v4699 = vand.u32 %v4031, 4294901760
          %v4700 = vsub.f32 %v4031, %v4699
          %4701 = vmatmul.mubr.f32.gmra.mrb[0].mxu0 %v4700
          %v4702 = vpop.f32.mrb[0].mxu0
          %v4703 = vadd.f32 %v4629, %v4702
          %v4704 = vpop.f32.mrb[0].mxu0
          %4705 = vdwg.mxu0
          %4706 = vmatprep.subr.mxu0 0.0
          %v4707 = vand.u32 %v4479, 4294901760
          %4708 = vmatpush1.msra.mxu0 %v4707
          %4709 = vmatprep.subr.mxu0 0.0
          %4710 = vmatpush1.msra.mxu0 0.0
          %4711 = vmatprep.subr.mxu0 0.0
          %4712 = vmatpush1.msra.mxu0 0.0
          %4713 = vmatprep.subr.mxu0 0.0
          %4714 = vmatpush1.msra.mxu0 0.0
          %4715 = vmatprep.subr.mxu0 0.0
          %4716 = vmatpush1.msra.mxu0 0.0
          %4717 = vmatprep.subr.mxu0 0.0
          %4718 = vmatpush1.msra.mxu0 0.0
          %4719 = vmatprep.subr.mxu0 0.0
          %4720 = vmatpush1.msra.mxu0 0.0
          %4721 = vmatprep.subr.mxu0 0.0
          %4722 = vmatpush1.msra.mxu0 0.0
          %4723 = vmatprep.subr.mxu0 0.0
          %4724 = vmatpush1.msra.mxu0 0.0
          %4725 = vmatprep.subr.mxu0 0.0
          %4726 = vmatpush1.msra.mxu0 0.0
          %4727 = vmatprep.subr.mxu0 0.0
          %4728 = vmatpush1.msra.mxu0 0.0
          %4729 = vmatprep.subr.mxu0 0.0
          %4730 = vmatpush1.msra.mxu0 0.0
          %4731 = vmatprep.subr.mxu0 0.0
          %4732 = vmatpush1.msra.mxu0 0.0
          %4733 = vmatprep.subr.mxu0 0.0
          %4734 = vmatpush1.msra.mxu0 0.0
          %4735 = vmatprep.subr.mxu0 0.0
          %4736 = vmatpush1.msra.mxu0 0.0
          %4737 = vmatprep.subr.mxu0 0.0
          %4738 = vmatpush1.msra.mxu0 0.0
          %4739 = vmatprep.subr.mxu0 0.0
          %4740 = vmatpush1.msra.mxu0 0.0
          %4741 = vmatprep.subr.mxu0 0.0
          %4742 = vmatpush1.msra.mxu0 0.0
          %4743 = vmatprep.subr.mxu0 0.0
          %4744 = vmatpush1.msra.mxu0 0.0
          %4745 = vmatprep.subr.mxu0 0.0
          %4746 = vmatpush1.msra.mxu0 0.0
          %4747 = vmatprep.subr.mxu0 0.0
          %4748 = vmatpush1.msra.mxu0 0.0
          %4749 = vmatprep.subr.mxu0 0.0
          %4750 = vmatpush1.msra.mxu0 0.0
          %4751 = vmatprep.subr.mxu0 0.0
          %4752 = vmatpush1.msra.mxu0 0.0
          %4753 = vmatprep.subr.mxu0 0.0
          %4754 = vmatpush1.msra.mxu0 0.0
          %4755 = vmatprep.subr.mxu0 0.0
          %4756 = vmatpush1.msra.mxu0 0.0
          %4757 = vmatprep.subr.mxu0 0.0
          %4758 = vmatpush1.msra.mxu0 0.0
          %4759 = vmatprep.subr.mxu0 0.0
          %4760 = vmatpush1.msra.mxu0 0.0
          %4761 = vmatprep.subr.mxu0 0.0
          %4762 = vmatpush1.msra.mxu0 0.0
          %4763 = vmatprep.subr.mxu0 0.0
          %4764 = vmatpush1.msra.mxu0 0.0
          %4765 = vmatprep.subr.mxu0 0.0
          %4766 = vmatpush1.msra.mxu0 0.0
          %4767 = vmatprep.subr.mxu0 0.0
          %4768 = vmatpush1.msra.mxu0 0.0
          %4769 = vmatprep.subr.mxu0 0.0
          %4770 = vmatpush1.msra.mxu0 0.0
          %4771 = vmatprep.mubr.f32.mxu0 0.0
          %v4772 = vand.u32 %v4031, 4294901760
          %v4773 = vsub.f32 %v4031, %v4772
          %v4774 = vand.u32 %v4773, 4294901760
          %4775 = vmatmul.mubr.f32.gmra.mrb[0].mxu0 %v4774
          %v4776 = vpop.f32.mrb[0].mxu0
          %v4777 = vadd.f32 %v4703, %v4776
          %v4778 = vpop.f32.mrb[0].mxu0
          %4779 = vdwg.mxu0
          %4780 = vmatprep.subr.mxu0 0.0
          %v4781 = vand.u32 %v4479, 4294901760
          %v4782 = vsub.f32 %v4479, %v4781
          %v4783 = vand.u32 %v4782, 4294901760
          %4784 = vmatpush1.msra.mxu0 %v4783
          %4785 = vmatprep.subr.mxu0 0.0
          %4786 = vmatpush1.msra.mxu0 0.0
          %4787 = vmatprep.subr.mxu0 0.0
          %4788 = vmatpush1.msra.mxu0 0.0
          %4789 = vmatprep.subr.mxu0 0.0
          %4790 = vmatpush1.msra.mxu0 0.0
          %4791 = vmatprep.subr.mxu0 0.0
          %4792 = vmatpush1.msra.mxu0 0.0
          %4793 = vmatprep.subr.mxu0 0.0
          %4794 = vmatpush1.msra.mxu0 0.0
          %4795 = vmatprep.subr.mxu0 0.0
          %4796 = vmatpush1.msra.mxu0 0.0
          %4797 = vmatprep.subr.mxu0 0.0
          %4798 = vmatpush1.msra.mxu0 0.0
          %4799 = vmatprep.subr.mxu0 0.0
          %4800 = vmatpush1.msra.mxu0 0.0
          %4801 = vmatprep.subr.mxu0 0.0
          %4802 = vmatpush1.msra.mxu0 0.0
          %4803 = vmatprep.subr.mxu0 0.0
          %4804 = vmatpush1.msra.mxu0 0.0
          %4805 = vmatprep.subr.mxu0 0.0
          %4806 = vmatpush1.msra.mxu0 0.0
          %4807 = vmatprep.subr.mxu0 0.0
          %4808 = vmatpush1.msra.mxu0 0.0
          %4809 = vmatprep.subr.mxu0 0.0
          %4810 = vmatpush1.msra.mxu0 0.0
          %4811 = vmatprep.subr.mxu0 0.0
          %4812 = vmatpush1.msra.mxu0 0.0
          %4813 = vmatprep.subr.mxu0 0.0
          %4814 = vmatpush1.msra.mxu0 0.0
          %4815 = vmatprep.subr.mxu0 0.0
          %4816 = vmatpush1.msra.mxu0 0.0
          %4817 = vmatprep.subr.mxu0 0.0
          %4818 = vmatpush1.msra.mxu0 0.0
          %4819 = vmatprep.subr.mxu0 0.0
          %4820 = vmatpush1.msra.mxu0 0.0
          %4821 = vmatprep.subr.mxu0 0.0
          %4822 = vmatpush1.msra.mxu0 0.0
          %4823 = vmatprep.subr.mxu0 0.0
          %4824 = vmatpush1.msra.mxu0 0.0
          %4825 = vmatprep.subr.mxu0 0.0
          %4826 = vmatpush1.msra.mxu0 0.0
          %4827 = vmatprep.subr.mxu0 0.0
          %4828 = vmatpush1.msra.mxu0 0.0
          %4829 = vmatprep.subr.mxu0 0.0
          %4830 = vmatpush1.msra.mxu0 0.0
          %4831 = vmatprep.subr.mxu0 0.0
          %4832 = vmatpush1.msra.mxu0 0.0
          %4833 = vmatprep.subr.mxu0 0.0
          %4834 = vmatpush1.msra.mxu0 0.0
          %4835 = vmatprep.subr.mxu0 0.0
          %4836 = vmatpush1.msra.mxu0 0.0
          %4837 = vmatprep.subr.mxu0 0.0
          %4838 = vmatpush1.msra.mxu0 0.0
          %4839 = vmatprep.subr.mxu0 0.0
          %4840 = vmatpush1.msra.mxu0 0.0
          %4841 = vmatprep.subr.mxu0 0.0
          %4842 = vmatpush1.msra.mxu0 0.0
          %4843 = vmatprep.subr.mxu0 0.0
          %4844 = vmatpush1.msra.mxu0 0.0
          %4845 = vmatprep.subr.mxu0 0.0
          %4846 = vmatpush1.msra.mxu0 0.0
          %4847 = vmatprep.mubr.f32.mxu0 0.0
          %v4848 = vand.u32 %v4031, 4294901760
          %4849 = vmatmul.mubr.f32.gmra.mrb[0].mxu0 %v4848
          %v4850 = vpop.f32.mrb[0].mxu0
          %v4851 = vadd.f32 %v4777, %v4850
          %v4852 = vpop.f32.mrb[0].mxu0
          %4853 = vdwg.mxu0
          %4854 = vmatprep.subr.mxu0 0.0
          %v4855 = vand.u32 %v4479, 4294901760
          %4856 = vmatpush1.msra.mxu0 %v4855
          %4857 = vmatprep.subr.mxu0 0.0
          %4858 = vmatpush1.msra.mxu0 0.0
          %4859 = vmatprep.subr.mxu0 0.0
          %4860 = vmatpush1.msra.mxu0 0.0
          %4861 = vmatprep.subr.mxu0 0.0
          %4862 = vmatpush1.msra.mxu0 0.0
          %4863 = vmatprep.subr.mxu0 0.0
          %4864 = vmatpush1.msra.mxu0 0.0
          %4865 = vmatprep.subr.mxu0 0.0
          %4866 = vmatpush1.msra.mxu0 0.0
          %4867 = vmatprep.subr.mxu0 0.0
          %4868 = vmatpush1.msra.mxu0 0.0
          %4869 = vmatprep.subr.mxu0 0.0
          %4870 = vmatpush1.msra.mxu0 0.0
          %4871 = vmatprep.subr.mxu0 0.0
          %4872 = vmatpush1.msra.mxu0 0.0
          %4873 = vmatprep.subr.mxu0 0.0
          %4874 = vmatpush1.msra.mxu0 0.0
          %4875 = vmatprep.subr.mxu0 0.0
          %4876 = vmatpush1.msra.mxu0 0.0
          %4877 = vmatprep.subr.mxu0 0.0
          %4878 = vmatpush1.msra.mxu0 0.0
          %4879 = vmatprep.subr.mxu0 0.0
          %4880 = vmatpush1.msra.mxu0 0.0
          %4881 = vmatprep.subr.mxu0 0.0
          %4882 = vmatpush1.msra.mxu0 0.0
          %4883 = vmatprep.subr.mxu0 0.0
          %4884 = vmatpush1.msra.mxu0 0.0
          %4885 = vmatprep.subr.mxu0 0.0
          %4886 = vmatpush1.msra.mxu0 0.0
          %4887 = vmatprep.subr.mxu0 0.0
          %4888 = vmatpush1.msra.mxu0 0.0
          %4889 = vmatprep.subr.mxu0 0.0
          %4890 = vmatpush1.msra.mxu0 0.0
          %4891 = vmatprep.subr.mxu0 0.0
          %4892 = vmatpush1.msra.mxu0 0.0
          %4893 = vmatprep.subr.mxu0 0.0
          %4894 = vmatpush1.msra.mxu0 0.0
          %4895 = vmatprep.subr.mxu0 0.0
          %4896 = vmatpush1.msra.mxu0 0.0
          %4897 = vmatprep.subr.mxu0 0.0
          %4898 = vmatpush1.msra.mxu0 0.0
          %4899 = vmatprep.subr.mxu0 0.0
          %4900 = vmatpush1.msra.mxu0 0.0
          %4901 = vmatprep.subr.mxu0 0.0
          %4902 = vmatpush1.msra.mxu0 0.0
          %4903 = vmatprep.subr.mxu0 0.0
          %4904 = vmatpush1.msra.mxu0 0.0
          %4905 = vmatprep.subr.mxu0 0.0
          %4906 = vmatpush1.msra.mxu0 0.0
          %4907 = vmatprep.subr.mxu0 0.0
          %4908 = vmatpush1.msra.mxu0 0.0
          %4909 = vmatprep.subr.mxu0 0.0
          %4910 = vmatpush1.msra.mxu0 0.0
          %4911 = vmatprep.subr.mxu0 0.0
          %4912 = vmatpush1.msra.mxu0 0.0
          %4913 = vmatprep.subr.mxu0 0.0
          %4914 = vmatpush1.msra.mxu0 0.0
          %4915 = vmatprep.subr.mxu0 0.0
          %4916 = vmatpush1.msra.mxu0 0.0
          %4917 = vmatprep.subr.mxu0 0.0
          %4918 = vmatpush1.msra.mxu0 0.0
          %4919 = vmatprep.mubr.f32.mxu0 0.0
          %v4920 = vand.u32 %v4031, 4294901760
          %4921 = vmatmul.mubr.f32.gmra.mrb[0].mxu0 %v4920
          %v4922 = vpop.f32.mrb[0].mxu0
          %v4923 = vadd.f32 %v4851, %v4922
          %v4924 = vpop.f32.mrb[0].mxu0
          %4925 = vdwg.mxu0
          %v4926 = vld [vmem:[#allocation6] sm:$0x3]
          %v4928 = vrot.slane %v4923, 7
          %vm4930 = vcmask 1040384
          %v4931 = vsel %vm4930, %v4476, %v4928
          %v4932 = vadd.f32 %v4926, %v4931
          %4933 = vst [vmem:[#allocation6] sm:$0x3] %v4932
          %4934 = vst [vmem:[%s3905] sm:$0xff] %v4020
        $region188: #{tpu_custom_call.1} parent=83 // pred_fallthru
          _
        %p4935 = scmp.eq.s32.totalorder %s45, 4
        // Predicated region
        $region197: #{tpu_custom_call.1} parent=83 // pred_check
          %p4936 = pneg %p4935
        $region198: #{tpu_custom_call.1} parent=83 // pred_check_branch
          %4938 = sbr.rel (%p4936) target = $region200
        $region199: #{tpu_custom_call.1} parent=83 // pred_region
          // Predicated region
          $region201: #{tpu_custom_call.1} parent=199 // pred_check
            %p4939 = pneg %p762
          $region202: #{tpu_custom_call.1} parent=199 // pred_check_branch
            %4941 = sbr.rel (%p4939) target = $region204
          $region203: #{tpu_custom_call.1} parent=199 // pred_region
            %v4942 = vld [vmem:[#allocation6] sm:$0x1]
            %v4943 = vmul.f32 %v4942, 0.125
            %v4944 = vld [vmem:[#allocation6 + $0x1] sm:$0x1]
            %v4945 = vmul.f32 %v4944, 0.125
            %v4946 = vmul.f32 %v4943, %v4943
            %v4947 = vsub.f32 %v4945, %v4946
            %v4948 = vmax.f32 %v4947, 0.0
            %v4949 = vld [vmem:[#allocation27] sm:$0x1]
            %v4950 = vadd.f32 %v4948, 1e-05
            %v4951 = vrsqrt.pop %v4950
            %v4952 = vmul.f32 %v4949, %v4951
            %v4953 = vld [vmem:[#allocation28] sm:$0x1]
            %v4954 = vmul.f32 %v4943, %v4952
            %v4955 = vsub.f32 %v4953, %v4954
            %v4957 = vlaneseq
            %v4958 = vshrl.u32 %v4957, 7
            %v4959 = vsub.s32 0, %v4958
            %v4960 = vrot.slane %v4955, %v4959
            %vm4962 = vcmask 1040384
            %v4963 = vsel %vm4962, %v4952, %v4960
            %4964 = vst [vmem:[#allocation6] sm:$0x3] %v4963
          $region204: #{tpu_custom_call.1} parent=199 // pred_fallthru
            _
          %s4965 = smul.u32 %s46, 8
          %s4966 = scalar_lea.vmem [#allocation2], %s4965
          %v4967 = vld [vmem:[%s4966] sm:$0xff]
          %v4968 = vld [vmem:[#allocation6] sm:$0x1]
          %v4969 = vlaneseq
          %v4970 = vshrl.u32 %v4969, 7
          %v4971 = vsub.s32 0, %v4970
          %v4972 = vrot.slane %v4968, %v4971
          %v4973 = vmul.f32 %v4967, %v4972
          %v4974 = vld [vmem:[#allocation6 + $0x1] sm:$0x1]
          %v4975 = vlaneseq
          %v4976 = vshrl.u32 %v4975, 7
          %v4977 = vsub.s32 0, %v4976
          %v4978 = vrot.slane %v4974, %v4977
          %v4979 = vadd.f32 %v4973, %v4978
          %v4980 = vmax.f32 %v4979, 0.0
          %v4981 = vpack.c.bf16 %v4980, %v4980
          %v4982 = vld [vmem:[#allocation30] sm:$0xf]
          %v4983 = vld [vmem:[#allocation30 + $0x4] sm:$0xf]
          %v4984 = vld [vmem:[#allocation30 + $0x8] sm:$0xf]
          %v4985 = vld [vmem:[#allocation30 + $0xc] sm:$0xf]
          %v4986 = vld [vmem:[#allocation30 + $0x10] sm:$0xf]
          %v4987 = vld [vmem:[#allocation30 + $0x14] sm:$0xf]
          %v4988 = vld [vmem:[#allocation30 + $0x18] sm:$0xf]
          %v4989 = vld [vmem:[#allocation30 + $0x1c] sm:$0xf]
          %v4990 = vld [vmem:[#allocation30 + $0x20] sm:$0xf]
          %v4991 = vld [vmem:[#allocation30 + $0x24] sm:$0xf]
          %v4992 = vld [vmem:[#allocation30 + $0x28] sm:$0xf]
          %v4993 = vld [vmem:[#allocation30 + $0x2c] sm:$0xf]
          %v4994 = vld [vmem:[#allocation30 + $0x30] sm:$0xf]
          %v4995 = vld [vmem:[#allocation30 + $0x34] sm:$0xf]
          %v4996 = vld [vmem:[#allocation30 + $0x38] sm:$0xf]
          %v4997 = vld [vmem:[#allocation30 + $0x3c] sm:$0xf]
          %v4998 = vld [vmem:[#allocation31] sm:$0x1]
          %v5000 = vlaneseq
          %v5001 = vshrl.u32 %v5000, 7
          %v5002 = vsub.s32 0, %v5001
          %v5003 = vrot.slane %v4998, %v5002
          %v5021 = vunpack.c.l.b16 %v4982
          %v5022 = vunpack.c.l.b16 %v4983
          %v5023 = vunpack.c.l.b16 %v4984
          %v5024 = vunpack.c.l.b16 %v4985
          %v5025 = vunpack.c.l.b16 %v4986
          %v5026 = vunpack.c.l.b16 %v4987
          %v5027 = vunpack.c.l.b16 %v4988
          %v5028 = vunpack.c.l.b16 %v4989
          %v5029 = vunpack.c.l.b16 %v4990
          %v5030 = vunpack.c.l.b16 %v4991
          %v5031 = vunpack.c.l.b16 %v4992
          %v5032 = vunpack.c.l.b16 %v4993
          %v5033 = vunpack.c.l.b16 %v4994
          %v5034 = vunpack.c.l.b16 %v4995
          %v5035 = vunpack.c.l.b16 %v4996
          %v5036 = vunpack.c.l.b16 %v4997
          %v5037 = vpack.c.b16 %v5022, %v5021
          %v5038 = vpack.c.b16 %v5024, %v5023
          %v5039 = vpack.c.b16 %v5026, %v5025
          %v5040 = vpack.c.b16 %v5028, %v5027
          %v5041 = vpack.c.b16 %v5030, %v5029
          %v5042 = vpack.c.b16 %v5032, %v5031
          %v5043 = vpack.c.b16 %v5034, %v5033
          %v5044 = vpack.c.b16 %v5036, %v5035
          %5053 = vmatprep.subr.bf16.mxu0 0
          %5054 = vmatpush1.bf16.msra.mxu0 %v5037
          %5055 = vmatprep.subr.bf16.mxu0 0
          %5056 = vmatpush1.bf16.msra.mxu0 %v5038
          %5057 = vmatprep.subr.bf16.mxu0 0
          %5058 = vmatpush1.bf16.msra.mxu0 %v5039
          %5059 = vmatprep.subr.bf16.mxu0 0
          %5060 = vmatpush1.bf16.msra.mxu0 %v5040
          %5061 = vmatprep.subr.bf16.mxu0 0
          %5062 = vmatpush1.bf16.msra.mxu0 %v5041
          %5063 = vmatprep.subr.bf16.mxu0 0
          %5064 = vmatpush1.bf16.msra.mxu0 %v5042
          %5065 = vmatprep.subr.bf16.mxu0 0
          %5066 = vmatpush1.bf16.msra.mxu0 %v5043
          %5067 = vmatprep.subr.bf16.mxu0 0
          %5068 = vmatpush1.bf16.msra.mxu0 %v5044
          %5069 = vmatprep.subr.bf16.mxu0 0
          %5070 = vmatpush1.bf16.msra.mxu0 0
          %5071 = vmatprep.subr.bf16.mxu0 0
          %5072 = vmatpush1.bf16.msra.mxu0 0
          %5073 = vmatprep.subr.bf16.mxu0 0
          %5074 = vmatpush1.bf16.msra.mxu0 0
          %5075 = vmatprep.subr.bf16.mxu0 0
          %5076 = vmatpush1.bf16.msra.mxu0 0
          %5077 = vmatprep.subr.bf16.mxu0 0
          %5078 = vmatpush1.bf16.msra.mxu0 0
          %5079 = vmatprep.subr.bf16.mxu0 0
          %5080 = vmatpush1.bf16.msra.mxu0 0
          %5081 = vmatprep.subr.bf16.mxu0 0
          %5082 = vmatpush1.bf16.msra.mxu0 0
          %5083 = vmatprep.subr.bf16.mxu0 0
          %5084 = vmatpush1.bf16.msra.mxu0 0
          %5085 = vmatprep.mubr.bf16.mxu0 0
          %5086 = vmatmul.mubr.bf16.gmra.mrb[0].mxu0 %v4981
          %v5087 = vpop.f32.mrb[0].mxu0
          %v5088 = vadd.f32 %v5003, %v5087
          %v5089 = vpop.f32.mrb[0].mxu0
          %v5090 = vpop.f32.mrb[0].mxu0
          %v5091 = vpop.f32.mrb[0].mxu0
          %5092 = vdwg.mxu0
          %vm5093 = vcmask 261120
          %5094 = vst.msk [vmem:[%s756] sm:$0xff] %vm5093, %v5088
        $region200: #{tpu_custom_call.1} parent=83 // pred_fallthru
          _
        %s5095 = sand.u32 %s410, 1
        %s5096 = scalar_lea.sflag [#allocation9], %s5095
        %s5097 = sand.u32 %s410, 1
        %s5098 = smul.addr %s5097, 8
        %s5099 = scalar_lea.vmem [#allocation33], %s5098
        // Predicated region
        $region205: #{tpu_custom_call.1} parent=83 // pred_check
          %p5100 = pneg %p420
        $region206: #{tpu_custom_call.1} parent=83 // pred_check_branch
          %5102 = sbr.rel (%p5100) target = $region208
        $region207: #{tpu_custom_call.1} parent=83 // pred_region
          %p5103 = scmp.eq.s32.totalorder %s45, 4
          %s5104 = scalar_select %p5103, %s46, 0
          %s5106 = ssub.s32 128, 128
          %5107 = vsyncadd %s5096, %s5106
          %s5108 = smul.addr %s5104, 128
          %s5109 = scalar_lea.hbm %s16, %s5108
          %s5111 = sshll.u32 %s5099, 4
          %s5112 = int_to_ptr.vmem [resolvable:$true] %s5111
          %5114 = dma.vmem_to_hbm [thread:$0]  %s5112, 128, %s5109, %s5096
        $region208: #{tpu_custom_call.1} parent=83 // pred_fallthru
          _
      $region84: #{tpu_custom_call.1} parent=5 // pred_fallthru
        _
      %p5115 = scmp.le.s32.totalorder 2, %s36
      // Predicated region
      $region209: #{tpu_custom_call.1} parent=5 // pred_check
        %p5116 = pneg %p5115
      $region210: #{tpu_custom_call.1} parent=5 // pred_check_branch
        %5118 = sbr.rel (%p5116) target = $region212
      $region211: #{tpu_custom_call.1} parent=5 // pred_region
        %s5119 = ssub.s32 %s36, 2
        // Predicated region
        $region213: #{tpu_custom_call.1} parent=211 // pred_check
          %p5120 = pneg %p426
        $region214: #{tpu_custom_call.1} parent=211 // pred_check_branch
          %5122 = sbr.rel (%p5120) target = $region216
        $region215: #{tpu_custom_call.1} parent=211 // pred_region
          %s5123 = sand.u32 %s411, 1
          %s5124 = scalar_lea.sflag [#allocation9], %s5123
          %s5125 = sand.u32 %s411, 1
          %s5126 = smul.addr %s5125, 8
          %s5127 = scalar_lea.vmem [#allocation33], %s5126
          %5128 = dma.done %s5124, 128
        $region216: #{tpu_custom_call.1} parent=211 // pred_fallthru
          _
      $region212: #{tpu_custom_call.1} parent=5 // pred_fallthru
        _
    $region6: #{tpu_custom_call.1} parent=1 // loop_footer
      %s40 = sadd.s32 1, %s36
    $region7: #{tpu_custom_call.1} parent=1 // loop_footer_branch
      %35 = sbr.rel target = $region3
    $region8: #{tpu_custom_call.1} parent=1 // loop_exit
      _
    %5129 = vsyncpa [#allocation8], 1
    %s5130 = scalar_lea.sflag [#allocation8], 1
    %5131 = vsyncpa %s5130, 1
    %5132 = vsyncpa [#allocation11], 1
    %5133 = vsyncpa [#allocation14], 1
    %5134 = vsyncpa [#allocation17], 1
    %5135 = vsyncpa [#allocation20], 1
    %5136 = vsyncpa [#allocation23], 1
    %5137 = vsyncpa [#allocation26], 1
    %5138 = vsyncpa [#allocation29], 1
    %5139 = vsyncpa [#allocation32], 1
    %5140 = vsyncpa [#allocation9], 1
    %s5141 = scalar_lea.sflag [#allocation9], 1
    %5142 = vsyncpa %s5141, 1

</llo_original>
